<compile_context>
chip_gen: v7x
topology: tpu7x:2x2x1
jax: 0.10.0
libtpu: 0.0.40
codegen_flags: <defaults>
</compile_context>

<pallas_src>
import functools

import jax
import jax.numpy as jnp
from jax import lax
from jax.experimental import pallas as pl
from jax.experimental.pallas import tpu as pltpu

NUM_VOICES = 1
EMB_DIM = 128


def _vmem():
    return pl.BlockSpec(memory_space=pltpu.MemorySpace.VMEM)


# ------------------------------ fused kernel -------------------------------- #

def decoder_kernel(latent_ref, lat_aug_ref, tok_ref, lthw_ref, table_ref,
                   w_in_ref, whh_ref, bias_ref, htvw_ref, out_ref,
                   *, T, B, H, V, L, NL):
    f32 = jnp.float32
    H2, H3 = 2 * H, 3 * H

    # Bias slab layout (rows):
    #   [0, NL)              : packed input-gate bias per layer (3H)  [r,z folded with b_hh]
    #   [NL, 2NL)            : b_hh_n per layer in cols [0:H]
    #   [2NL, 2NL + NL*B)    : latent_to_hidden bias (remapped) in cols [0:H]
    #   2NL + NL*B           : hidden_to_vocab bias in cols [0:V]

    # ---- initial hidden states: one matmul -> per-layer contiguous slabs ----
    b_aug = bias_ref[2 * NL:2 * NL + NL * B, 0:H]                       # (NL*B, H)
    h0_all = jnp.tanh(
        jnp.dot(lat_aug_ref[...], lthw_ref[...], preferred_element_type=f32)
        + b_aug)                                                        # (NL*B, H)

    # ---- layer-0 token-independent latent term (packed gates, biases folded) --
    latent = latent_ref[...]                                            # (B, L)
    w0l = w_in_ref[0:L, :]                                              # (L, 3H)
    lat0 = jnp.dot(latent, w0l, preferred_element_type=f32) + bias_ref[0:1, :]  # (B, 3H)

    table = table_ref[...]                                              # (V, 3H)
    lane_iota = lax.broadcasted_iota(jnp.int32, (B, V), 1)

    def gru_layer(l, gi_list):
        """Unrolled GRU recurrence for layer l given per-step packed inputs."""
        h = h0_all[l * B:(l + 1) * B, :]                                # (B, H) static slab
        whh = whh_ref[l]                                                # (H, 3H)
        bhn = bias_ref[NL + l:NL + l + 1, 0:H]                          # (1, H)
        ys = []
        for t in range(T):                                              # unrolled
            gi = gi_list[t]                                             # (B, 3H), h-independent
            gh = jnp.dot(h, whh, preferred_element_type=f32)            # (B, 3H) one MXU trip
            rz = jax.nn.sigmoid(gi[:, 0:H2] + gh[:, 0:H2])              # (B, 2H)
            r, z = rz[:, 0:H], rz[:, H:H2]
            n = jnp.tanh(gi[:, H2:H3] + r * (gh[:, H2:H3] + bhn))
            h = n + z * (h - n)
            ys.append(h)
        return ys

    # ---- layer 0: per-step one-hot @ token-table + latent term ----
    gi_l0 = []
    for t in range(T):
        tok_t = tok_ref[t]                                              # (B, 1) int32
        onehot = (lane_iota == tok_t).astype(f32)                       # (B, V)
        gi_l0.append(jnp.dot(onehot, table, preferred_element_type=f32) + lat0)
    ys = gru_layer(0, gi_l0)

    # ---- layers >= 1: per-step packed input projection of previous outputs ----
    for l in range(1, NL):
        wx = w_in_ref[L + (l - 1) * H:L + l * H, :]                     # (H, 3H)
        bx = bias_ref[l:l + 1, :]                                       # (1, 3H)
        gi_l = [jnp.dot(y, wx, preferred_element_type=f32) + bx for y in ys]
        ys = gru_layer(l, gi_l)

    # ---- hidden_to_vocab: per-step matmul, leading-axis stores ----
    htvw = htvw_ref[...]                                                # (H, V)
    htvb = bias_ref[2 * NL + NL * B:2 * NL + NL * B + 1, 0:V]           # (1, V)
    for t in range(T):
        out_ref[t] = (jnp.dot(ys[t], htvw, preferred_element_type=f32)
                      + htvb).astype(out_ref.dtype)


# --------------------------- parameter construction ------------------------- #

def init_torch_params(key, latent_size, hidden_size, vocab_size, num_layers):
    """Parameters in PyTorch's native layout (for the reference check)."""
    def uni(k, shape, bound):
        return jax.random.uniform(k, shape, jnp.float32, -bound, bound)

    keys = jax.random.split(key, 6 + 4 * num_layers)
    p = {}
    out_lth = NUM_VOICES * num_layers * hidden_size
    k_lth = 1.0 / float(latent_size) ** 0.5
    p["lth_w"] = uni(keys[0], (out_lth, latent_size), k_lth)
    p["lth_b"] = uni(keys[1], (out_lth,), k_lth)
    k_htv = 1.0 / float(hidden_size) ** 0.5
    p["htv_w"] = uni(keys[2], (vocab_size, hidden_size), k_htv)
    p["htv_b"] = uni(keys[3], (vocab_size,), k_htv)
    p["emb"] = jax.random.normal(keys[4], (vocab_size, EMB_DIM), jnp.float32)
    k_gru = 1.0 / float(hidden_size) ** 0.5
    for l in range(num_layers):
        in_l = EMB_DIM + latent_size if l == 0 else hidden_size
        b = 6 + 4 * l
        p[f"w_ih{l}"] = uni(keys[b + 0], (3 * hidden_size, in_l), k_gru)
        p[f"w_hh{l}"] = uni(keys[b + 1], (3 * hidden_size, hidden_size), k_gru)
        p[f"b_ih{l}"] = uni(keys[b + 2], (3 * hidden_size,), k_gru)
        p[f"b_hh{l}"] = uni(keys[b + 3], (3 * hidden_size,), k_gru)
    return p


def to_kernel_params(tp, latent_size, hidden_size, num_layers, batch_size):
    """One-time re-layout: pack gates, fold emb@W_ie, fold torch's .view remap."""
    H, L, NL, B = hidden_size, latent_size, num_layers, batch_size
    H3 = 3 * H
    V = tp["htv_b"].shape[0]
    kp = {}

    # latent_to_hidden reorganised so tanh(lat_aug @ lth_w_aug + b_aug) directly
    # yields rows k = l*B + b matching torch hid.view(NL, B, H)[l, b].
    lthw, lthb = tp["lth_w"], tp["lth_b"]                     # (NL*H, L), (NL*H,)
    kp["lth_w_aug"] = jnp.concatenate(
        [lthw[m * H:(m + 1) * H, :].T for m in range(NL)], axis=0)          # (NL*L, H)
    b_aug = jnp.stack(
        [lthb[(k % NL) * H:(k % NL + 1) * H] for k in range(NL * B)])        # (NL*B, H)

    # Layer-0 weights: token table (emb @ W_ie, per gate, packed) and latent part.
    w_ih0, b_ih0, b_hh0 = tp["w_ih0"], tp["b_ih0"], tp["b_hh0"]
    emb = tp["emb"]
    kp["tok_table"] = jnp.concatenate(
        [emb @ w_ih0[g * H:(g + 1) * H, L:].T for g in range(3)], axis=1)    # (V, 3H)
    w0l = jnp.concatenate(
        [w_ih0[g * H:(g + 1) * H, :L].T for g in range(3)], axis=1)          # (L, 3H)

    def packed_in_bias(b_ih, b_hh):
        # r, z: b_ih + b_hh folded; n: b_ih only (b_hh_n stays inside r*(...))
        return jnp.concatenate([b_ih[0:H] + b_hh[0:H],
                                b_ih[H:2 * H] + b_hh[H:2 * H],
                                b_ih[2 * H:3 * H]])                          # (3H,)

    w_in_rows = [w0l]
    bx_rows = [packed_in_bias(b_ih0, b_hh0)]
    for l in range(1, NL):
        w_ih, b_ih, b_hh = tp[f"w_ih{l}"], tp[f"b_ih{l}"], tp[f"b_hh{l}"]
        w_in_rows.append(jnp.concatenate(
            [w_ih[g * H:(g + 1) * H, :].T for g in range(3)], axis=1))       # (H, 3H)
        bx_rows.append(packed_in_bias(b_ih, b_hh))
    kp["w_in"] = jnp.concatenate(w_in_rows, axis=0)           # (L + (NL-1)*H, 3H)

    # Hidden-to-hidden weights packed per layer; b_hh_n kept separately.
    whh, bhn_rows = [], []
    for l in range(NL):
        w_hh, b_hh = tp[f"w_hh{l}"], tp[f"b_hh{l}"]
        whh.append(jnp.concatenate(
            [w_hh[g * H:(g + 1) * H, :].T for g in range(3)], axis=1))       # (H, 3H)
        bhn_rows.append(b_hh[2 * H:3 * H])
    kp["whh"] = jnp.stack(whh)                                               # (NL, H, 3H)

    kp["htv_w"] = tp["htv_w"].T                                              # (H, V)

    # Single bias slab (see layout comment in the kernel).
    nrows = 2 * NL + NL * B + 1
    bias = jnp.zeros((nrows, H3), jnp.float32)
    for l in range(NL):
        bias = bias.at[l, :].set(bx_rows[l])
        bias = bias.at[NL + l, 0:H].set(bhn_rows[l])
    bias = bias.at[2 * NL:2 * NL + NL * B, 0:H].set(b_aug)
    bias = bias.at[2 * NL + NL * B, 0:V].set(tp["htv_b"])
    kp["bias"] = bias
    return kp


# ------------------------------- forward pass -------------------------------- #

def decoder_forward_teacher_forcing(kparams, latent, x_tokens, *,
                                    hidden_size, vocab_size, num_layers, seq_size):
    """Equivalent of Decoder.forward(latent, temp, x, teacher_forcing=True)."""
    B, L = latent.shape
    T, H, V, NL = seq_size, hidden_size, vocab_size, num_layers
    latent = latent.astype(jnp.float32)

    # Teacher-forcing token stream, time-major (T, B, 1): step 0 -> token 0,
    # step t -> x[:, t-1].
    toks = jnp.concatenate(
        [jnp.zeros((B, 1), jnp.int32), x_tokens[:, :T - 1].astype(jnp.int32)], axis=1)
    tok_tm = toks.T.reshape(T, B, 1)

    # Block-scattered latent so the in-kernel latent_to_hidden matmul produces
    # per-layer contiguous initial-hidden slabs (faithful to torch .view(NL,B,H)).
    row_idx = jnp.asarray([k // NL for k in range(NL * B)], jnp.int32)
    sel = jnp.asarray(
        [[1.0 if m == (k % NL) else 0.0 for m in range(NL)] for k in range(NL * B)],
        jnp.float32)                                                     # (NL*B, NL)
    lat_aug = (sel[:, :, None] * latent[row_idx][:, None, :]).reshape(NL * B, NL * L)

    kernel = functools.partial(decoder_kernel, T=T, B=B, H=H, V=V, L=L, NL=NL)
    out = pl.pallas_call(
        kernel,
        out_shape=jax.ShapeDtypeStruct((T, B, V), jnp.float32),
        in_specs=[_vmem()] * 9,
        out_specs=_vmem(),
    )(latent, lat_aug, tok_tm,
      kparams["lth_w_aug"], kparams["tok_table"], kparams["w_in"],
      kparams["whh"], kparams["bias"], kparams["htv_w"])
    return out.transpose(1, 0, 2)                                        # (B, T, V)

# TODO(synk): non-teacher-forcing branch (autoregressive Categorical sampling with a
# per-step torch.rand coin flip) needs data-dependent sampling control flow and is
# not implemented; only the teacher_forcing=True path is.


# ----------------------- pure-JAX reference (torch layout) ------------------- #

def reference_forward(tp, latent, x_tokens, *, hidden_size, vocab_size,
                      num_layers, seq_size):
    B, L = latent.shape
    H, NL, T = hidden_size, num_layers, seq_size
    hid = jnp.tanh(latent @ tp["lth_w"].T + tp["lth_b"]).reshape(NL, B, H)
    emb = tp["emb"]
    inp0 = jnp.concatenate(
        [latent[:, None, :], jnp.broadcast_to(emb[0][None, None, :], (B, 1, EMB_DIM))], axis=2)
    xemb = emb[x_tokens[:, :T - 1]]
    src = jnp.concatenate(
        [jnp.broadcast_to(latent[:, None, :], (B, T - 1, L)), xemb], axis=2)
    x = jnp.concatenate([inp0, src], axis=1)                        # (B, T, L+128)
    for l in range(NL):
        w_ih, w_hh = tp[f"w_ih{l}"], tp[f"w_hh{l}"]
        b_ih, b_hh = tp[f"b_ih{l}"], tp[f"b_hh{l}"]
        h = hid[l]
        outs = []
        for t in range(T):
            gi = x[:, t, :] @ w_ih.T + b_ih
            gh = h @ w_hh.T + b_hh
            r = jax.nn.sigmoid(gi[:, :H] + gh[:, :H])
            z = jax.nn.sigmoid(gi[:, H:2 * H] + gh[:, H:2 * H])
            n = jnp.tanh(gi[:, 2 * H:] + r * gh[:, 2 * H:])
            h = (1.0 - z) * n + z * h
            outs.append(h)
        x = jnp.stack(outs, axis=1)                                 # (B, T, H)
    return x @ tp["htv_w"].T + tp["htv_b"]                          # (B, T, V)


# ------------------------------------ main ------------------------------------ #

if __name__ == "__main__":
    latent_size = 8
    hidden_size = 32
    vocab_size = 16
    num_layers = 2
    seq_size = 8
    batch = 2

    key = jax.random.PRNGKey(0)
    k_params, k_lat, k_x = jax.random.split(key, 3)

    tparams = init_torch_params(k_params, latent_size, hidden_size,
                                vocab_size, num_layers)
    kparams = to_kernel_params(tparams, latent_size, hidden_size,
                               num_layers, batch)

    latent = jax.random.normal(k_lat, (batch, latent_size), jnp.float32)
    x_tokens = jax.random.randint(k_x, (batch, seq_size), 0, vocab_size,
                                  dtype=jnp.int32)

    fwd = jax.jit(functools.partial(
        decoder_forward_teacher_forcing,
        hidden_size=hidden_size, vocab_size=vocab_size,
        num_layers=num_layers, seq_size=seq_size))

    out = fwd(kparams, latent, x_tokens)
    jax.block_until_ready(out)

    assert out.shape == (batch, seq_size, vocab_size), out.shape
    assert out.dtype == jnp.float32

    ref = reference_forward(tparams, latent, x_tokens,
                            hidden_size=hidden_size, vocab_size=vocab_size,
                            num_layers=num_layers, seq_size=seq_size)
    jax.block_until_ready(ref)
    assert bool(jnp.allclose(out, ref, atol=1e-4, rtol=1e-4)), "mismatch vs reference"

    print("KERNEL_OK")
</pallas_src>

<mosaic_0001>
module attributes {stable_mosaic.version = 11 : i64} {
  func.func @decoder_kernel(%arg0: memref<2x8xf32, #tpu.memory_space<vmem>>, %arg1: memref<4x16xf32, #tpu.memory_space<vmem>>, %arg2: memref<8x2x1xi32, #tpu.memory_space<vmem>>, %arg3: memref<16x32xf32, #tpu.memory_space<vmem>>, %arg4: memref<16x96xf32, #tpu.memory_space<vmem>>, %arg5: memref<40x96xf32, #tpu.memory_space<vmem>>, %arg6: memref<2x32x96xf32, #tpu.memory_space<vmem>>, %arg7: memref<9x96xf32, #tpu.memory_space<vmem>>, %arg8: memref<32x16xf32, #tpu.memory_space<vmem>>, %arg9: memref<8x2x16xf32, #tpu.memory_space<vmem>>) attributes {dimension_semantics = [], scalar_prefetch = 0 : i64, scratch_operands = 0 : i64, tpu.core_type = #tpu.core_type<tc>} {
    %c4 = arith.constant 4 : index
    %c0 = arith.constant 0 : index
    %0 = vector.load %arg7[%c4, %c0] : memref<9x96xf32, #tpu.memory_space<vmem>>, vector<4x32xf32>
    %c0_0 = arith.constant 0 : index
    %c0_1 = arith.constant 0 : index
    %1 = vector.load %arg1[%c0_0, %c0_1] : memref<4x16xf32, #tpu.memory_space<vmem>>, vector<4x16xf32>
    %c0_2 = arith.constant 0 : index
    %c0_3 = arith.constant 0 : index
    %2 = vector.load %arg3[%c0_2, %c0_3] : memref<16x32xf32, #tpu.memory_space<vmem>>, vector<16x32xf32>
    %cst = arith.constant dense<0.000000e+00> : vector<4x32xf32>
    %3 = tpu.matmul %1, %2, %cst {dimension_numbers = #tpu.dot_dimension_numbers<[1], [0], [0], [1], [0, 0, 1, 1], [], []>} : vector<4x16xf32>, vector<16x32xf32>, vector<4x32xf32> -> vector<4x32xf32>
    %4 = arith.addf %3, %0 : vector<4x32xf32>
    %5 = math.tanh %4 : vector<4x32xf32>
    %c0_4 = arith.constant 0 : index
    %c0_5 = arith.constant 0 : index
    %6 = vector.load %arg0[%c0_4, %c0_5] : memref<2x8xf32, #tpu.memory_space<vmem>>, vector<2x8xf32>
    %c0_6 = arith.constant 0 : index
    %c0_7 = arith.constant 0 : index
    %7 = vector.load %arg5[%c0_6, %c0_7] : memref<40x96xf32, #tpu.memory_space<vmem>>, vector<8x96xf32>
    %cst_8 = arith.constant dense<0.000000e+00> : vector<2x96xf32>
    %8 = tpu.matmul %6, %7, %cst_8 {dimension_numbers = #tpu.dot_dimension_numbers<[1], [0], [0], [1], [0, 0, 1, 1], [], []>} : vector<2x8xf32>, vector<8x96xf32>, vector<2x96xf32> -> vector<2x96xf32>
    %c0_9 = arith.constant 0 : index
    %c0_10 = arith.constant 0 : index
    %9 = vector.load %arg7[%c0_9, %c0_10] : memref<9x96xf32, #tpu.memory_space<vmem>>, vector<1x96xf32>
    %10 = vector.broadcast %9 : vector<1x96xf32> to vector<2x96xf32>
    %11 = arith.addf %8, %10 : vector<2x96xf32>
    %c0_11 = arith.constant 0 : index
    %c0_12 = arith.constant 0 : index
    %12 = vector.load %arg4[%c0_11, %c0_12] : memref<16x96xf32, #tpu.memory_space<vmem>>, vector<16x96xf32>
    %13 = tpu.iota {dimensions = array<i32: 1>} : vector<2x16xi32>
    %c0_13 = arith.constant 0 : index
    %c0_14 = arith.constant 0 : index
    %c0_15 = arith.constant 0 : index
    %14 = vector.load %arg2[%c0_13, %c0_14, %c0_15] : memref<8x2x1xi32, #tpu.memory_space<vmem>>, vector<1x2x1xi32>
    %15 = vector.shape_cast %14 : vector<1x2x1xi32> to vector<2x1xi32>
    %16 = vector.broadcast %15 : vector<2x1xi32> to vector<2x16xi32>
    %17 = arith.cmpi eq, %13, %16 : vector<2x16xi32>
    %18 = arith.extui %17 : vector<2x16xi1> to vector<2x16xi32>
    %19 = arith.sitofp %18 : vector<2x16xi32> to vector<2x16xf32>
    %cst_16 = arith.constant dense<0.000000e+00> : vector<2x96xf32>
    %20 = tpu.matmul %19, %12, %cst_16 {dimension_numbers = #tpu.dot_dimension_numbers<[1], [0], [0], [1], [0, 0, 1, 1], [], []>} : vector<2x16xf32>, vector<16x96xf32>, vector<2x96xf32> -> vector<2x96xf32>
    %21 = arith.addf %20, %11 : vector<2x96xf32>
    %c1 = arith.constant 1 : index
    %c0_17 = arith.constant 0 : index
    %c0_18 = arith.constant 0 : index
    %22 = vector.load %arg2[%c1, %c0_17, %c0_18] : memref<8x2x1xi32, #tpu.memory_space<vmem>>, vector<1x2x1xi32>
    %23 = vector.shape_cast %22 : vector<1x2x1xi32> to vector<2x1xi32>
    %24 = vector.broadcast %23 : vector<2x1xi32> to vector<2x16xi32>
    %25 = arith.cmpi eq, %13, %24 : vector<2x16xi32>
    %26 = arith.extui %25 : vector<2x16xi1> to vector<2x16xi32>
    %27 = arith.sitofp %26 : vector<2x16xi32> to vector<2x16xf32>
    %cst_19 = arith.constant dense<0.000000e+00> : vector<2x96xf32>
    %28 = tpu.matmul %27, %12, %cst_19 {dimension_numbers = #tpu.dot_dimension_numbers<[1], [0], [0], [1], [0, 0, 1, 1], [], []>} : vector<2x16xf32>, vector<16x96xf32>, vector<2x96xf32> -> vector<2x96xf32>
    %29 = arith.addf %28, %11 : vector<2x96xf32>
    %c2 = arith.constant 2 : index
    %c0_20 = arith.constant 0 : index
    %c0_21 = arith.constant 0 : index
    %30 = vector.load %arg2[%c2, %c0_20, %c0_21] : memref<8x2x1xi32, #tpu.memory_space<vmem>>, vector<1x2x1xi32>
    %31 = vector.shape_cast %30 : vector<1x2x1xi32> to vector<2x1xi32>
    %32 = vector.broadcast %31 : vector<2x1xi32> to vector<2x16xi32>
    %33 = arith.cmpi eq, %13, %32 : vector<2x16xi32>
    %34 = arith.extui %33 : vector<2x16xi1> to vector<2x16xi32>
    %35 = arith.sitofp %34 : vector<2x16xi32> to vector<2x16xf32>
    %cst_22 = arith.constant dense<0.000000e+00> : vector<2x96xf32>
    %36 = tpu.matmul %35, %12, %cst_22 {dimension_numbers = #tpu.dot_dimension_numbers<[1], [0], [0], [1], [0, 0, 1, 1], [], []>} : vector<2x16xf32>, vector<16x96xf32>, vector<2x96xf32> -> vector<2x96xf32>
    %37 = arith.addf %36, %11 : vector<2x96xf32>
    %c3 = arith.constant 3 : index
    %c0_23 = arith.constant 0 : index
    %c0_24 = arith.constant 0 : index
    %38 = vector.load %arg2[%c3, %c0_23, %c0_24] : memref<8x2x1xi32, #tpu.memory_space<vmem>>, vector<1x2x1xi32>
    %39 = vector.shape_cast %38 : vector<1x2x1xi32> to vector<2x1xi32>
    %40 = vector.broadcast %39 : vector<2x1xi32> to vector<2x16xi32>
    %41 = arith.cmpi eq, %13, %40 : vector<2x16xi32>
    %42 = arith.extui %41 : vector<2x16xi1> to vector<2x16xi32>
    %43 = arith.sitofp %42 : vector<2x16xi32> to vector<2x16xf32>
    %cst_25 = arith.constant dense<0.000000e+00> : vector<2x96xf32>
    %44 = tpu.matmul %43, %12, %cst_25 {dimension_numbers = #tpu.dot_dimension_numbers<[1], [0], [0], [1], [0, 0, 1, 1], [], []>} : vector<2x16xf32>, vector<16x96xf32>, vector<2x96xf32> -> vector<2x96xf32>
    %45 = arith.addf %44, %11 : vector<2x96xf32>
    %c4_26 = arith.constant 4 : index
    %c0_27 = arith.constant 0 : index
    %c0_28 = arith.constant 0 : index
    %46 = vector.load %arg2[%c4_26, %c0_27, %c0_28] : memref<8x2x1xi32, #tpu.memory_space<vmem>>, vector<1x2x1xi32>
    %47 = vector.shape_cast %46 : vector<1x2x1xi32> to vector<2x1xi32>
    %48 = vector.broadcast %47 : vector<2x1xi32> to vector<2x16xi32>
    %49 = arith.cmpi eq, %13, %48 : vector<2x16xi32>
    %50 = arith.extui %49 : vector<2x16xi1> to vector<2x16xi32>
    %51 = arith.sitofp %50 : vector<2x16xi32> to vector<2x16xf32>
    %cst_29 = arith.constant dense<0.000000e+00> : vector<2x96xf32>
    %52 = tpu.matmul %51, %12, %cst_29 {dimension_numbers = #tpu.dot_dimension_numbers<[1], [0], [0], [1], [0, 0, 1, 1], [], []>} : vector<2x16xf32>, vector<16x96xf32>, vector<2x96xf32> -> vector<2x96xf32>
    %53 = arith.addf %52, %11 : vector<2x96xf32>
    %c5 = arith.constant 5 : index
    %c0_30 = arith.constant 0 : index
    %c0_31 = arith.constant 0 : index
    %54 = vector.load %arg2[%c5, %c0_30, %c0_31] : memref<8x2x1xi32, #tpu.memory_space<vmem>>, vector<1x2x1xi32>
    %55 = vector.shape_cast %54 : vector<1x2x1xi32> to vector<2x1xi32>
    %56 = vector.broadcast %55 : vector<2x1xi32> to vector<2x16xi32>
    %57 = arith.cmpi eq, %13, %56 : vector<2x16xi32>
    %58 = arith.extui %57 : vector<2x16xi1> to vector<2x16xi32>
    %59 = arith.sitofp %58 : vector<2x16xi32> to vector<2x16xf32>
    %cst_32 = arith.constant dense<0.000000e+00> : vector<2x96xf32>
    %60 = tpu.matmul %59, %12, %cst_32 {dimension_numbers = #tpu.dot_dimension_numbers<[1], [0], [0], [1], [0, 0, 1, 1], [], []>} : vector<2x16xf32>, vector<16x96xf32>, vector<2x96xf32> -> vector<2x96xf32>
    %61 = arith.addf %60, %11 : vector<2x96xf32>
    %c6 = arith.constant 6 : index
    %c0_33 = arith.constant 0 : index
    %c0_34 = arith.constant 0 : index
    %62 = vector.load %arg2[%c6, %c0_33, %c0_34] : memref<8x2x1xi32, #tpu.memory_space<vmem>>, vector<1x2x1xi32>
    %63 = vector.shape_cast %62 : vector<1x2x1xi32> to vector<2x1xi32>
    %64 = vector.broadcast %63 : vector<2x1xi32> to vector<2x16xi32>
    %65 = arith.cmpi eq, %13, %64 : vector<2x16xi32>
    %66 = arith.extui %65 : vector<2x16xi1> to vector<2x16xi32>
    %67 = arith.sitofp %66 : vector<2x16xi32> to vector<2x16xf32>
    %cst_35 = arith.constant dense<0.000000e+00> : vector<2x96xf32>
    %68 = tpu.matmul %67, %12, %cst_35 {dimension_numbers = #tpu.dot_dimension_numbers<[1], [0], [0], [1], [0, 0, 1, 1], [], []>} : vector<2x16xf32>, vector<16x96xf32>, vector<2x96xf32> -> vector<2x96xf32>
    %69 = arith.addf %68, %11 : vector<2x96xf32>
    %c7 = arith.constant 7 : index
    %c0_36 = arith.constant 0 : index
    %c0_37 = arith.constant 0 : index
    %70 = vector.load %arg2[%c7, %c0_36, %c0_37] : memref<8x2x1xi32, #tpu.memory_space<vmem>>, vector<1x2x1xi32>
    %71 = vector.shape_cast %70 : vector<1x2x1xi32> to vector<2x1xi32>
    %72 = vector.broadcast %71 : vector<2x1xi32> to vector<2x16xi32>
    %73 = arith.cmpi eq, %13, %72 : vector<2x16xi32>
    %74 = arith.extui %73 : vector<2x16xi1> to vector<2x16xi32>
    %75 = arith.sitofp %74 : vector<2x16xi32> to vector<2x16xf32>
    %cst_38 = arith.constant dense<0.000000e+00> : vector<2x96xf32>
    %76 = tpu.matmul %75, %12, %cst_38 {dimension_numbers = #tpu.dot_dimension_numbers<[1], [0], [0], [1], [0, 0, 1, 1], [], []>} : vector<2x16xf32>, vector<16x96xf32>, vector<2x96xf32> -> vector<2x96xf32>
    %77 = arith.addf %76, %11 : vector<2x96xf32>
    %78 = vector.extract_strided_slice %5 {offsets = [0, 0], sizes = [2, 32], strides = [1, 1]} : vector<4x32xf32> to vector<2x32xf32>
    %c0_39 = arith.constant 0 : index
    %c0_40 = arith.constant 0 : index
    %c0_41 = arith.constant 0 : index
    %79 = vector.load %arg6[%c0_39, %c0_40, %c0_41] : memref<2x32x96xf32, #tpu.memory_space<vmem>>, vector<1x32x96xf32>
    %80 = vector.shape_cast %79 : vector<1x32x96xf32> to vector<32x96xf32>
    %c2_42 = arith.constant 2 : index
    %c0_43 = arith.constant 0 : index
    %81 = vector.load %arg7[%c2_42, %c0_43] : memref<9x96xf32, #tpu.memory_space<vmem>>, vector<1x32xf32>
    %cst_44 = arith.constant dense<0.000000e+00> : vector<2x96xf32>
    %82 = tpu.matmul %78, %80, %cst_44 {dimension_numbers = #tpu.dot_dimension_numbers<[1], [0], [0], [1], [0, 0, 1, 1], [], []>} : vector<2x32xf32>, vector<32x96xf32>, vector<2x96xf32> -> vector<2x96xf32>
    %83 = vector.extract_strided_slice %21 {offsets = [0, 0], sizes = [2, 64], strides = [1, 1]} : vector<2x96xf32> to vector<2x64xf32>
    %84 = vector.extract_strided_slice %82 {offsets = [0, 0], sizes = [2, 64], strides = [1, 1]} : vector<2x96xf32> to vector<2x64xf32>
    %85 = arith.addf %83, %84 : vector<2x64xf32>
    %86 = arith.negf %85 : vector<2x64xf32>
    %87 = math.exp %86 : vector<2x64xf32>
    %cst_45 = arith.constant 1.000000e+00 : f32
    %88 = vector.broadcast %cst_45 : f32 to vector<2x64xf32>
    %89 = arith.addf %88, %87 : vector<2x64xf32>
    %90 = arith.divf %88, %89 : vector<2x64xf32>
    %91 = vector.extract_strided_slice %90 {offsets = [0, 0], sizes = [2, 32], strides = [1, 1]} : vector<2x64xf32> to vector<2x32xf32>
    %92 = vector.extract_strided_slice %90 {offsets = [0, 32], sizes = [2, 32], strides = [1, 1]} : vector<2x64xf32> to vector<2x32xf32>
    %93 = vector.extract_strided_slice %21 {offsets = [0, 64], sizes = [2, 32], strides = [1, 1]} : vector<2x96xf32> to vector<2x32xf32>
    %94 = vector.extract_strided_slice %82 {offsets = [0, 64], sizes = [2, 32], strides = [1, 1]} : vector<2x96xf32> to vector<2x32xf32>
    %95 = vector.broadcast %81 : vector<1x32xf32> to vector<2x32xf32>
    %96 = arith.addf %94, %95 : vector<2x32xf32>
    %97 = arith.mulf %91, %96 : vector<2x32xf32>
    %98 = arith.addf %93, %97 : vector<2x32xf32>
    %99 = math.tanh %98 : vector<2x32xf32>
    %100 = arith.subf %78, %99 : vector<2x32xf32>
    %101 = arith.mulf %92, %100 : vector<2x32xf32>
    %102 = arith.addf %99, %101 : vector<2x32xf32>
    %cst_46 = arith.constant dense<0.000000e+00> : vector<2x96xf32>
    %103 = tpu.matmul %102, %80, %cst_46 {dimension_numbers = #tpu.dot_dimension_numbers<[1], [0], [0], [1], [0, 0, 1, 1], [], []>} : vector<2x32xf32>, vector<32x96xf32>, vector<2x96xf32> -> vector<2x96xf32>
    %104 = vector.extract_strided_slice %29 {offsets = [0, 0], sizes = [2, 64], strides = [1, 1]} : vector<2x96xf32> to vector<2x64xf32>
    %105 = vector.extract_strided_slice %103 {offsets = [0, 0], sizes = [2, 64], strides = [1, 1]} : vector<2x96xf32> to vector<2x64xf32>
    %106 = arith.addf %104, %105 : vector<2x64xf32>
    %107 = arith.negf %106 : vector<2x64xf32>
    %108 = math.exp %107 : vector<2x64xf32>
    %cst_47 = arith.constant 1.000000e+00 : f32
    %109 = vector.broadcast %cst_47 : f32 to vector<2x64xf32>
    %110 = arith.addf %109, %108 : vector<2x64xf32>
    %111 = arith.divf %109, %110 : vector<2x64xf32>
    %112 = vector.extract_strided_slice %111 {offsets = [0, 0], sizes = [2, 32], strides = [1, 1]} : vector<2x64xf32> to vector<2x32xf32>
    %113 = vector.extract_strided_slice %111 {offsets = [0, 32], sizes = [2, 32], strides = [1, 1]} : vector<2x64xf32> to vector<2x32xf32>
    %114 = vector.extract_strided_slice %29 {offsets = [0, 64], sizes = [2, 32], strides = [1, 1]} : vector<2x96xf32> to vector<2x32xf32>
    %115 = vector.extract_strided_slice %103 {offsets = [0, 64], sizes = [2, 32], strides = [1, 1]} : vector<2x96xf32> to vector<2x32xf32>
    %116 = vector.broadcast %81 : vector<1x32xf32> to vector<2x32xf32>
    %117 = arith.addf %115, %116 : vector<2x32xf32>
    %118 = arith.mulf %112, %117 : vector<2x32xf32>
    %119 = arith.addf %114, %118 : vector<2x32xf32>
    %120 = math.tanh %119 : vector<2x32xf32>
    %121 = arith.subf %102, %120 : vector<2x32xf32>
    %122 = arith.mulf %113, %121 : vector<2x32xf32>
    %123 = arith.addf %120, %122 : vector<2x32xf32>
    %cst_48 = arith.constant dense<0.000000e+00> : vector<2x96xf32>
    %124 = tpu.matmul %123, %80, %cst_48 {dimension_numbers = #tpu.dot_dimension_numbers<[1], [0], [0], [1], [0, 0, 1, 1], [], []>} : vector<2x32xf32>, vector<32x96xf32>, vector<2x96xf32> -> vector<2x96xf32>
    %125 = vector.extract_strided_slice %37 {offsets = [0, 0], sizes = [2, 64], strides = [1, 1]} : vector<2x96xf32> to vector<2x64xf32>
    %126 = vector.extract_strided_slice %124 {offsets = [0, 0], sizes = [2, 64], strides = [1, 1]} : vector<2x96xf32> to vector<2x64xf32>
    %127 = arith.addf %125, %126 : vector<2x64xf32>
    %128 = arith.negf %127 : vector<2x64xf32>
    %129 = math.exp %128 : vector<2x64xf32>
    %cst_49 = arith.constant 1.000000e+00 : f32
    %130 = vector.broadcast %cst_49 : f32 to vector<2x64xf32>
    %131 = arith.addf %130, %129 : vector<2x64xf32>
    %132 = arith.divf %130, %131 : vector<2x64xf32>
    %133 = vector.extract_strided_slice %132 {offsets = [0, 0], sizes = [2, 32], strides = [1, 1]} : vector<2x64xf32> to vector<2x32xf32>
    %134 = vector.extract_strided_slice %132 {offsets = [0, 32], sizes = [2, 32], strides = [1, 1]} : vector<2x64xf32> to vector<2x32xf32>
    %135 = vector.extract_strided_slice %37 {offsets = [0, 64], sizes = [2, 32], strides = [1, 1]} : vector<2x96xf32> to vector<2x32xf32>
    %136 = vector.extract_strided_slice %124 {offsets = [0, 64], sizes = [2, 32], strides = [1, 1]} : vector<2x96xf32> to vector<2x32xf32>
    %137 = vector.broadcast %81 : vector<1x32xf32> to vector<2x32xf32>
    %138 = arith.addf %136, %137 : vector<2x32xf32>
    %139 = arith.mulf %133, %138 : vector<2x32xf32>
    %140 = arith.addf %135, %139 : vector<2x32xf32>
    %141 = math.tanh %140 : vector<2x32xf32>
    %142 = arith.subf %123, %141 : vector<2x32xf32>
    %143 = arith.mulf %134, %142 : vector<2x32xf32>
    %144 = arith.addf %141, %143 : vector<2x32xf32>
    %cst_50 = arith.constant dense<0.000000e+00> : vector<2x96xf32>
    %145 = tpu.matmul %144, %80, %cst_50 {dimension_numbers = #tpu.dot_dimension_numbers<[1], [0], [0], [1], [0, 0, 1, 1], [], []>} : vector<2x32xf32>, vector<32x96xf32>, vector<2x96xf32> -> vector<2x96xf32>
    %146 = vector.extract_strided_slice %45 {offsets = [0, 0], sizes = [2, 64], strides = [1, 1]} : vector<2x96xf32> to vector<2x64xf32>
    %147 = vector.extract_strided_slice %145 {offsets = [0, 0], sizes = [2, 64], strides = [1, 1]} : vector<2x96xf32> to vector<2x64xf32>
    %148 = arith.addf %146, %147 : vector<2x64xf32>
    %149 = arith.negf %148 : vector<2x64xf32>
    %150 = math.exp %149 : vector<2x64xf32>
    %cst_51 = arith.constant 1.000000e+00 : f32
    %151 = vector.broadcast %cst_51 : f32 to vector<2x64xf32>
    %152 = arith.addf %151, %150 : vector<2x64xf32>
    %153 = arith.divf %151, %152 : vector<2x64xf32>
    %154 = vector.extract_strided_slice %153 {offsets = [0, 0], sizes = [2, 32], strides = [1, 1]} : vector<2x64xf32> to vector<2x32xf32>
    %155 = vector.extract_strided_slice %153 {offsets = [0, 32], sizes = [2, 32], strides = [1, 1]} : vector<2x64xf32> to vector<2x32xf32>
    %156 = vector.extract_strided_slice %45 {offsets = [0, 64], sizes = [2, 32], strides = [1, 1]} : vector<2x96xf32> to vector<2x32xf32>
    %157 = vector.extract_strided_slice %145 {offsets = [0, 64], sizes = [2, 32], strides = [1, 1]} : vector<2x96xf32> to vector<2x32xf32>
    %158 = vector.broadcast %81 : vector<1x32xf32> to vector<2x32xf32>
    %159 = arith.addf %157, %158 : vector<2x32xf32>
    %160 = arith.mulf %154, %159 : vector<2x32xf32>
    %161 = arith.addf %156, %160 : vector<2x32xf32>
    %162 = math.tanh %161 : vector<2x32xf32>
    %163 = arith.subf %144, %162 : vector<2x32xf32>
    %164 = arith.mulf %155, %163 : vector<2x32xf32>
    %165 = arith.addf %162, %164 : vector<2x32xf32>
    %cst_52 = arith.constant dense<0.000000e+00> : vector<2x96xf32>
    %166 = tpu.matmul %165, %80, %cst_52 {dimension_numbers = #tpu.dot_dimension_numbers<[1], [0], [0], [1], [0, 0, 1, 1], [], []>} : vector<2x32xf32>, vector<32x96xf32>, vector<2x96xf32> -> vector<2x96xf32>
    %167 = vector.extract_strided_slice %53 {offsets = [0, 0], sizes = [2, 64], strides = [1, 1]} : vector<2x96xf32> to vector<2x64xf32>
    %168 = vector.extract_strided_slice %166 {offsets = [0, 0], sizes = [2, 64], strides = [1, 1]} : vector<2x96xf32> to vector<2x64xf32>
    %169 = arith.addf %167, %168 : vector<2x64xf32>
    %170 = arith.negf %169 : vector<2x64xf32>
    %171 = math.exp %170 : vector<2x64xf32>
    %cst_53 = arith.constant 1.000000e+00 : f32
    %172 = vector.broadcast %cst_53 : f32 to vector<2x64xf32>
    %173 = arith.addf %172, %171 : vector<2x64xf32>
    %174 = arith.divf %172, %173 : vector<2x64xf32>
    %175 = vector.extract_strided_slice %174 {offsets = [0, 0], sizes = [2, 32], strides = [1, 1]} : vector<2x64xf32> to vector<2x32xf32>
    %176 = vector.extract_strided_slice %174 {offsets = [0, 32], sizes = [2, 32], strides = [1, 1]} : vector<2x64xf32> to vector<2x32xf32>
    %177 = vector.extract_strided_slice %53 {offsets = [0, 64], sizes = [2, 32], strides = [1, 1]} : vector<2x96xf32> to vector<2x32xf32>
    %178 = vector.extract_strided_slice %166 {offsets = [0, 64], sizes = [2, 32], strides = [1, 1]} : vector<2x96xf32> to vector<2x32xf32>
    %179 = vector.broadcast %81 : vector<1x32xf32> to vector<2x32xf32>
    %180 = arith.addf %178, %179 : vector<2x32xf32>
    %181 = arith.mulf %175, %180 : vector<2x32xf32>
    %182 = arith.addf %177, %181 : vector<2x32xf32>
    %183 = math.tanh %182 : vector<2x32xf32>
    %184 = arith.subf %165, %183 : vector<2x32xf32>
    %185 = arith.mulf %176, %184 : vector<2x32xf32>
    %186 = arith.addf %183, %185 : vector<2x32xf32>
    %cst_54 = arith.constant dense<0.000000e+00> : vector<2x96xf32>
    %187 = tpu.matmul %186, %80, %cst_54 {dimension_numbers = #tpu.dot_dimension_numbers<[1], [0], [0], [1], [0, 0, 1, 1], [], []>} : vector<2x32xf32>, vector<32x96xf32>, vector<2x96xf32> -> vector<2x96xf32>
    %188 = vector.extract_strided_slice %61 {offsets = [0, 0], sizes = [2, 64], strides = [1, 1]} : vector<2x96xf32> to vector<2x64xf32>
    %189 = vector.extract_strided_slice %187 {offsets = [0, 0], sizes = [2, 64], strides = [1, 1]} : vector<2x96xf32> to vector<2x64xf32>
    %190 = arith.addf %188, %189 : vector<2x64xf32>
    %191 = arith.negf %190 : vector<2x64xf32>
    %192 = math.exp %191 : vector<2x64xf32>
    %cst_55 = arith.constant 1.000000e+00 : f32
    %193 = vector.broadcast %cst_55 : f32 to vector<2x64xf32>
    %194 = arith.addf %193, %192 : vector<2x64xf32>
    %195 = arith.divf %193, %194 : vector<2x64xf32>
    %196 = vector.extract_strided_slice %195 {offsets = [0, 0], sizes = [2, 32], strides = [1, 1]} : vector<2x64xf32> to vector<2x32xf32>
    %197 = vector.extract_strided_slice %195 {offsets = [0, 32], sizes = [2, 32], strides = [1, 1]} : vector<2x64xf32> to vector<2x32xf32>
    %198 = vector.extract_strided_slice %61 {offsets = [0, 64], sizes = [2, 32], strides = [1, 1]} : vector<2x96xf32> to vector<2x32xf32>
    %199 = vector.extract_strided_slice %187 {offsets = [0, 64], sizes = [2, 32], strides = [1, 1]} : vector<2x96xf32> to vector<2x32xf32>
    %200 = vector.broadcast %81 : vector<1x32xf32> to vector<2x32xf32>
    %201 = arith.addf %199, %200 : vector<2x32xf32>
    %202 = arith.mulf %196, %201 : vector<2x32xf32>
    %203 = arith.addf %198, %202 : vector<2x32xf32>
    %204 = math.tanh %203 : vector<2x32xf32>
    %205 = arith.subf %186, %204 : vector<2x32xf32>
    %206 = arith.mulf %197, %205 : vector<2x32xf32>
    %207 = arith.addf %204, %206 : vector<2x32xf32>
    %cst_56 = arith.constant dense<0.000000e+00> : vector<2x96xf32>
    %208 = tpu.matmul %207, %80, %cst_56 {dimension_numbers = #tpu.dot_dimension_numbers<[1], [0], [0], [1], [0, 0, 1, 1], [], []>} : vector<2x32xf32>, vector<32x96xf32>, vector<2x96xf32> -> vector<2x96xf32>
    %209 = vector.extract_strided_slice %69 {offsets = [0, 0], sizes = [2, 64], strides = [1, 1]} : vector<2x96xf32> to vector<2x64xf32>
    %210 = vector.extract_strided_slice %208 {offsets = [0, 0], sizes = [2, 64], strides = [1, 1]} : vector<2x96xf32> to vector<2x64xf32>
    %211 = arith.addf %209, %210 : vector<2x64xf32>
    %212 = arith.negf %211 : vector<2x64xf32>
    %213 = math.exp %212 : vector<2x64xf32>
    %cst_57 = arith.constant 1.000000e+00 : f32
    %214 = vector.broadcast %cst_57 : f32 to vector<2x64xf32>
    %215 = arith.addf %214, %213 : vector<2x64xf32>
    %216 = arith.divf %214, %215 : vector<2x64xf32>
    %217 = vector.extract_strided_slice %216 {offsets = [0, 0], sizes = [2, 32], strides = [1, 1]} : vector<2x64xf32> to vector<2x32xf32>
    %218 = vector.extract_strided_slice %216 {offsets = [0, 32], sizes = [2, 32], strides = [1, 1]} : vector<2x64xf32> to vector<2x32xf32>
    %219 = vector.extract_strided_slice %69 {offsets = [0, 64], sizes = [2, 32], strides = [1, 1]} : vector<2x96xf32> to vector<2x32xf32>
    %220 = vector.extract_strided_slice %208 {offsets = [0, 64], sizes = [2, 32], strides = [1, 1]} : vector<2x96xf32> to vector<2x32xf32>
    %221 = vector.broadcast %81 : vector<1x32xf32> to vector<2x32xf32>
    %222 = arith.addf %220, %221 : vector<2x32xf32>
    %223 = arith.mulf %217, %222 : vector<2x32xf32>
    %224 = arith.addf %219, %223 : vector<2x32xf32>
    %225 = math.tanh %224 : vector<2x32xf32>
    %226 = arith.subf %207, %225 : vector<2x32xf32>
    %227 = arith.mulf %218, %226 : vector<2x32xf32>
    %228 = arith.addf %225, %227 : vector<2x32xf32>
    %cst_58 = arith.constant dense<0.000000e+00> : vector<2x96xf32>
    %229 = tpu.matmul %228, %80, %cst_58 {dimension_numbers = #tpu.dot_dimension_numbers<[1], [0], [0], [1], [0, 0, 1, 1], [], []>} : vector<2x32xf32>, vector<32x96xf32>, vector<2x96xf32> -> vector<2x96xf32>
    %230 = vector.extract_strided_slice %77 {offsets = [0, 0], sizes = [2, 64], strides = [1, 1]} : vector<2x96xf32> to vector<2x64xf32>
    %231 = vector.extract_strided_slice %229 {offsets = [0, 0], sizes = [2, 64], strides = [1, 1]} : vector<2x96xf32> to vector<2x64xf32>
    %232 = arith.addf %230, %231 : vector<2x64xf32>
    %233 = arith.negf %232 : vector<2x64xf32>
    %234 = math.exp %233 : vector<2x64xf32>
    %cst_59 = arith.constant 1.000000e+00 : f32
    %235 = vector.broadcast %cst_59 : f32 to vector<2x64xf32>
    %236 = arith.addf %235, %234 : vector<2x64xf32>
    %237 = arith.divf %235, %236 : vector<2x64xf32>
    %238 = vector.extract_strided_slice %237 {offsets = [0, 0], sizes = [2, 32], strides = [1, 1]} : vector<2x64xf32> to vector<2x32xf32>
    %239 = vector.extract_strided_slice %237 {offsets = [0, 32], sizes = [2, 32], strides = [1, 1]} : vector<2x64xf32> to vector<2x32xf32>
    %240 = vector.extract_strided_slice %77 {offsets = [0, 64], sizes = [2, 32], strides = [1, 1]} : vector<2x96xf32> to vector<2x32xf32>
    %241 = vector.extract_strided_slice %229 {offsets = [0, 64], sizes = [2, 32], strides = [1, 1]} : vector<2x96xf32> to vector<2x32xf32>
    %242 = vector.broadcast %81 : vector<1x32xf32> to vector<2x32xf32>
    %243 = arith.addf %241, %242 : vector<2x32xf32>
    %244 = arith.mulf %238, %243 : vector<2x32xf32>
    %245 = arith.addf %240, %244 : vector<2x32xf32>
    %246 = math.tanh %245 : vector<2x32xf32>
    %247 = arith.subf %228, %246 : vector<2x32xf32>
    %248 = arith.mulf %239, %247 : vector<2x32xf32>
    %249 = arith.addf %246, %248 : vector<2x32xf32>
    %c8 = arith.constant 8 : index
    %c0_60 = arith.constant 0 : index
    %250 = vector.load %arg5[%c8, %c0_60] : memref<40x96xf32, #tpu.memory_space<vmem>>, vector<32x96xf32>
    %c1_61 = arith.constant 1 : index
    %c0_62 = arith.constant 0 : index
    %251 = vector.load %arg7[%c1_61, %c0_62] : memref<9x96xf32, #tpu.memory_space<vmem>>, vector<1x96xf32>
    %cst_63 = arith.constant dense<0.000000e+00> : vector<2x96xf32>
    %252 = tpu.matmul %102, %250, %cst_63 {dimension_numbers = #tpu.dot_dimension_numbers<[1], [0], [0], [1], [0, 0, 1, 1], [], []>} : vector<2x32xf32>, vector<32x96xf32>, vector<2x96xf32> -> vector<2x96xf32>
    %253 = vector.broadcast %251 : vector<1x96xf32> to vector<2x96xf32>
    %254 = arith.addf %252, %253 : vector<2x96xf32>
    %cst_64 = arith.constant dense<0.000000e+00> : vector<2x96xf32>
    %255 = tpu.matmul %123, %250, %cst_64 {dimension_numbers = #tpu.dot_dimension_numbers<[1], [0], [0], [1], [0, 0, 1, 1], [], []>} : vector<2x32xf32>, vector<32x96xf32>, vector<2x96xf32> -> vector<2x96xf32>
    %256 = vector.broadcast %251 : vector<1x96xf32> to vector<2x96xf32>
    %257 = arith.addf %255, %256 : vector<2x96xf32>
    %cst_65 = arith.constant dense<0.000000e+00> : vector<2x96xf32>
    %258 = tpu.matmul %144, %250, %cst_65 {dimension_numbers = #tpu.dot_dimension_numbers<[1], [0], [0], [1], [0, 0, 1, 1], [], []>} : vector<2x32xf32>, vector<32x96xf32>, vector<2x96xf32> -> vector<2x96xf32>
    %259 = vector.broadcast %251 : vector<1x96xf32> to vector<2x96xf32>
    %260 = arith.addf %258, %259 : vector<2x96xf32>
    %cst_66 = arith.constant dense<0.000000e+00> : vector<2x96xf32>
    %261 = tpu.matmul %165, %250, %cst_66 {dimension_numbers = #tpu.dot_dimension_numbers<[1], [0], [0], [1], [0, 0, 1, 1], [], []>} : vector<2x32xf32>, vector<32x96xf32>, vector<2x96xf32> -> vector<2x96xf32>
    %262 = vector.broadcast %251 : vector<1x96xf32> to vector<2x96xf32>
    %263 = arith.addf %261, %262 : vector<2x96xf32>
    %cst_67 = arith.constant dense<0.000000e+00> : vector<2x96xf32>
    %264 = tpu.matmul %186, %250, %cst_67 {dimension_numbers = #tpu.dot_dimension_numbers<[1], [0], [0], [1], [0, 0, 1, 1], [], []>} : vector<2x32xf32>, vector<32x96xf32>, vector<2x96xf32> -> vector<2x96xf32>
    %265 = vector.broadcast %251 : vector<1x96xf32> to vector<2x96xf32>
    %266 = arith.addf %264, %265 : vector<2x96xf32>
    %cst_68 = arith.constant dense<0.000000e+00> : vector<2x96xf32>
    %267 = tpu.matmul %207, %250, %cst_68 {dimension_numbers = #tpu.dot_dimension_numbers<[1], [0], [0], [1], [0, 0, 1, 1], [], []>} : vector<2x32xf32>, vector<32x96xf32>, vector<2x96xf32> -> vector<2x96xf32>
    %268 = vector.broadcast %251 : vector<1x96xf32> to vector<2x96xf32>
    %269 = arith.addf %267, %268 : vector<2x96xf32>
    %cst_69 = arith.constant dense<0.000000e+00> : vector<2x96xf32>
    %270 = tpu.matmul %228, %250, %cst_69 {dimension_numbers = #tpu.dot_dimension_numbers<[1], [0], [0], [1], [0, 0, 1, 1], [], []>} : vector<2x32xf32>, vector<32x96xf32>, vector<2x96xf32> -> vector<2x96xf32>
    %271 = vector.broadcast %251 : vector<1x96xf32> to vector<2x96xf32>
    %272 = arith.addf %270, %271 : vector<2x96xf32>
    %cst_70 = arith.constant dense<0.000000e+00> : vector<2x96xf32>
    %273 = tpu.matmul %249, %250, %cst_70 {dimension_numbers = #tpu.dot_dimension_numbers<[1], [0], [0], [1], [0, 0, 1, 1], [], []>} : vector<2x32xf32>, vector<32x96xf32>, vector<2x96xf32> -> vector<2x96xf32>
    %274 = vector.broadcast %251 : vector<1x96xf32> to vector<2x96xf32>
    %275 = arith.addf %273, %274 : vector<2x96xf32>
    %276 = vector.extract_strided_slice %5 {offsets = [2, 0], sizes = [2, 32], strides = [1, 1]} : vector<4x32xf32> to vector<2x32xf32>
    %c1_71 = arith.constant 1 : index
    %c0_72 = arith.constant 0 : index
    %c0_73 = arith.constant 0 : index
    %277 = vector.load %arg6[%c1_71, %c0_72, %c0_73] : memref<2x32x96xf32, #tpu.memory_space<vmem>>, vector<1x32x96xf32>
    %278 = vector.shape_cast %277 : vector<1x32x96xf32> to vector<32x96xf32>
    %c3_74 = arith.constant 3 : index
    %c0_75 = arith.constant 0 : index
    %279 = vector.load %arg7[%c3_74, %c0_75] : memref<9x96xf32, #tpu.memory_space<vmem>>, vector<1x32xf32>
    %cst_76 = arith.constant dense<0.000000e+00> : vector<2x96xf32>
    %280 = tpu.matmul %276, %278, %cst_76 {dimension_numbers = #tpu.dot_dimension_numbers<[1], [0], [0], [1], [0, 0, 1, 1], [], []>} : vector<2x32xf32>, vector<32x96xf32>, vector<2x96xf32> -> vector<2x96xf32>
    %281 = vector.extract_strided_slice %254 {offsets = [0, 0], sizes = [2, 64], strides = [1, 1]} : vector<2x96xf32> to vector<2x64xf32>
    %282 = vector.extract_strided_slice %280 {offsets = [0, 0], sizes = [2, 64], strides = [1, 1]} : vector<2x96xf32> to vector<2x64xf32>
    %283 = arith.addf %281, %282 : vector<2x64xf32>
    %284 = arith.negf %283 : vector<2x64xf32>
    %285 = math.exp %284 : vector<2x64xf32>
    %cst_77 = arith.constant 1.000000e+00 : f32
    %286 = vector.broadcast %cst_77 : f32 to vector<2x64xf32>
    %287 = arith.addf %286, %285 : vector<2x64xf32>
    %288 = arith.divf %286, %287 : vector<2x64xf32>
    %289 = vector.extract_strided_slice %288 {offsets = [0, 0], sizes = [2, 32], strides = [1, 1]} : vector<2x64xf32> to vector<2x32xf32>
    %290 = vector.extract_strided_slice %288 {offsets = [0, 32], sizes = [2, 32], strides = [1, 1]} : vector<2x64xf32> to vector<2x32xf32>
    %291 = vector.extract_strided_slice %254 {offsets = [0, 64], sizes = [2, 32], strides = [1, 1]} : vector<2x96xf32> to vector<2x32xf32>
    %292 = vector.extract_strided_slice %280 {offsets = [0, 64], sizes = [2, 32], strides = [1, 1]} : vector<2x96xf32> to vector<2x32xf32>
    %293 = vector.broadcast %279 : vector<1x32xf32> to vector<2x32xf32>
    %294 = arith.addf %292, %293 : vector<2x32xf32>
    %295 = arith.mulf %289, %294 : vector<2x32xf32>
    %296 = arith.addf %291, %295 : vector<2x32xf32>
    %297 = math.tanh %296 : vector<2x32xf32>
    %298 = arith.subf %276, %297 : vector<2x32xf32>
    %299 = arith.mulf %290, %298 : vector<2x32xf32>
    %300 = arith.addf %297, %299 : vector<2x32xf32>
    %cst_78 = arith.constant dense<0.000000e+00> : vector<2x96xf32>
    %301 = tpu.matmul %300, %278, %cst_78 {dimension_numbers = #tpu.dot_dimension_numbers<[1], [0], [0], [1], [0, 0, 1, 1], [], []>} : vector<2x32xf32>, vector<32x96xf32>, vector<2x96xf32> -> vector<2x96xf32>
    %302 = vector.extract_strided_slice %257 {offsets = [0, 0], sizes = [2, 64], strides = [1, 1]} : vector<2x96xf32> to vector<2x64xf32>
    %303 = vector.extract_strided_slice %301 {offsets = [0, 0], sizes = [2, 64], strides = [1, 1]} : vector<2x96xf32> to vector<2x64xf32>
    %304 = arith.addf %302, %303 : vector<2x64xf32>
    %305 = arith.negf %304 : vector<2x64xf32>
    %306 = math.exp %305 : vector<2x64xf32>
    %cst_79 = arith.constant 1.000000e+00 : f32
    %307 = vector.broadcast %cst_79 : f32 to vector<2x64xf32>
    %308 = arith.addf %307, %306 : vector<2x64xf32>
    %309 = arith.divf %307, %308 : vector<2x64xf32>
    %310 = vector.extract_strided_slice %309 {offsets = [0, 0], sizes = [2, 32], strides = [1, 1]} : vector<2x64xf32> to vector<2x32xf32>
    %311 = vector.extract_strided_slice %309 {offsets = [0, 32], sizes = [2, 32], strides = [1, 1]} : vector<2x64xf32> to vector<2x32xf32>
    %312 = vector.extract_strided_slice %257 {offsets = [0, 64], sizes = [2, 32], strides = [1, 1]} : vector<2x96xf32> to vector<2x32xf32>
    %313 = vector.extract_strided_slice %301 {offsets = [0, 64], sizes = [2, 32], strides = [1, 1]} : vector<2x96xf32> to vector<2x32xf32>
    %314 = vector.broadcast %279 : vector<1x32xf32> to vector<2x32xf32>
    %315 = arith.addf %313, %314 : vector<2x32xf32>
    %316 = arith.mulf %310, %315 : vector<2x32xf32>
    %317 = arith.addf %312, %316 : vector<2x32xf32>
    %318 = math.tanh %317 : vector<2x32xf32>
    %319 = arith.subf %300, %318 : vector<2x32xf32>
    %320 = arith.mulf %311, %319 : vector<2x32xf32>
    %321 = arith.addf %318, %320 : vector<2x32xf32>
    %cst_80 = arith.constant dense<0.000000e+00> : vector<2x96xf32>
    %322 = tpu.matmul %321, %278, %cst_80 {dimension_numbers = #tpu.dot_dimension_numbers<[1], [0], [0], [1], [0, 0, 1, 1], [], []>} : vector<2x32xf32>, vector<32x96xf32>, vector<2x96xf32> -> vector<2x96xf32>
    %323 = vector.extract_strided_slice %260 {offsets = [0, 0], sizes = [2, 64], strides = [1, 1]} : vector<2x96xf32> to vector<2x64xf32>
    %324 = vector.extract_strided_slice %322 {offsets = [0, 0], sizes = [2, 64], strides = [1, 1]} : vector<2x96xf32> to vector<2x64xf32>
    %325 = arith.addf %323, %324 : vector<2x64xf32>
    %326 = arith.negf %325 : vector<2x64xf32>
    %327 = math.exp %326 : vector<2x64xf32>
    %cst_81 = arith.constant 1.000000e+00 : f32
    %328 = vector.broadcast %cst_81 : f32 to vector<2x64xf32>
    %329 = arith.addf %328, %327 : vector<2x64xf32>
    %330 = arith.divf %328, %329 : vector<2x64xf32>
    %331 = vector.extract_strided_slice %330 {offsets = [0, 0], sizes = [2, 32], strides = [1, 1]} : vector<2x64xf32> to vector<2x32xf32>
    %332 = vector.extract_strided_slice %330 {offsets = [0, 32], sizes = [2, 32], strides = [1, 1]} : vector<2x64xf32> to vector<2x32xf32>
    %333 = vector.extract_strided_slice %260 {offsets = [0, 64], sizes = [2, 32], strides = [1, 1]} : vector<2x96xf32> to vector<2x32xf32>
    %334 = vector.extract_strided_slice %322 {offsets = [0, 64], sizes = [2, 32], strides = [1, 1]} : vector<2x96xf32> to vector<2x32xf32>
    %335 = vector.broadcast %279 : vector<1x32xf32> to vector<2x32xf32>
    %336 = arith.addf %334, %335 : vector<2x32xf32>
    %337 = arith.mulf %331, %336 : vector<2x32xf32>
    %338 = arith.addf %333, %337 : vector<2x32xf32>
    %339 = math.tanh %338 : vector<2x32xf32>
    %340 = arith.subf %321, %339 : vector<2x32xf32>
    %341 = arith.mulf %332, %340 : vector<2x32xf32>
    %342 = arith.addf %339, %341 : vector<2x32xf32>
    %cst_82 = arith.constant dense<0.000000e+00> : vector<2x96xf32>
    %343 = tpu.matmul %342, %278, %cst_82 {dimension_numbers = #tpu.dot_dimension_numbers<[1], [0], [0], [1], [0, 0, 1, 1], [], []>} : vector<2x32xf32>, vector<32x96xf32>, vector<2x96xf32> -> vector<2x96xf32>
    %344 = vector.extract_strided_slice %263 {offsets = [0, 0], sizes = [2, 64], strides = [1, 1]} : vector<2x96xf32> to vector<2x64xf32>
    %345 = vector.extract_strided_slice %343 {offsets = [0, 0], sizes = [2, 64], strides = [1, 1]} : vector<2x96xf32> to vector<2x64xf32>
    %346 = arith.addf %344, %345 : vector<2x64xf32>
    %347 = arith.negf %346 : vector<2x64xf32>
    %348 = math.exp %347 : vector<2x64xf32>
    %cst_83 = arith.constant 1.000000e+00 : f32
    %349 = vector.broadcast %cst_83 : f32 to vector<2x64xf32>
    %350 = arith.addf %349, %348 : vector<2x64xf32>
    %351 = arith.divf %349, %350 : vector<2x64xf32>
    %352 = vector.extract_strided_slice %351 {offsets = [0, 0], sizes = [2, 32], strides = [1, 1]} : vector<2x64xf32> to vector<2x32xf32>
    %353 = vector.extract_strided_slice %351 {offsets = [0, 32], sizes = [2, 32], strides = [1, 1]} : vector<2x64xf32> to vector<2x32xf32>
    %354 = vector.extract_strided_slice %263 {offsets = [0, 64], sizes = [2, 32], strides = [1, 1]} : vector<2x96xf32> to vector<2x32xf32>
    %355 = vector.extract_strided_slice %343 {offsets = [0, 64], sizes = [2, 32], strides = [1, 1]} : vector<2x96xf32> to vector<2x32xf32>
    %356 = vector.broadcast %279 : vector<1x32xf32> to vector<2x32xf32>
    %357 = arith.addf %355, %356 : vector<2x32xf32>
    %358 = arith.mulf %352, %357 : vector<2x32xf32>
    %359 = arith.addf %354, %358 : vector<2x32xf32>
    %360 = math.tanh %359 : vector<2x32xf32>
    %361 = arith.subf %342, %360 : vector<2x32xf32>
    %362 = arith.mulf %353, %361 : vector<2x32xf32>
    %363 = arith.addf %360, %362 : vector<2x32xf32>
    %cst_84 = arith.constant dense<0.000000e+00> : vector<2x96xf32>
    %364 = tpu.matmul %363, %278, %cst_84 {dimension_numbers = #tpu.dot_dimension_numbers<[1], [0], [0], [1], [0, 0, 1, 1], [], []>} : vector<2x32xf32>, vector<32x96xf32>, vector<2x96xf32> -> vector<2x96xf32>
    %365 = vector.extract_strided_slice %266 {offsets = [0, 0], sizes = [2, 64], strides = [1, 1]} : vector<2x96xf32> to vector<2x64xf32>
    %366 = vector.extract_strided_slice %364 {offsets = [0, 0], sizes = [2, 64], strides = [1, 1]} : vector<2x96xf32> to vector<2x64xf32>
    %367 = arith.addf %365, %366 : vector<2x64xf32>
    %368 = arith.negf %367 : vector<2x64xf32>
    %369 = math.exp %368 : vector<2x64xf32>
    %cst_85 = arith.constant 1.000000e+00 : f32
    %370 = vector.broadcast %cst_85 : f32 to vector<2x64xf32>
    %371 = arith.addf %370, %369 : vector<2x64xf32>
    %372 = arith.divf %370, %371 : vector<2x64xf32>
    %373 = vector.extract_strided_slice %372 {offsets = [0, 0], sizes = [2, 32], strides = [1, 1]} : vector<2x64xf32> to vector<2x32xf32>
    %374 = vector.extract_strided_slice %372 {offsets = [0, 32], sizes = [2, 32], strides = [1, 1]} : vector<2x64xf32> to vector<2x32xf32>
    %375 = vector.extract_strided_slice %266 {offsets = [0, 64], sizes = [2, 32], strides = [1, 1]} : vector<2x96xf32> to vector<2x32xf32>
    %376 = vector.extract_strided_slice %364 {offsets = [0, 64], sizes = [2, 32], strides = [1, 1]} : vector<2x96xf32> to vector<2x32xf32>
    %377 = vector.broadcast %279 : vector<1x32xf32> to vector<2x32xf32>
    %378 = arith.addf %376, %377 : vector<2x32xf32>
    %379 = arith.mulf %373, %378 : vector<2x32xf32>
    %380 = arith.addf %375, %379 : vector<2x32xf32>
    %381 = math.tanh %380 : vector<2x32xf32>
    %382 = arith.subf %363, %381 : vector<2x32xf32>
    %383 = arith.mulf %374, %382 : vector<2x32xf32>
    %384 = arith.addf %381, %383 : vector<2x32xf32>
    %cst_86 = arith.constant dense<0.000000e+00> : vector<2x96xf32>
    %385 = tpu.matmul %384, %278, %cst_86 {dimension_numbers = #tpu.dot_dimension_numbers<[1], [0], [0], [1], [0, 0, 1, 1], [], []>} : vector<2x32xf32>, vector<32x96xf32>, vector<2x96xf32> -> vector<2x96xf32>
    %386 = vector.extract_strided_slice %269 {offsets = [0, 0], sizes = [2, 64], strides = [1, 1]} : vector<2x96xf32> to vector<2x64xf32>
    %387 = vector.extract_strided_slice %385 {offsets = [0, 0], sizes = [2, 64], strides = [1, 1]} : vector<2x96xf32> to vector<2x64xf32>
    %388 = arith.addf %386, %387 : vector<2x64xf32>
    %389 = arith.negf %388 : vector<2x64xf32>
    %390 = math.exp %389 : vector<2x64xf32>
    %cst_87 = arith.constant 1.000000e+00 : f32
    %391 = vector.broadcast %cst_87 : f32 to vector<2x64xf32>
    %392 = arith.addf %391, %390 : vector<2x64xf32>
    %393 = arith.divf %391, %392 : vector<2x64xf32>
    %394 = vector.extract_strided_slice %393 {offsets = [0, 0], sizes = [2, 32], strides = [1, 1]} : vector<2x64xf32> to vector<2x32xf32>
    %395 = vector.extract_strided_slice %393 {offsets = [0, 32], sizes = [2, 32], strides = [1, 1]} : vector<2x64xf32> to vector<2x32xf32>
    %396 = vector.extract_strided_slice %269 {offsets = [0, 64], sizes = [2, 32], strides = [1, 1]} : vector<2x96xf32> to vector<2x32xf32>
    %397 = vector.extract_strided_slice %385 {offsets = [0, 64], sizes = [2, 32], strides = [1, 1]} : vector<2x96xf32> to vector<2x32xf32>
    %398 = vector.broadcast %279 : vector<1x32xf32> to vector<2x32xf32>
    %399 = arith.addf %397, %398 : vector<2x32xf32>
    %400 = arith.mulf %394, %399 : vector<2x32xf32>
    %401 = arith.addf %396, %400 : vector<2x32xf32>
    %402 = math.tanh %401 : vector<2x32xf32>
    %403 = arith.subf %384, %402 : vector<2x32xf32>
    %404 = arith.mulf %395, %403 : vector<2x32xf32>
    %405 = arith.addf %402, %404 : vector<2x32xf32>
    %cst_88 = arith.constant dense<0.000000e+00> : vector<2x96xf32>
    %406 = tpu.matmul %405, %278, %cst_88 {dimension_numbers = #tpu.dot_dimension_numbers<[1], [0], [0], [1], [0, 0, 1, 1], [], []>} : vector<2x32xf32>, vector<32x96xf32>, vector<2x96xf32> -> vector<2x96xf32>
    %407 = vector.extract_strided_slice %272 {offsets = [0, 0], sizes = [2, 64], strides = [1, 1]} : vector<2x96xf32> to vector<2x64xf32>
    %408 = vector.extract_strided_slice %406 {offsets = [0, 0], sizes = [2, 64], strides = [1, 1]} : vector<2x96xf32> to vector<2x64xf32>
    %409 = arith.addf %407, %408 : vector<2x64xf32>
    %410 = arith.negf %409 : vector<2x64xf32>
    %411 = math.exp %410 : vector<2x64xf32>
    %cst_89 = arith.constant 1.000000e+00 : f32
    %412 = vector.broadcast %cst_89 : f32 to vector<2x64xf32>
    %413 = arith.addf %412, %411 : vector<2x64xf32>
    %414 = arith.divf %412, %413 : vector<2x64xf32>
    %415 = vector.extract_strided_slice %414 {offsets = [0, 0], sizes = [2, 32], strides = [1, 1]} : vector<2x64xf32> to vector<2x32xf32>
    %416 = vector.extract_strided_slice %414 {offsets = [0, 32], sizes = [2, 32], strides = [1, 1]} : vector<2x64xf32> to vector<2x32xf32>
    %417 = vector.extract_strided_slice %272 {offsets = [0, 64], sizes = [2, 32], strides = [1, 1]} : vector<2x96xf32> to vector<2x32xf32>
    %418 = vector.extract_strided_slice %406 {offsets = [0, 64], sizes = [2, 32], strides = [1, 1]} : vector<2x96xf32> to vector<2x32xf32>
    %419 = vector.broadcast %279 : vector<1x32xf32> to vector<2x32xf32>
    %420 = arith.addf %418, %419 : vector<2x32xf32>
    %421 = arith.mulf %415, %420 : vector<2x32xf32>
    %422 = arith.addf %417, %421 : vector<2x32xf32>
    %423 = math.tanh %422 : vector<2x32xf32>
    %424 = arith.subf %405, %423 : vector<2x32xf32>
    %425 = arith.mulf %416, %424 : vector<2x32xf32>
    %426 = arith.addf %423, %425 : vector<2x32xf32>
    %cst_90 = arith.constant dense<0.000000e+00> : vector<2x96xf32>
    %427 = tpu.matmul %426, %278, %cst_90 {dimension_numbers = #tpu.dot_dimension_numbers<[1], [0], [0], [1], [0, 0, 1, 1], [], []>} : vector<2x32xf32>, vector<32x96xf32>, vector<2x96xf32> -> vector<2x96xf32>
    %428 = vector.extract_strided_slice %275 {offsets = [0, 0], sizes = [2, 64], strides = [1, 1]} : vector<2x96xf32> to vector<2x64xf32>
    %429 = vector.extract_strided_slice %427 {offsets = [0, 0], sizes = [2, 64], strides = [1, 1]} : vector<2x96xf32> to vector<2x64xf32>
    %430 = arith.addf %428, %429 : vector<2x64xf32>
    %431 = arith.negf %430 : vector<2x64xf32>
    %432 = math.exp %431 : vector<2x64xf32>
    %cst_91 = arith.constant 1.000000e+00 : f32
    %433 = vector.broadcast %cst_91 : f32 to vector<2x64xf32>
    %434 = arith.addf %433, %432 : vector<2x64xf32>
    %435 = arith.divf %433, %434 : vector<2x64xf32>
    %436 = vector.extract_strided_slice %435 {offsets = [0, 0], sizes = [2, 32], strides = [1, 1]} : vector<2x64xf32> to vector<2x32xf32>
    %437 = vector.extract_strided_slice %435 {offsets = [0, 32], sizes = [2, 32], strides = [1, 1]} : vector<2x64xf32> to vector<2x32xf32>
    %438 = vector.extract_strided_slice %275 {offsets = [0, 64], sizes = [2, 32], strides = [1, 1]} : vector<2x96xf32> to vector<2x32xf32>
    %439 = vector.extract_strided_slice %427 {offsets = [0, 64], sizes = [2, 32], strides = [1, 1]} : vector<2x96xf32> to vector<2x32xf32>
    %440 = vector.broadcast %279 : vector<1x32xf32> to vector<2x32xf32>
    %441 = arith.addf %439, %440 : vector<2x32xf32>
    %442 = arith.mulf %436, %441 : vector<2x32xf32>
    %443 = arith.addf %438, %442 : vector<2x32xf32>
    %444 = math.tanh %443 : vector<2x32xf32>
    %445 = arith.subf %426, %444 : vector<2x32xf32>
    %446 = arith.mulf %437, %445 : vector<2x32xf32>
    %447 = arith.addf %444, %446 : vector<2x32xf32>
    %c0_92 = arith.constant 0 : index
    %c0_93 = arith.constant 0 : index
    %448 = vector.load %arg8[%c0_92, %c0_93] : memref<32x16xf32, #tpu.memory_space<vmem>>, vector<32x16xf32>
    %c8_94 = arith.constant 8 : index
    %c0_95 = arith.constant 0 : index
    %449 = vector.load %arg7[%c8_94, %c0_95] : memref<9x96xf32, #tpu.memory_space<vmem>>, vector<1x16xf32>
    %cst_96 = arith.constant dense<0.000000e+00> : vector<2x16xf32>
    %450 = tpu.matmul %300, %448, %cst_96 {dimension_numbers = #tpu.dot_dimension_numbers<[1], [0], [0], [1], [0, 0, 1, 1], [], []>} : vector<2x32xf32>, vector<32x16xf32>, vector<2x16xf32> -> vector<2x16xf32>
    %451 = vector.broadcast %449 : vector<1x16xf32> to vector<2x16xf32>
    %452 = arith.addf %450, %451 : vector<2x16xf32>
    %c0_97 = arith.constant 0 : index
    %c0_98 = arith.constant 0 : index
    %c0_99 = arith.constant 0 : index
    %453 = vector.load %arg9[%c0_97, %c0_98, %c0_99] : memref<8x2x16xf32, #tpu.memory_space<vmem>>, vector<1x2x16xf32>
    %454 = vector.shape_cast %453 : vector<1x2x16xf32> to vector<2x16xf32>
    %455 = vector.shape_cast %452 : vector<2x16xf32> to vector<1x2x16xf32>
    tpu.vector_store %arg9[%c0_97, %c0_98, %c0_99], %455 {strides = array<i32>} : memref<8x2x16xf32, #tpu.memory_space<vmem>>, vector<1x2x16xf32>,
    %cst_100 = arith.constant dense<0.000000e+00> : vector<2x16xf32>
    %456 = tpu.matmul %321, %448, %cst_100 {dimension_numbers = #tpu.dot_dimension_numbers<[1], [0], [0], [1], [0, 0, 1, 1], [], []>} : vector<2x32xf32>, vector<32x16xf32>, vector<2x16xf32> -> vector<2x16xf32>
    %457 = vector.broadcast %449 : vector<1x16xf32> to vector<2x16xf32>
    %458 = arith.addf %456, %457 : vector<2x16xf32>
    %c1_101 = arith.constant 1 : index
    %c0_102 = arith.constant 0 : index
    %c0_103 = arith.constant 0 : index
    %459 = vector.load %arg9[%c1_101, %c0_102, %c0_103] : memref<8x2x16xf32, #tpu.memory_space<vmem>>, vector<1x2x16xf32>
    %460 = vector.shape_cast %459 : vector<1x2x16xf32> to vector<2x16xf32>
    %461 = vector.shape_cast %458 : vector<2x16xf32> to vector<1x2x16xf32>
    tpu.vector_store %arg9[%c1_101, %c0_102, %c0_103], %461 {strides = array<i32>} : memref<8x2x16xf32, #tpu.memory_space<vmem>>, vector<1x2x16xf32>,
    %cst_104 = arith.constant dense<0.000000e+00> : vector<2x16xf32>
    %462 = tpu.matmul %342, %448, %cst_104 {dimension_numbers = #tpu.dot_dimension_numbers<[1], [0], [0], [1], [0, 0, 1, 1], [], []>} : vector<2x32xf32>, vector<32x16xf32>, vector<2x16xf32> -> vector<2x16xf32>
    %463 = vector.broadcast %449 : vector<1x16xf32> to vector<2x16xf32>
    %464 = arith.addf %462, %463 : vector<2x16xf32>
    %c2_105 = arith.constant 2 : index
    %c0_106 = arith.constant 0 : index
    %c0_107 = arith.constant 0 : index
    %465 = vector.load %arg9[%c2_105, %c0_106, %c0_107] : memref<8x2x16xf32, #tpu.memory_space<vmem>>, vector<1x2x16xf32>
    %466 = vector.shape_cast %465 : vector<1x2x16xf32> to vector<2x16xf32>
    %467 = vector.shape_cast %464 : vector<2x16xf32> to vector<1x2x16xf32>
    tpu.vector_store %arg9[%c2_105, %c0_106, %c0_107], %467 {strides = array<i32>} : memref<8x2x16xf32, #tpu.memory_space<vmem>>, vector<1x2x16xf32>,
    %cst_108 = arith.constant dense<0.000000e+00> : vector<2x16xf32>
    %468 = tpu.matmul %363, %448, %cst_108 {dimension_numbers = #tpu.dot_dimension_numbers<[1], [0], [0], [1], [0, 0, 1, 1], [], []>} : vector<2x32xf32>, vector<32x16xf32>, vector<2x16xf32> -> vector<2x16xf32>
    %469 = vector.broadcast %449 : vector<1x16xf32> to vector<2x16xf32>
    %470 = arith.addf %468, %469 : vector<2x16xf32>
    %c3_109 = arith.constant 3 : index
    %c0_110 = arith.constant 0 : index
    %c0_111 = arith.constant 0 : index
    %471 = vector.load %arg9[%c3_109, %c0_110, %c0_111] : memref<8x2x16xf32, #tpu.memory_space<vmem>>, vector<1x2x16xf32>
    %472 = vector.shape_cast %471 : vector<1x2x16xf32> to vector<2x16xf32>
    %473 = vector.shape_cast %470 : vector<2x16xf32> to vector<1x2x16xf32>
    tpu.vector_store %arg9[%c3_109, %c0_110, %c0_111], %473 {strides = array<i32>} : memref<8x2x16xf32, #tpu.memory_space<vmem>>, vector<1x2x16xf32>,
    %cst_112 = arith.constant dense<0.000000e+00> : vector<2x16xf32>
    %474 = tpu.matmul %384, %448, %cst_112 {dimension_numbers = #tpu.dot_dimension_numbers<[1], [0], [0], [1], [0, 0, 1, 1], [], []>} : vector<2x32xf32>, vector<32x16xf32>, vector<2x16xf32> -> vector<2x16xf32>
    %475 = vector.broadcast %449 : vector<1x16xf32> to vector<2x16xf32>
    %476 = arith.addf %474, %475 : vector<2x16xf32>
    %c4_113 = arith.constant 4 : index
    %c0_114 = arith.constant 0 : index
    %c0_115 = arith.constant 0 : index
    %477 = vector.load %arg9[%c4_113, %c0_114, %c0_115] : memref<8x2x16xf32, #tpu.memory_space<vmem>>, vector<1x2x16xf32>
    %478 = vector.shape_cast %477 : vector<1x2x16xf32> to vector<2x16xf32>
    %479 = vector.shape_cast %476 : vector<2x16xf32> to vector<1x2x16xf32>
    tpu.vector_store %arg9[%c4_113, %c0_114, %c0_115], %479 {strides = array<i32>} : memref<8x2x16xf32, #tpu.memory_space<vmem>>, vector<1x2x16xf32>,
    %cst_116 = arith.constant dense<0.000000e+00> : vector<2x16xf32>
    %480 = tpu.matmul %405, %448, %cst_116 {dimension_numbers = #tpu.dot_dimension_numbers<[1], [0], [0], [1], [0, 0, 1, 1], [], []>} : vector<2x32xf32>, vector<32x16xf32>, vector<2x16xf32> -> vector<2x16xf32>
    %481 = vector.broadcast %449 : vector<1x16xf32> to vector<2x16xf32>
    %482 = arith.addf %480, %481 : vector<2x16xf32>
    %c5_117 = arith.constant 5 : index
    %c0_118 = arith.constant 0 : index
    %c0_119 = arith.constant 0 : index
    %483 = vector.load %arg9[%c5_117, %c0_118, %c0_119] : memref<8x2x16xf32, #tpu.memory_space<vmem>>, vector<1x2x16xf32>
    %484 = vector.shape_cast %483 : vector<1x2x16xf32> to vector<2x16xf32>
    %485 = vector.shape_cast %482 : vector<2x16xf32> to vector<1x2x16xf32>
    tpu.vector_store %arg9[%c5_117, %c0_118, %c0_119], %485 {strides = array<i32>} : memref<8x2x16xf32, #tpu.memory_space<vmem>>, vector<1x2x16xf32>,
    %cst_120 = arith.constant dense<0.000000e+00> : vector<2x16xf32>
    %486 = tpu.matmul %426, %448, %cst_120 {dimension_numbers = #tpu.dot_dimension_numbers<[1], [0], [0], [1], [0, 0, 1, 1], [], []>} : vector<2x32xf32>, vector<32x16xf32>, vector<2x16xf32> -> vector<2x16xf32>
    %487 = vector.broadcast %449 : vector<1x16xf32> to vector<2x16xf32>
    %488 = arith.addf %486, %487 : vector<2x16xf32>
    %c6_121 = arith.constant 6 : index
    %c0_122 = arith.constant 0 : index
    %c0_123 = arith.constant 0 : index
    %489 = vector.load %arg9[%c6_121, %c0_122, %c0_123] : memref<8x2x16xf32, #tpu.memory_space<vmem>>, vector<1x2x16xf32>
    %490 = vector.shape_cast %489 : vector<1x2x16xf32> to vector<2x16xf32>
    %491 = vector.shape_cast %488 : vector<2x16xf32> to vector<1x2x16xf32>
    tpu.vector_store %arg9[%c6_121, %c0_122, %c0_123], %491 {strides = array<i32>} : memref<8x2x16xf32, #tpu.memory_space<vmem>>, vector<1x2x16xf32>,
    %cst_124 = arith.constant dense<0.000000e+00> : vector<2x16xf32>
    %492 = tpu.matmul %447, %448, %cst_124 {dimension_numbers = #tpu.dot_dimension_numbers<[1], [0], [0], [1], [0, 0, 1, 1], [], []>} : vector<2x32xf32>, vector<32x16xf32>, vector<2x16xf32> -> vector<2x16xf32>
    %493 = vector.broadcast %449 : vector<1x16xf32> to vector<2x16xf32>
    %494 = arith.addf %492, %493 : vector<2x16xf32>
    %c7_125 = arith.constant 7 : index
    %c0_126 = arith.constant 0 : index
    %c0_127 = arith.constant 0 : index
    %495 = vector.load %arg9[%c7_125, %c0_126, %c0_127] : memref<8x2x16xf32, #tpu.memory_space<vmem>>, vector<1x2x16xf32>
    %496 = vector.shape_cast %495 : vector<1x2x16xf32> to vector<2x16xf32>
    %497 = vector.shape_cast %494 : vector<2x16xf32> to vector<1x2x16xf32>
    tpu.vector_store %arg9[%c7_125, %c0_126, %c0_127], %497 {strides = array<i32>} : memref<8x2x16xf32, #tpu.memory_space<vmem>>, vector<1x2x16xf32>,
    return
  }
}

</mosaic_0001>

<llo_original>
// kernel: decoder_forward_teacher_forcing.1
$region0: #{decoder_forward_teacher_forcing.1}
  #allocation0 [shape = 'u32[]', space=smem, size = 0x4, offset = 0x4, fixed_abs, tag = 'smem constant byte address 0x4 - core index']
  #allocation1 [shape = 'u32[144,128]{1,0:T(1,128)}', space=vmem, size = 0x12000, scoped, tag = 'internal scratch']
  %s0 = inlined_call_operand.vmem [shape: f32[2,8], index: 0, kind: input, shape index: {}]
  %s1 = inlined_call_operand.vmem [shape: f32[4,16], index: 1, kind: input, shape index: {}]
  %s2 = inlined_call_operand.vmem [shape: s32[8,2,1], index: 2, kind: input, shape index: {}]
  %s3 = inlined_call_operand.vmem [shape: f32[16,32], index: 3, kind: input, shape index: {}]
  %s4 = inlined_call_operand.hbm [shape: f32[16,96], index: 4, kind: input, shape index: {}]
  %s5 = inlined_call_operand.vmem [shape: f32[40,96], index: 5, kind: input, shape index: {}]
  %s6 = inlined_call_operand.vmem [shape: f32[2,32,96], index: 6, kind: input, shape index: {}]
  %s7 = inlined_call_operand.hbm [shape: f32[9,96], index: 7, kind: input, shape index: {}]
  %s8 = inlined_call_operand.vmem [shape: f32[32,16], index: 8, kind: input, shape index: {}]
  %s9 = inlined_call_operand.vmem [shape: f32[8,2,16], index: 9, kind: output, shape index: {}]
  %s10 = sld [smem:[#allocation0]]
  $region54: #{decoder_forward_teacher_forcing.1} parent=0
    _
  %s12 = ssub.s32 1, %s10
  %s13 = scalar_select 0, %s12, %s10
  $region1: #{decoder_forward_teacher_forcing.1} parent=0
    #allocation2 [shape = 'u8[8192]{0}', space=vmem, size = 0x2000, scoped, tag = 'input window, operand 4, single buffered']
    #allocation3 [shape = 's32[1]{0}', space=sflag, size = 0x4, scoped, tag = 'scoped memory for decoder_forward_teacher_forcing.1']
    #allocation4 [shape = 'u8[8192]{0}', space=vmem, size = 0x2000, scoped, tag = 'input window, operand 7, single buffered']
    #allocation5 [shape = 's32[1]{0}', space=sflag, size = 0x4, scoped, tag = 'scoped memory for decoder_forward_teacher_forcing.1']
    %14 = vsyncpa [#allocation3], 0
    %15 = vsyncpa [#allocation5], 0
    // Predicated region
    $region2: #{decoder_forward_teacher_forcing.1} parent=1 // pred_check
      _
    $region3: #{decoder_forward_teacher_forcing.1} parent=1 // pred_check_branch
      %17 = sbr.rel (0) target = $region5
    $region4: #{decoder_forward_teacher_forcing.1} parent=1 // pred_region
      _
    $region5: #{decoder_forward_teacher_forcing.1} parent=1 // pred_fallthru
      _
    // Predicated region
    $region6: #{decoder_forward_teacher_forcing.1} parent=1 // pred_check
      _
    $region7: #{decoder_forward_teacher_forcing.1} parent=1 // pred_check_branch
      %19 = sbr.rel (0) target = $region9
    $region8: #{decoder_forward_teacher_forcing.1} parent=1 // pred_region
      _
    $region9: #{decoder_forward_teacher_forcing.1} parent=1 // pred_fallthru
      _
    // Predicated region
    $region10: #{decoder_forward_teacher_forcing.1} parent=1 // pred_check
      _
    $region11: #{decoder_forward_teacher_forcing.1} parent=1 // pred_check_branch
      %21 = sbr.rel (0) target = $region13
    $region12: #{decoder_forward_teacher_forcing.1} parent=1 // pred_region
      _
    $region13: #{decoder_forward_teacher_forcing.1} parent=1 // pred_fallthru
      _
    // Predicated region
    $region14: #{decoder_forward_teacher_forcing.1} parent=1 // pred_check
      _
    $region15: #{decoder_forward_teacher_forcing.1} parent=1 // pred_check_branch
      %23 = sbr.rel (0) target = $region17
    $region16: #{decoder_forward_teacher_forcing.1} parent=1 // pred_region
      _
    $region17: #{decoder_forward_teacher_forcing.1} parent=1 // pred_fallthru
      _
    // Predicated region
    $region18: #{decoder_forward_teacher_forcing.1} parent=1 // pred_check
      _
    $region19: #{decoder_forward_teacher_forcing.1} parent=1 // pred_check_branch
      %25 = sbr.rel (0) target = $region21
    $region20: #{decoder_forward_teacher_forcing.1} parent=1 // pred_region
      %s27 = ssub.s32 256, 256
      %28 = vsyncadd [#allocation3], %s27
      %s29 = sshll.u32 [#allocation2], 4
      %s30 = int_to_ptr.vmem [resolvable:$true] %s29
      %35 = dma.hbm_to_vmem [thread:$0]  %s4, 256, %s30, [#allocation3], 128, 128, 8
    $region21: #{decoder_forward_teacher_forcing.1} parent=1 // pred_fallthru
      _
    // Predicated region
    $region22: #{decoder_forward_teacher_forcing.1} parent=1 // pred_check
      _
    $region23: #{decoder_forward_teacher_forcing.1} parent=1 // pred_check_branch
      %37 = sbr.rel (0) target = $region25
    $region24: #{decoder_forward_teacher_forcing.1} parent=1 // pred_region
      _
    $region25: #{decoder_forward_teacher_forcing.1} parent=1 // pred_fallthru
      _
    // Predicated region
    $region26: #{decoder_forward_teacher_forcing.1} parent=1 // pred_check
      _
    $region27: #{decoder_forward_teacher_forcing.1} parent=1 // pred_check_branch
      %39 = sbr.rel (0) target = $region29
    $region28: #{decoder_forward_teacher_forcing.1} parent=1 // pred_region
      _
    $region29: #{decoder_forward_teacher_forcing.1} parent=1 // pred_fallthru
      _
    // Predicated region
    $region30: #{decoder_forward_teacher_forcing.1} parent=1 // pred_check
      _
    $region31: #{decoder_forward_teacher_forcing.1} parent=1 // pred_check_branch
      %41 = sbr.rel (0) target = $region33
    $region32: #{decoder_forward_teacher_forcing.1} parent=1 // pred_region
      %s43 = ssub.s32 256, 256
      %44 = vsyncadd [#allocation5], %s43
      %s45 = sshll.u32 [#allocation4], 4
      %s46 = int_to_ptr.vmem [resolvable:$true] %s45
      %51 = dma.hbm_to_vmem [thread:$0]  %s7, 256, %s46, [#allocation5], 128, 128, 8
    $region33: #{decoder_forward_teacher_forcing.1} parent=1 // pred_fallthru
      _
    // Predicated region
    $region34: #{decoder_forward_teacher_forcing.1} parent=1 // pred_check
      _
    $region35: #{decoder_forward_teacher_forcing.1} parent=1 // pred_check_branch
      %53 = sbr.rel (0) target = $region37
    $region36: #{decoder_forward_teacher_forcing.1} parent=1 // pred_region
      _
    $region37: #{decoder_forward_teacher_forcing.1} parent=1 // pred_fallthru
      _
    // Predicated region
    $region38: #{decoder_forward_teacher_forcing.1} parent=1 // pred_check
      _
    $region39: #{decoder_forward_teacher_forcing.1} parent=1 // pred_check_branch
      %55 = sbr.rel (0) target = $region41
    $region40: #{decoder_forward_teacher_forcing.1} parent=1 // pred_region
      %56 = dma.done [#allocation3], 256
    $region41: #{decoder_forward_teacher_forcing.1} parent=1 // pred_fallthru
      _
    // Predicated region
    $region42: #{decoder_forward_teacher_forcing.1} parent=1 // pred_check
      _
    $region43: #{decoder_forward_teacher_forcing.1} parent=1 // pred_check_branch
      %58 = sbr.rel (0) target = $region45
    $region44: #{decoder_forward_teacher_forcing.1} parent=1 // pred_region
      %59 = dma.done [#allocation5], 256
    $region45: #{decoder_forward_teacher_forcing.1} parent=1 // pred_fallthru
      _
    %v60 = vld [vmem:[#allocation4 + $0x4] sm:$0xf]
    %v61 = vld [vmem:[%s1] sm:$0xf]
    %v62 = vld [vmem:[%s3] sm:$0xff]
    %v63 = vld [vmem:[%s3 + $0x8] sm:$0xff]
    %vm64 = vcmask 130048
    %v66 = vsel %vm64, %v61, 0
    %68 = vmatprep.subr.mxu0 0.0
    %69 = vmatpush1.msra.mxu0 %v62
    %70 = vmatprep.subr.mxu0 0.0
    %71 = vmatpush1.msra.mxu0 %v63
    %72 = vmatprep.subr.mxu0 0.0
    %73 = vmatpush1.msra.mxu0 0.0
    %74 = vmatprep.subr.mxu0 0.0
    %75 = vmatpush1.msra.mxu0 0.0
    %76 = vmatprep.subr.mxu0 0.0
    %77 = vmatpush1.msra.mxu0 0.0
    %78 = vmatprep.subr.mxu0 0.0
    %79 = vmatpush1.msra.mxu0 0.0
    %80 = vmatprep.subr.mxu0 0.0
    %81 = vmatpush1.msra.mxu0 0.0
    %82 = vmatprep.subr.mxu0 0.0
    %83 = vmatpush1.msra.mxu0 0.0
    %84 = vmatprep.subr.mxu0 0.0
    %85 = vmatpush1.msra.mxu0 0.0
    %86 = vmatprep.subr.mxu0 0.0
    %87 = vmatpush1.msra.mxu0 0.0
    %88 = vmatprep.subr.mxu0 0.0
    %89 = vmatpush1.msra.mxu0 0.0
    %90 = vmatprep.subr.mxu0 0.0
    %91 = vmatpush1.msra.mxu0 0.0
    %92 = vmatprep.subr.mxu0 0.0
    %93 = vmatpush1.msra.mxu0 0.0
    %94 = vmatprep.subr.mxu0 0.0
    %95 = vmatpush1.msra.mxu0 0.0
    %96 = vmatprep.subr.mxu0 0.0
    %97 = vmatpush1.msra.mxu0 0.0
    %98 = vmatprep.subr.mxu0 0.0
    %99 = vmatpush1.msra.mxu0 0.0
    %100 = vmatprep.subr.mxu0 0.0
    %101 = vmatpush1.msra.mxu0 0.0
    %102 = vmatprep.subr.mxu0 0.0
    %103 = vmatpush1.msra.mxu0 0.0
    %104 = vmatprep.subr.mxu0 0.0
    %105 = vmatpush1.msra.mxu0 0.0
    %106 = vmatprep.subr.mxu0 0.0
    %107 = vmatpush1.msra.mxu0 0.0
    %108 = vmatprep.subr.mxu0 0.0
    %109 = vmatpush1.msra.mxu0 0.0
    %110 = vmatprep.subr.mxu0 0.0
    %111 = vmatpush1.msra.mxu0 0.0
    %112 = vmatprep.subr.mxu0 0.0
    %113 = vmatpush1.msra.mxu0 0.0
    %114 = vmatprep.subr.mxu0 0.0
    %115 = vmatpush1.msra.mxu0 0.0
    %116 = vmatprep.subr.mxu0 0.0
    %117 = vmatpush1.msra.mxu0 0.0
    %118 = vmatprep.subr.mxu0 0.0
    %119 = vmatpush1.msra.mxu0 0.0
    %120 = vmatprep.subr.mxu0 0.0
    %121 = vmatpush1.msra.mxu0 0.0
    %122 = vmatprep.subr.mxu0 0.0
    %123 = vmatpush1.msra.mxu0 0.0
    %124 = vmatprep.subr.mxu0 0.0
    %125 = vmatpush1.msra.mxu0 0.0
    %126 = vmatprep.subr.mxu0 0.0
    %127 = vmatpush1.msra.mxu0 0.0
    %128 = vmatprep.subr.mxu0 0.0
    %129 = vmatpush1.msra.mxu0 0.0
    %130 = vmatprep.subr.mxu0 0.0
    %131 = vmatpush1.msra.mxu0 0.0
    %132 = vmatprep.mubr.f32.mxu0 0.0
    %133 = vmatmul.mubr.f32.gmra.mrb[0].mxu0 %v66
    %v134 = vpop.f32.mrb[0].mxu0
    %v135 = vadd.f32 %v60, %v134
    %v136 = vpop.f32.mrb[0].mxu0
    %137 = vdwg.mxu0
    %v138 = vtanh.pop %v135
    %v139 = vld [vmem:[%s0] sm:$0x3]
    %v140 = vld [vmem:[%s5] sm:$0xff]
    %v141 = vld [vmem:[#allocation4] sm:$0x1]
    %v142 = vlaneseq
    %v143 = vshrl.u32 %v142, 7
    %v144 = vsub.s32 0, %v143
    %v145 = vrot.slane %v141, %v144
    %vm146 = vcmask 64512
    %v148 = vsel %vm146, %v139, 0
    %150 = vmatprep.subr.mxu0 0.0
    %151 = vmatpush1.msra.mxu0 %v140
    %152 = vmatprep.subr.mxu0 0.0
    %153 = vmatpush1.msra.mxu0 0.0
    %154 = vmatprep.subr.mxu0 0.0
    %155 = vmatpush1.msra.mxu0 0.0
    %156 = vmatprep.subr.mxu0 0.0
    %157 = vmatpush1.msra.mxu0 0.0
    %158 = vmatprep.subr.mxu0 0.0
    %159 = vmatpush1.msra.mxu0 0.0
    %160 = vmatprep.subr.mxu0 0.0
    %161 = vmatpush1.msra.mxu0 0.0
    %162 = vmatprep.subr.mxu0 0.0
    %163 = vmatpush1.msra.mxu0 0.0
    %164 = vmatprep.subr.mxu0 0.0
    %165 = vmatpush1.msra.mxu0 0.0
    %166 = vmatprep.subr.mxu0 0.0
    %167 = vmatpush1.msra.mxu0 0.0
    %168 = vmatprep.subr.mxu0 0.0
    %169 = vmatpush1.msra.mxu0 0.0
    %170 = vmatprep.subr.mxu0 0.0
    %171 = vmatpush1.msra.mxu0 0.0
    %172 = vmatprep.subr.mxu0 0.0
    %173 = vmatpush1.msra.mxu0 0.0
    %174 = vmatprep.subr.mxu0 0.0
    %175 = vmatpush1.msra.mxu0 0.0
    %176 = vmatprep.subr.mxu0 0.0
    %177 = vmatpush1.msra.mxu0 0.0
    %178 = vmatprep.subr.mxu0 0.0
    %179 = vmatpush1.msra.mxu0 0.0
    %180 = vmatprep.subr.mxu0 0.0
    %181 = vmatpush1.msra.mxu0 0.0
    %182 = vmatprep.subr.mxu0 0.0
    %183 = vmatpush1.msra.mxu0 0.0
    %184 = vmatprep.subr.mxu0 0.0
    %185 = vmatpush1.msra.mxu0 0.0
    %186 = vmatprep.subr.mxu0 0.0
    %187 = vmatpush1.msra.mxu0 0.0
    %188 = vmatprep.subr.mxu0 0.0
    %189 = vmatpush1.msra.mxu0 0.0
    %190 = vmatprep.subr.mxu0 0.0
    %191 = vmatpush1.msra.mxu0 0.0
    %192 = vmatprep.subr.mxu0 0.0
    %193 = vmatpush1.msra.mxu0 0.0
    %194 = vmatprep.subr.mxu0 0.0
    %195 = vmatpush1.msra.mxu0 0.0
    %196 = vmatprep.subr.mxu0 0.0
    %197 = vmatpush1.msra.mxu0 0.0
    %198 = vmatprep.subr.mxu0 0.0
    %199 = vmatpush1.msra.mxu0 0.0
    %200 = vmatprep.subr.mxu0 0.0
    %201 = vmatpush1.msra.mxu0 0.0
    %202 = vmatprep.subr.mxu0 0.0
    %203 = vmatpush1.msra.mxu0 0.0
    %204 = vmatprep.subr.mxu0 0.0
    %205 = vmatpush1.msra.mxu0 0.0
    %206 = vmatprep.subr.mxu0 0.0
    %207 = vmatpush1.msra.mxu0 0.0
    %208 = vmatprep.subr.mxu0 0.0
    %209 = vmatpush1.msra.mxu0 0.0
    %210 = vmatprep.subr.mxu0 0.0
    %211 = vmatpush1.msra.mxu0 0.0
    %212 = vmatprep.subr.mxu0 0.0
    %213 = vmatpush1.msra.mxu0 0.0
    %214 = vmatprep.mubr.f32.mxu0 0.0
    %215 = vmatmul.mubr.f32.gmra.mrb[0].mxu0 %v148
    %v216 = vpop.f32.mrb[0].mxu0
    %v217 = vadd.f32 %v145, %v216
    %v218 = vpop.f32.mrb[0].mxu0
    %219 = vdwg.mxu0
    %v220 = vld [vmem:[#allocation2] sm:$0xff]
    %v221 = vld [vmem:[#allocation2 + $0x8] sm:$0xff]
    %v222 = vlaneseq
    %v223 = vand.u32 %v222, 127
    %v224 = vld [vmem:[%s2] sm:$0x3]
    %225 = vset.pattern.permute.xlu0 0
    %226 = vperm.xlu0 %225, %v224
    %v227 = vpop.permute.xlu0 %226
    %vm228 = vcmp.eq.s32.totalorder %v223, %v227
    %v229 = vsel %vm228, 1, 0
    %v230 = vcvt.s32.f32 %v229
    %v232 = vsel %vm64, %v230, 0
    %234 = vmatprep.subr.mxu0 0.0
    %235 = vmatpush1.msra.mxu0 %v220
    %236 = vmatprep.subr.mxu0 0.0
    %237 = vmatpush1.msra.mxu0 %v221
    %238 = vmatprep.subr.mxu0 0.0
    %239 = vmatpush1.msra.mxu0 0.0
    %240 = vmatprep.subr.mxu0 0.0
    %241 = vmatpush1.msra.mxu0 0.0
    %242 = vmatprep.subr.mxu0 0.0
    %243 = vmatpush1.msra.mxu0 0.0
    %244 = vmatprep.subr.mxu0 0.0
    %245 = vmatpush1.msra.mxu0 0.0
    %246 = vmatprep.subr.mxu0 0.0
    %247 = vmatpush1.msra.mxu0 0.0
    %248 = vmatprep.subr.mxu0 0.0
    %249 = vmatpush1.msra.mxu0 0.0
    %250 = vmatprep.subr.mxu0 0.0
    %251 = vmatpush1.msra.mxu0 0.0
    %252 = vmatprep.subr.mxu0 0.0
    %253 = vmatpush1.msra.mxu0 0.0
    %254 = vmatprep.subr.mxu0 0.0
    %255 = vmatpush1.msra.mxu0 0.0
    %256 = vmatprep.subr.mxu0 0.0
    %257 = vmatpush1.msra.mxu0 0.0
    %258 = vmatprep.subr.mxu0 0.0
    %259 = vmatpush1.msra.mxu0 0.0
    %260 = vmatprep.subr.mxu0 0.0
    %261 = vmatpush1.msra.mxu0 0.0
    %262 = vmatprep.subr.mxu0 0.0
    %263 = vmatpush1.msra.mxu0 0.0
    %264 = vmatprep.subr.mxu0 0.0
    %265 = vmatpush1.msra.mxu0 0.0
    %266 = vmatprep.subr.mxu0 0.0
    %267 = vmatpush1.msra.mxu0 0.0
    %268 = vmatprep.subr.mxu0 0.0
    %269 = vmatpush1.msra.mxu0 0.0
    %270 = vmatprep.subr.mxu0 0.0
    %271 = vmatpush1.msra.mxu0 0.0
    %272 = vmatprep.subr.mxu0 0.0
    %273 = vmatpush1.msra.mxu0 0.0
    %274 = vmatprep.subr.mxu0 0.0
    %275 = vmatpush1.msra.mxu0 0.0
    %276 = vmatprep.subr.mxu0 0.0
    %277 = vmatpush1.msra.mxu0 0.0
    %278 = vmatprep.subr.mxu0 0.0
    %279 = vmatpush1.msra.mxu0 0.0
    %280 = vmatprep.subr.mxu0 0.0
    %281 = vmatpush1.msra.mxu0 0.0
    %282 = vmatprep.subr.mxu0 0.0
    %283 = vmatpush1.msra.mxu0 0.0
    %284 = vmatprep.subr.mxu0 0.0
    %285 = vmatpush1.msra.mxu0 0.0
    %286 = vmatprep.subr.mxu0 0.0
    %287 = vmatpush1.msra.mxu0 0.0
    %288 = vmatprep.subr.mxu0 0.0
    %289 = vmatpush1.msra.mxu0 0.0
    %290 = vmatprep.subr.mxu0 0.0
    %291 = vmatpush1.msra.mxu0 0.0
    %292 = vmatprep.subr.mxu0 0.0
    %293 = vmatpush1.msra.mxu0 0.0
    %294 = vmatprep.subr.mxu0 0.0
    %295 = vmatpush1.msra.mxu0 0.0
    %296 = vmatprep.subr.mxu0 0.0
    %297 = vmatpush1.msra.mxu0 0.0
    %298 = vmatprep.mubr.f32.mxu0 0.0
    %299 = vmatmul.mubr.f32.gmra.mrb[0].mxu0 %v232
    %v300 = vpop.f32.mrb[0].mxu0
    %v301 = vadd.f32 %v217, %v300
    %v302 = vpop.f32.mrb[0].mxu0
    %303 = vdwg.mxu0
    %s304 = scalar_lea.vmem %s2, 2
    %v305 = vld [vmem:[%s304] sm:$0x3]
    %306 = vset.pattern.permute.xlu0 0
    %307 = vperm.xlu0 %306, %v305
    %v308 = vpop.permute.xlu0 %307
    %vm309 = vcmp.eq.s32.totalorder %v223, %v308
    %v310 = vsel %vm309, 1, 0
    %v311 = vcvt.s32.f32 %v310
    %v313 = vsel %vm64, %v311, 0
    %315 = vmatprep.subr.mxu0 0.0
    %316 = vmatpush1.msra.mxu0 %v220
    %317 = vmatprep.subr.mxu0 0.0
    %318 = vmatpush1.msra.mxu0 %v221
    %319 = vmatprep.subr.mxu0 0.0
    %320 = vmatpush1.msra.mxu0 0.0
    %321 = vmatprep.subr.mxu0 0.0
    %322 = vmatpush1.msra.mxu0 0.0
    %323 = vmatprep.subr.mxu0 0.0
    %324 = vmatpush1.msra.mxu0 0.0
    %325 = vmatprep.subr.mxu0 0.0
    %326 = vmatpush1.msra.mxu0 0.0
    %327 = vmatprep.subr.mxu0 0.0
    %328 = vmatpush1.msra.mxu0 0.0
    %329 = vmatprep.subr.mxu0 0.0
    %330 = vmatpush1.msra.mxu0 0.0
    %331 = vmatprep.subr.mxu0 0.0
    %332 = vmatpush1.msra.mxu0 0.0
    %333 = vmatprep.subr.mxu0 0.0
    %334 = vmatpush1.msra.mxu0 0.0
    %335 = vmatprep.subr.mxu0 0.0
    %336 = vmatpush1.msra.mxu0 0.0
    %337 = vmatprep.subr.mxu0 0.0
    %338 = vmatpush1.msra.mxu0 0.0
    %339 = vmatprep.subr.mxu0 0.0
    %340 = vmatpush1.msra.mxu0 0.0
    %341 = vmatprep.subr.mxu0 0.0
    %342 = vmatpush1.msra.mxu0 0.0
    %343 = vmatprep.subr.mxu0 0.0
    %344 = vmatpush1.msra.mxu0 0.0
    %345 = vmatprep.subr.mxu0 0.0
    %346 = vmatpush1.msra.mxu0 0.0
    %347 = vmatprep.subr.mxu0 0.0
    %348 = vmatpush1.msra.mxu0 0.0
    %349 = vmatprep.subr.mxu0 0.0
    %350 = vmatpush1.msra.mxu0 0.0
    %351 = vmatprep.subr.mxu0 0.0
    %352 = vmatpush1.msra.mxu0 0.0
    %353 = vmatprep.subr.mxu0 0.0
    %354 = vmatpush1.msra.mxu0 0.0
    %355 = vmatprep.subr.mxu0 0.0
    %356 = vmatpush1.msra.mxu0 0.0
    %357 = vmatprep.subr.mxu0 0.0
    %358 = vmatpush1.msra.mxu0 0.0
    %359 = vmatprep.subr.mxu0 0.0
    %360 = vmatpush1.msra.mxu0 0.0
    %361 = vmatprep.subr.mxu0 0.0
    %362 = vmatpush1.msra.mxu0 0.0
    %363 = vmatprep.subr.mxu0 0.0
    %364 = vmatpush1.msra.mxu0 0.0
    %365 = vmatprep.subr.mxu0 0.0
    %366 = vmatpush1.msra.mxu0 0.0
    %367 = vmatprep.subr.mxu0 0.0
    %368 = vmatpush1.msra.mxu0 0.0
    %369 = vmatprep.subr.mxu0 0.0
    %370 = vmatpush1.msra.mxu0 0.0
    %371 = vmatprep.subr.mxu0 0.0
    %372 = vmatpush1.msra.mxu0 0.0
    %373 = vmatprep.subr.mxu0 0.0
    %374 = vmatpush1.msra.mxu0 0.0
    %375 = vmatprep.subr.mxu0 0.0
    %376 = vmatpush1.msra.mxu0 0.0
    %377 = vmatprep.subr.mxu0 0.0
    %378 = vmatpush1.msra.mxu0 0.0
    %379 = vmatprep.mubr.f32.mxu0 0.0
    %380 = vmatmul.mubr.f32.gmra.mrb[0].mxu0 %v313
    %v381 = vpop.f32.mrb[0].mxu0
    %v382 = vadd.f32 %v217, %v381
    %v383 = vpop.f32.mrb[0].mxu0
    %384 = vdwg.mxu0
    %s385 = scalar_lea.vmem %s2, 4
    %v386 = vld [vmem:[%s385] sm:$0x3]
    %387 = vset.pattern.permute.xlu0 0
    %388 = vperm.xlu0 %387, %v386
    %v389 = vpop.permute.xlu0 %388
    %vm390 = vcmp.eq.s32.totalorder %v223, %v389
    %v391 = vsel %vm390, 1, 0
    %v392 = vcvt.s32.f32 %v391
    %v394 = vsel %vm64, %v392, 0
    %396 = vmatprep.subr.mxu0 0.0
    %397 = vmatpush1.msra.mxu0 %v220
    %398 = vmatprep.subr.mxu0 0.0
    %399 = vmatpush1.msra.mxu0 %v221
    %400 = vmatprep.subr.mxu0 0.0
    %401 = vmatpush1.msra.mxu0 0.0
    %402 = vmatprep.subr.mxu0 0.0
    %403 = vmatpush1.msra.mxu0 0.0
    %404 = vmatprep.subr.mxu0 0.0
    %405 = vmatpush1.msra.mxu0 0.0
    %406 = vmatprep.subr.mxu0 0.0
    %407 = vmatpush1.msra.mxu0 0.0
    %408 = vmatprep.subr.mxu0 0.0
    %409 = vmatpush1.msra.mxu0 0.0
    %410 = vmatprep.subr.mxu0 0.0
    %411 = vmatpush1.msra.mxu0 0.0
    %412 = vmatprep.subr.mxu0 0.0
    %413 = vmatpush1.msra.mxu0 0.0
    %414 = vmatprep.subr.mxu0 0.0
    %415 = vmatpush1.msra.mxu0 0.0
    %416 = vmatprep.subr.mxu0 0.0
    %417 = vmatpush1.msra.mxu0 0.0
    %418 = vmatprep.subr.mxu0 0.0
    %419 = vmatpush1.msra.mxu0 0.0
    %420 = vmatprep.subr.mxu0 0.0
    %421 = vmatpush1.msra.mxu0 0.0
    %422 = vmatprep.subr.mxu0 0.0
    %423 = vmatpush1.msra.mxu0 0.0
    %424 = vmatprep.subr.mxu0 0.0
    %425 = vmatpush1.msra.mxu0 0.0
    %426 = vmatprep.subr.mxu0 0.0
    %427 = vmatpush1.msra.mxu0 0.0
    %428 = vmatprep.subr.mxu0 0.0
    %429 = vmatpush1.msra.mxu0 0.0
    %430 = vmatprep.subr.mxu0 0.0
    %431 = vmatpush1.msra.mxu0 0.0
    %432 = vmatprep.subr.mxu0 0.0
    %433 = vmatpush1.msra.mxu0 0.0
    %434 = vmatprep.subr.mxu0 0.0
    %435 = vmatpush1.msra.mxu0 0.0
    %436 = vmatprep.subr.mxu0 0.0
    %437 = vmatpush1.msra.mxu0 0.0
    %438 = vmatprep.subr.mxu0 0.0
    %439 = vmatpush1.msra.mxu0 0.0
    %440 = vmatprep.subr.mxu0 0.0
    %441 = vmatpush1.msra.mxu0 0.0
    %442 = vmatprep.subr.mxu0 0.0
    %443 = vmatpush1.msra.mxu0 0.0
    %444 = vmatprep.subr.mxu0 0.0
    %445 = vmatpush1.msra.mxu0 0.0
    %446 = vmatprep.subr.mxu0 0.0
    %447 = vmatpush1.msra.mxu0 0.0
    %448 = vmatprep.subr.mxu0 0.0
    %449 = vmatpush1.msra.mxu0 0.0
    %450 = vmatprep.subr.mxu0 0.0
    %451 = vmatpush1.msra.mxu0 0.0
    %452 = vmatprep.subr.mxu0 0.0
    %453 = vmatpush1.msra.mxu0 0.0
    %454 = vmatprep.subr.mxu0 0.0
    %455 = vmatpush1.msra.mxu0 0.0
    %456 = vmatprep.subr.mxu0 0.0
    %457 = vmatpush1.msra.mxu0 0.0
    %458 = vmatprep.subr.mxu0 0.0
    %459 = vmatpush1.msra.mxu0 0.0
    %460 = vmatprep.mubr.f32.mxu0 0.0
    %461 = vmatmul.mubr.f32.gmra.mrb[0].mxu0 %v394
    %v462 = vpop.f32.mrb[0].mxu0
    %v463 = vadd.f32 %v217, %v462
    %v464 = vpop.f32.mrb[0].mxu0
    %465 = vdwg.mxu0
    %s466 = scalar_lea.vmem %s2, 6
    %v467 = vld [vmem:[%s466] sm:$0x3]
    %468 = vset.pattern.permute.xlu0 0
    %469 = vperm.xlu0 %468, %v467
    %v470 = vpop.permute.xlu0 %469
    %vm471 = vcmp.eq.s32.totalorder %v223, %v470
    %v472 = vsel %vm471, 1, 0
    %v473 = vcvt.s32.f32 %v472
    %v475 = vsel %vm64, %v473, 0
    %477 = vmatprep.subr.mxu0 0.0
    %478 = vmatpush1.msra.mxu0 %v220
    %479 = vmatprep.subr.mxu0 0.0
    %480 = vmatpush1.msra.mxu0 %v221
    %481 = vmatprep.subr.mxu0 0.0
    %482 = vmatpush1.msra.mxu0 0.0
    %483 = vmatprep.subr.mxu0 0.0
    %484 = vmatpush1.msra.mxu0 0.0
    %485 = vmatprep.subr.mxu0 0.0
    %486 = vmatpush1.msra.mxu0 0.0
    %487 = vmatprep.subr.mxu0 0.0
    %488 = vmatpush1.msra.mxu0 0.0
    %489 = vmatprep.subr.mxu0 0.0
    %490 = vmatpush1.msra.mxu0 0.0
    %491 = vmatprep.subr.mxu0 0.0
    %492 = vmatpush1.msra.mxu0 0.0
    %493 = vmatprep.subr.mxu0 0.0
    %494 = vmatpush1.msra.mxu0 0.0
    %495 = vmatprep.subr.mxu0 0.0
    %496 = vmatpush1.msra.mxu0 0.0
    %497 = vmatprep.subr.mxu0 0.0
    %498 = vmatpush1.msra.mxu0 0.0
    %499 = vmatprep.subr.mxu0 0.0
    %500 = vmatpush1.msra.mxu0 0.0
    %501 = vmatprep.subr.mxu0 0.0
    %502 = vmatpush1.msra.mxu0 0.0
    %503 = vmatprep.subr.mxu0 0.0
    %504 = vmatpush1.msra.mxu0 0.0
    %505 = vmatprep.subr.mxu0 0.0
    %506 = vmatpush1.msra.mxu0 0.0
    %507 = vmatprep.subr.mxu0 0.0
    %508 = vmatpush1.msra.mxu0 0.0
    %509 = vmatprep.subr.mxu0 0.0
    %510 = vmatpush1.msra.mxu0 0.0
    %511 = vmatprep.subr.mxu0 0.0
    %512 = vmatpush1.msra.mxu0 0.0
    %513 = vmatprep.subr.mxu0 0.0
    %514 = vmatpush1.msra.mxu0 0.0
    %515 = vmatprep.subr.mxu0 0.0
    %516 = vmatpush1.msra.mxu0 0.0
    %517 = vmatprep.subr.mxu0 0.0
    %518 = vmatpush1.msra.mxu0 0.0
    %519 = vmatprep.subr.mxu0 0.0
    %520 = vmatpush1.msra.mxu0 0.0
    %521 = vmatprep.subr.mxu0 0.0
    %522 = vmatpush1.msra.mxu0 0.0
    %523 = vmatprep.subr.mxu0 0.0
    %524 = vmatpush1.msra.mxu0 0.0
    %525 = vmatprep.subr.mxu0 0.0
    %526 = vmatpush1.msra.mxu0 0.0
    %527 = vmatprep.subr.mxu0 0.0
    %528 = vmatpush1.msra.mxu0 0.0
    %529 = vmatprep.subr.mxu0 0.0
    %530 = vmatpush1.msra.mxu0 0.0
    %531 = vmatprep.subr.mxu0 0.0
    %532 = vmatpush1.msra.mxu0 0.0
    %533 = vmatprep.subr.mxu0 0.0
    %534 = vmatpush1.msra.mxu0 0.0
    %535 = vmatprep.subr.mxu0 0.0
    %536 = vmatpush1.msra.mxu0 0.0
    %537 = vmatprep.subr.mxu0 0.0
    %538 = vmatpush1.msra.mxu0 0.0
    %539 = vmatprep.subr.mxu0 0.0
    %540 = vmatpush1.msra.mxu0 0.0
    %541 = vmatprep.mubr.f32.mxu0 0.0
    %542 = vmatmul.mubr.f32.gmra.mrb[0].mxu0 %v475
    %v543 = vpop.f32.mrb[0].mxu0
    %v544 = vadd.f32 %v217, %v543
    %v545 = vpop.f32.mrb[0].mxu0
    %546 = vdwg.mxu0
    %s547 = scalar_lea.vmem %s2, 8
    %v548 = vld [vmem:[%s547] sm:$0x3]
    %549 = vset.pattern.permute.xlu0 0
    %550 = vperm.xlu0 %549, %v548
    %v551 = vpop.permute.xlu0 %550
    %vm552 = vcmp.eq.s32.totalorder %v223, %v551
    %v553 = vsel %vm552, 1, 0
    %v554 = vcvt.s32.f32 %v553
    %v556 = vsel %vm64, %v554, 0
    %558 = vmatprep.subr.mxu0 0.0
    %559 = vmatpush1.msra.mxu0 %v220
    %560 = vmatprep.subr.mxu0 0.0
    %561 = vmatpush1.msra.mxu0 %v221
    %562 = vmatprep.subr.mxu0 0.0
    %563 = vmatpush1.msra.mxu0 0.0
    %564 = vmatprep.subr.mxu0 0.0
    %565 = vmatpush1.msra.mxu0 0.0
    %566 = vmatprep.subr.mxu0 0.0
    %567 = vmatpush1.msra.mxu0 0.0
    %568 = vmatprep.subr.mxu0 0.0
    %569 = vmatpush1.msra.mxu0 0.0
    %570 = vmatprep.subr.mxu0 0.0
    %571 = vmatpush1.msra.mxu0 0.0
    %572 = vmatprep.subr.mxu0 0.0
    %573 = vmatpush1.msra.mxu0 0.0
    %574 = vmatprep.subr.mxu0 0.0
    %575 = vmatpush1.msra.mxu0 0.0
    %576 = vmatprep.subr.mxu0 0.0
    %577 = vmatpush1.msra.mxu0 0.0
    %578 = vmatprep.subr.mxu0 0.0
    %579 = vmatpush1.msra.mxu0 0.0
    %580 = vmatprep.subr.mxu0 0.0
    %581 = vmatpush1.msra.mxu0 0.0
    %582 = vmatprep.subr.mxu0 0.0
    %583 = vmatpush1.msra.mxu0 0.0
    %584 = vmatprep.subr.mxu0 0.0
    %585 = vmatpush1.msra.mxu0 0.0
    %586 = vmatprep.subr.mxu0 0.0
    %587 = vmatpush1.msra.mxu0 0.0
    %588 = vmatprep.subr.mxu0 0.0
    %589 = vmatpush1.msra.mxu0 0.0
    %590 = vmatprep.subr.mxu0 0.0
    %591 = vmatpush1.msra.mxu0 0.0
    %592 = vmatprep.subr.mxu0 0.0
    %593 = vmatpush1.msra.mxu0 0.0
    %594 = vmatprep.subr.mxu0 0.0
    %595 = vmatpush1.msra.mxu0 0.0
    %596 = vmatprep.subr.mxu0 0.0
    %597 = vmatpush1.msra.mxu0 0.0
    %598 = vmatprep.subr.mxu0 0.0
    %599 = vmatpush1.msra.mxu0 0.0
    %600 = vmatprep.subr.mxu0 0.0
    %601 = vmatpush1.msra.mxu0 0.0
    %602 = vmatprep.subr.mxu0 0.0
    %603 = vmatpush1.msra.mxu0 0.0
    %604 = vmatprep.subr.mxu0 0.0
    %605 = vmatpush1.msra.mxu0 0.0
    %606 = vmatprep.subr.mxu0 0.0
    %607 = vmatpush1.msra.mxu0 0.0
    %608 = vmatprep.subr.mxu0 0.0
    %609 = vmatpush1.msra.mxu0 0.0
    %610 = vmatprep.subr.mxu0 0.0
    %611 = vmatpush1.msra.mxu0 0.0
    %612 = vmatprep.subr.mxu0 0.0
    %613 = vmatpush1.msra.mxu0 0.0
    %614 = vmatprep.subr.mxu0 0.0
    %615 = vmatpush1.msra.mxu0 0.0
    %616 = vmatprep.subr.mxu0 0.0
    %617 = vmatpush1.msra.mxu0 0.0
    %618 = vmatprep.subr.mxu0 0.0
    %619 = vmatpush1.msra.mxu0 0.0
    %620 = vmatprep.subr.mxu0 0.0
    %621 = vmatpush1.msra.mxu0 0.0
    %622 = vmatprep.mubr.f32.mxu0 0.0
    %623 = vmatmul.mubr.f32.gmra.mrb[0].mxu0 %v556
    %v624 = vpop.f32.mrb[0].mxu0
    %v625 = vadd.f32 %v217, %v624
    %v626 = vpop.f32.mrb[0].mxu0
    %627 = vdwg.mxu0
    %s628 = scalar_lea.vmem %s2, 10
    %v629 = vld [vmem:[%s628] sm:$0x3]
    %630 = vset.pattern.permute.xlu0 0
    %631 = vperm.xlu0 %630, %v629
    %v632 = vpop.permute.xlu0 %631
    %vm633 = vcmp.eq.s32.totalorder %v223, %v632
    %v634 = vsel %vm633, 1, 0
    %v635 = vcvt.s32.f32 %v634
    %v637 = vsel %vm64, %v635, 0
    %639 = vmatprep.subr.mxu0 0.0
    %640 = vmatpush1.msra.mxu0 %v220
    %641 = vmatprep.subr.mxu0 0.0
    %642 = vmatpush1.msra.mxu0 %v221
    %643 = vmatprep.subr.mxu0 0.0
    %644 = vmatpush1.msra.mxu0 0.0
    %645 = vmatprep.subr.mxu0 0.0
    %646 = vmatpush1.msra.mxu0 0.0
    %647 = vmatprep.subr.mxu0 0.0
    %648 = vmatpush1.msra.mxu0 0.0
    %649 = vmatprep.subr.mxu0 0.0
    %650 = vmatpush1.msra.mxu0 0.0
    %651 = vmatprep.subr.mxu0 0.0
    %652 = vmatpush1.msra.mxu0 0.0
    %653 = vmatprep.subr.mxu0 0.0
    %654 = vmatpush1.msra.mxu0 0.0
    %655 = vmatprep.subr.mxu0 0.0
    %656 = vmatpush1.msra.mxu0 0.0
    %657 = vmatprep.subr.mxu0 0.0
    %658 = vmatpush1.msra.mxu0 0.0
    %659 = vmatprep.subr.mxu0 0.0
    %660 = vmatpush1.msra.mxu0 0.0
    %661 = vmatprep.subr.mxu0 0.0
    %662 = vmatpush1.msra.mxu0 0.0
    %663 = vmatprep.subr.mxu0 0.0
    %664 = vmatpush1.msra.mxu0 0.0
    %665 = vmatprep.subr.mxu0 0.0
    %666 = vmatpush1.msra.mxu0 0.0
    %667 = vmatprep.subr.mxu0 0.0
    %668 = vmatpush1.msra.mxu0 0.0
    %669 = vmatprep.subr.mxu0 0.0
    %670 = vmatpush1.msra.mxu0 0.0
    %671 = vmatprep.subr.mxu0 0.0
    %672 = vmatpush1.msra.mxu0 0.0
    %673 = vmatprep.subr.mxu0 0.0
    %674 = vmatpush1.msra.mxu0 0.0
    %675 = vmatprep.subr.mxu0 0.0
    %676 = vmatpush1.msra.mxu0 0.0
    %677 = vmatprep.subr.mxu0 0.0
    %678 = vmatpush1.msra.mxu0 0.0
    %679 = vmatprep.subr.mxu0 0.0
    %680 = vmatpush1.msra.mxu0 0.0
    %681 = vmatprep.subr.mxu0 0.0
    %682 = vmatpush1.msra.mxu0 0.0
    %683 = vmatprep.subr.mxu0 0.0
    %684 = vmatpush1.msra.mxu0 0.0
    %685 = vmatprep.subr.mxu0 0.0
    %686 = vmatpush1.msra.mxu0 0.0
    %687 = vmatprep.subr.mxu0 0.0
    %688 = vmatpush1.msra.mxu0 0.0
    %689 = vmatprep.subr.mxu0 0.0
    %690 = vmatpush1.msra.mxu0 0.0
    %691 = vmatprep.subr.mxu0 0.0
    %692 = vmatpush1.msra.mxu0 0.0
    %693 = vmatprep.subr.mxu0 0.0
    %694 = vmatpush1.msra.mxu0 0.0
    %695 = vmatprep.subr.mxu0 0.0
    %696 = vmatpush1.msra.mxu0 0.0
    %697 = vmatprep.subr.mxu0 0.0
    %698 = vmatpush1.msra.mxu0 0.0
    %699 = vmatprep.subr.mxu0 0.0
    %700 = vmatpush1.msra.mxu0 0.0
    %701 = vmatprep.subr.mxu0 0.0
    %702 = vmatpush1.msra.mxu0 0.0
    %703 = vmatprep.mubr.f32.mxu0 0.0
    %704 = vmatmul.mubr.f32.gmra.mrb[0].mxu0 %v637
    %v705 = vpop.f32.mrb[0].mxu0
    %v706 = vadd.f32 %v217, %v705
    %v707 = vpop.f32.mrb[0].mxu0
    %708 = vdwg.mxu0
    %s709 = scalar_lea.vmem %s2, 12
    %v710 = vld [vmem:[%s709] sm:$0x3]
    %711 = vset.pattern.permute.xlu0 0
    %712 = vperm.xlu0 %711, %v710
    %v713 = vpop.permute.xlu0 %712
    %vm714 = vcmp.eq.s32.totalorder %v223, %v713
    %v715 = vsel %vm714, 1, 0
    %v716 = vcvt.s32.f32 %v715
    %v718 = vsel %vm64, %v716, 0
    %720 = vmatprep.subr.mxu0 0.0
    %721 = vmatpush1.msra.mxu0 %v220
    %722 = vmatprep.subr.mxu0 0.0
    %723 = vmatpush1.msra.mxu0 %v221
    %724 = vmatprep.subr.mxu0 0.0
    %725 = vmatpush1.msra.mxu0 0.0
    %726 = vmatprep.subr.mxu0 0.0
    %727 = vmatpush1.msra.mxu0 0.0
    %728 = vmatprep.subr.mxu0 0.0
    %729 = vmatpush1.msra.mxu0 0.0
    %730 = vmatprep.subr.mxu0 0.0
    %731 = vmatpush1.msra.mxu0 0.0
    %732 = vmatprep.subr.mxu0 0.0
    %733 = vmatpush1.msra.mxu0 0.0
    %734 = vmatprep.subr.mxu0 0.0
    %735 = vmatpush1.msra.mxu0 0.0
    %736 = vmatprep.subr.mxu0 0.0
    %737 = vmatpush1.msra.mxu0 0.0
    %738 = vmatprep.subr.mxu0 0.0
    %739 = vmatpush1.msra.mxu0 0.0
    %740 = vmatprep.subr.mxu0 0.0
    %741 = vmatpush1.msra.mxu0 0.0
    %742 = vmatprep.subr.mxu0 0.0
    %743 = vmatpush1.msra.mxu0 0.0
    %744 = vmatprep.subr.mxu0 0.0
    %745 = vmatpush1.msra.mxu0 0.0
    %746 = vmatprep.subr.mxu0 0.0
    %747 = vmatpush1.msra.mxu0 0.0
    %748 = vmatprep.subr.mxu0 0.0
    %749 = vmatpush1.msra.mxu0 0.0
    %750 = vmatprep.subr.mxu0 0.0
    %751 = vmatpush1.msra.mxu0 0.0
    %752 = vmatprep.subr.mxu0 0.0
    %753 = vmatpush1.msra.mxu0 0.0
    %754 = vmatprep.subr.mxu0 0.0
    %755 = vmatpush1.msra.mxu0 0.0
    %756 = vmatprep.subr.mxu0 0.0
    %757 = vmatpush1.msra.mxu0 0.0
    %758 = vmatprep.subr.mxu0 0.0
    %759 = vmatpush1.msra.mxu0 0.0
    %760 = vmatprep.subr.mxu0 0.0
    %761 = vmatpush1.msra.mxu0 0.0
    %762 = vmatprep.subr.mxu0 0.0
    %763 = vmatpush1.msra.mxu0 0.0
    %764 = vmatprep.subr.mxu0 0.0
    %765 = vmatpush1.msra.mxu0 0.0
    %766 = vmatprep.subr.mxu0 0.0
    %767 = vmatpush1.msra.mxu0 0.0
    %768 = vmatprep.subr.mxu0 0.0
    %769 = vmatpush1.msra.mxu0 0.0
    %770 = vmatprep.subr.mxu0 0.0
    %771 = vmatpush1.msra.mxu0 0.0
    %772 = vmatprep.subr.mxu0 0.0
    %773 = vmatpush1.msra.mxu0 0.0
    %774 = vmatprep.subr.mxu0 0.0
    %775 = vmatpush1.msra.mxu0 0.0
    %776 = vmatprep.subr.mxu0 0.0
    %777 = vmatpush1.msra.mxu0 0.0
    %778 = vmatprep.subr.mxu0 0.0
    %779 = vmatpush1.msra.mxu0 0.0
    %780 = vmatprep.subr.mxu0 0.0
    %781 = vmatpush1.msra.mxu0 0.0
    %782 = vmatprep.subr.mxu0 0.0
    %783 = vmatpush1.msra.mxu0 0.0
    %784 = vmatprep.mubr.f32.mxu0 0.0
    %785 = vmatmul.mubr.f32.gmra.mrb[0].mxu0 %v718
    %v786 = vpop.f32.mrb[0].mxu0
    %v787 = vadd.f32 %v217, %v786
    %v788 = vpop.f32.mrb[0].mxu0
    %789 = vdwg.mxu0
    %s790 = scalar_lea.vmem %s2, 14
    %v791 = vld [vmem:[%s790] sm:$0x3]
    %792 = vset.pattern.permute.xlu0 0
    %793 = vperm.xlu0 %792, %v791
    %v794 = vpop.permute.xlu0 %793
    %vm795 = vcmp.eq.s32.totalorder %v223, %v794
    %v796 = vsel %vm795, 1, 0
    %v797 = vcvt.s32.f32 %v796
    %v799 = vsel %vm64, %v797, 0
    %801 = vmatprep.subr.mxu0 0.0
    %802 = vmatpush1.msra.mxu0 %v220
    %803 = vmatprep.subr.mxu0 0.0
    %804 = vmatpush1.msra.mxu0 %v221
    %805 = vmatprep.subr.mxu0 0.0
    %806 = vmatpush1.msra.mxu0 0.0
    %807 = vmatprep.subr.mxu0 0.0
    %808 = vmatpush1.msra.mxu0 0.0
    %809 = vmatprep.subr.mxu0 0.0
    %810 = vmatpush1.msra.mxu0 0.0
    %811 = vmatprep.subr.mxu0 0.0
    %812 = vmatpush1.msra.mxu0 0.0
    %813 = vmatprep.subr.mxu0 0.0
    %814 = vmatpush1.msra.mxu0 0.0
    %815 = vmatprep.subr.mxu0 0.0
    %816 = vmatpush1.msra.mxu0 0.0
    %817 = vmatprep.subr.mxu0 0.0
    %818 = vmatpush1.msra.mxu0 0.0
    %819 = vmatprep.subr.mxu0 0.0
    %820 = vmatpush1.msra.mxu0 0.0
    %821 = vmatprep.subr.mxu0 0.0
    %822 = vmatpush1.msra.mxu0 0.0
    %823 = vmatprep.subr.mxu0 0.0
    %824 = vmatpush1.msra.mxu0 0.0
    %825 = vmatprep.subr.mxu0 0.0
    %826 = vmatpush1.msra.mxu0 0.0
    %827 = vmatprep.subr.mxu0 0.0
    %828 = vmatpush1.msra.mxu0 0.0
    %829 = vmatprep.subr.mxu0 0.0
    %830 = vmatpush1.msra.mxu0 0.0
    %831 = vmatprep.subr.mxu0 0.0
    %832 = vmatpush1.msra.mxu0 0.0
    %833 = vmatprep.subr.mxu0 0.0
    %834 = vmatpush1.msra.mxu0 0.0
    %835 = vmatprep.subr.mxu0 0.0
    %836 = vmatpush1.msra.mxu0 0.0
    %837 = vmatprep.subr.mxu0 0.0
    %838 = vmatpush1.msra.mxu0 0.0
    %839 = vmatprep.subr.mxu0 0.0
    %840 = vmatpush1.msra.mxu0 0.0
    %841 = vmatprep.subr.mxu0 0.0
    %842 = vmatpush1.msra.mxu0 0.0
    %843 = vmatprep.subr.mxu0 0.0
    %844 = vmatpush1.msra.mxu0 0.0
    %845 = vmatprep.subr.mxu0 0.0
    %846 = vmatpush1.msra.mxu0 0.0
    %847 = vmatprep.subr.mxu0 0.0
    %848 = vmatpush1.msra.mxu0 0.0
    %849 = vmatprep.subr.mxu0 0.0
    %850 = vmatpush1.msra.mxu0 0.0
    %851 = vmatprep.subr.mxu0 0.0
    %852 = vmatpush1.msra.mxu0 0.0
    %853 = vmatprep.subr.mxu0 0.0
    %854 = vmatpush1.msra.mxu0 0.0
    %855 = vmatprep.subr.mxu0 0.0
    %856 = vmatpush1.msra.mxu0 0.0
    %857 = vmatprep.subr.mxu0 0.0
    %858 = vmatpush1.msra.mxu0 0.0
    %859 = vmatprep.subr.mxu0 0.0
    %860 = vmatpush1.msra.mxu0 0.0
    %861 = vmatprep.subr.mxu0 0.0
    %862 = vmatpush1.msra.mxu0 0.0
    %863 = vmatprep.subr.mxu0 0.0
    %864 = vmatpush1.msra.mxu0 0.0
    %865 = vmatprep.mubr.f32.mxu0 0.0
    %866 = vmatmul.mubr.f32.gmra.mrb[0].mxu0 %v799
    %v867 = vpop.f32.mrb[0].mxu0
    %v868 = vadd.f32 %v217, %v867
    %v869 = vpop.f32.mrb[0].mxu0
    %870 = vdwg.mxu0
    %v871 = vld [vmem:[%s6] sm:$0xff]
    %v872 = vld [vmem:[%s6 + $0x8] sm:$0xff]
    %v873 = vld [vmem:[%s6 + $0x10] sm:$0xff]
    %v874 = vld [vmem:[%s6 + $0x18] sm:$0xff]
    %v875 = vld [vmem:[#allocation4 + $0x2] sm:$0x1]
    %vm876 = vcmask 261120
    %v878 = vsel %vm876, %v138, 0
    %880 = vmatprep.subr.mxu0 0.0
    %881 = vmatpush1.msra.mxu0 %v871
    %882 = vmatprep.subr.mxu0 0.0
    %883 = vmatpush1.msra.mxu0 %v872
    %884 = vmatprep.subr.mxu0 0.0
    %885 = vmatpush1.msra.mxu0 %v873
    %886 = vmatprep.subr.mxu0 0.0
    %887 = vmatpush1.msra.mxu0 %v874
    %888 = vmatprep.subr.mxu0 0.0
    %889 = vmatpush1.msra.mxu0 0.0
    %890 = vmatprep.subr.mxu0 0.0
    %891 = vmatpush1.msra.mxu0 0.0
    %892 = vmatprep.subr.mxu0 0.0
    %893 = vmatpush1.msra.mxu0 0.0
    %894 = vmatprep.subr.mxu0 0.0
    %895 = vmatpush1.msra.mxu0 0.0
    %896 = vmatprep.subr.mxu0 0.0
    %897 = vmatpush1.msra.mxu0 0.0
    %898 = vmatprep.subr.mxu0 0.0
    %899 = vmatpush1.msra.mxu0 0.0
    %900 = vmatprep.subr.mxu0 0.0
    %901 = vmatpush1.msra.mxu0 0.0
    %902 = vmatprep.subr.mxu0 0.0
    %903 = vmatpush1.msra.mxu0 0.0
    %904 = vmatprep.subr.mxu0 0.0
    %905 = vmatpush1.msra.mxu0 0.0
    %906 = vmatprep.subr.mxu0 0.0
    %907 = vmatpush1.msra.mxu0 0.0
    %908 = vmatprep.subr.mxu0 0.0
    %909 = vmatpush1.msra.mxu0 0.0
    %910 = vmatprep.subr.mxu0 0.0
    %911 = vmatpush1.msra.mxu0 0.0
    %912 = vmatprep.subr.mxu0 0.0
    %913 = vmatpush1.msra.mxu0 0.0
    %914 = vmatprep.subr.mxu0 0.0
    %915 = vmatpush1.msra.mxu0 0.0
    %916 = vmatprep.subr.mxu0 0.0
    %917 = vmatpush1.msra.mxu0 0.0
    %918 = vmatprep.subr.mxu0 0.0
    %919 = vmatpush1.msra.mxu0 0.0
    %920 = vmatprep.subr.mxu0 0.0
    %921 = vmatpush1.msra.mxu0 0.0
    %922 = vmatprep.subr.mxu0 0.0
    %923 = vmatpush1.msra.mxu0 0.0
    %924 = vmatprep.subr.mxu0 0.0
    %925 = vmatpush1.msra.mxu0 0.0
    %926 = vmatprep.subr.mxu0 0.0
    %927 = vmatpush1.msra.mxu0 0.0
    %928 = vmatprep.subr.mxu0 0.0
    %929 = vmatpush1.msra.mxu0 0.0
    %930 = vmatprep.subr.mxu0 0.0
    %931 = vmatpush1.msra.mxu0 0.0
    %932 = vmatprep.subr.mxu0 0.0
    %933 = vmatpush1.msra.mxu0 0.0
    %934 = vmatprep.subr.mxu0 0.0
    %935 = vmatpush1.msra.mxu0 0.0
    %936 = vmatprep.subr.mxu0 0.0
    %937 = vmatpush1.msra.mxu0 0.0
    %938 = vmatprep.subr.mxu0 0.0
    %939 = vmatpush1.msra.mxu0 0.0
    %940 = vmatprep.subr.mxu0 0.0
    %941 = vmatpush1.msra.mxu0 0.0
    %942 = vmatprep.subr.mxu0 0.0
    %943 = vmatpush1.msra.mxu0 0.0
    %944 = vmatprep.mubr.f32.mxu0 0.0
    %945 = vmatmul.mubr.f32.gmra.mrb[0].mxu0 %v878
    %v946 = vpop.f32.mrb[0].mxu0
    %v947 = vadd.f32 0.0, %v946
    %v948 = vpop.f32.mrb[0].mxu0
    %949 = vdwg.mxu0
    %v950 = vadd.f32 %v301, %v947
    %v951 = vxor.u32 %v950, 2147483648
    %v952 = vmul.f32 %v951, 1.442695
    %v953 = vpow.pop %v952
    %v954 = vadd.f32 %v953, 1.0
    %v955 = vrcp.pop %v954
    %v956 = vmul.f32 1.0, %v955
    %v957 = vlaneseq
    %v958 = vshrl.u32 %v957, 7
    %v959 = vsub.s32 0, %v958
    %v960 = vrot.slane %v875, %v959
    %962 = vrot.lane.b32.xlu0 %v960, 64
    %v963 = vpop.permute.xlu0 %962
    %v965 = vadd.f32 %v947, %v963
    %967 = vrot.lane.b32.xlu0 %v965, 64
    %v968 = vpop.permute.xlu0 %967
    %v970 = vmul.f32 %v956, %v968
    %972 = vrot.lane.b32.xlu0 %v970, 64
    %v973 = vpop.permute.xlu0 %972
    %v975 = vadd.f32 %v301, %v973
    %v976 = vtanh.pop %v975
    %978 = vrot.lane.b32.xlu0 %v976, 64
    %v979 = vpop.permute.xlu0 %978
    %v981 = vsub.f32 %v138, %v979
    %983 = vrot.lane.b32.xlu0 %v981, 32
    %v984 = vpop.permute.xlu0 %983
    %v986 = vmul.f32 %v956, %v984
    %988 = vrot.lane.b32.xlu0 %v986, 32
    %v989 = vpop.permute.xlu0 %988
    %v991 = vadd.f32 %v976, %v989
    %993 = vrot.lane.b32.xlu0 %v991, 64
    %v994 = vpop.permute.xlu0 %993
    %v995 = vsel %vm876, %v994, 0
    %997 = vmatprep.subr.mxu0 0.0
    %998 = vmatpush1.msra.mxu0 %v871
    %999 = vmatprep.subr.mxu0 0.0
    %1000 = vmatpush1.msra.mxu0 %v872
    %1001 = vmatprep.subr.mxu0 0.0
    %1002 = vmatpush1.msra.mxu0 %v873
    %1003 = vmatprep.subr.mxu0 0.0
    %1004 = vmatpush1.msra.mxu0 %v874
    %1005 = vmatprep.subr.mxu0 0.0
    %1006 = vmatpush1.msra.mxu0 0.0
    %1007 = vmatprep.subr.mxu0 0.0
    %1008 = vmatpush1.msra.mxu0 0.0
    %1009 = vmatprep.subr.mxu0 0.0
    %1010 = vmatpush1.msra.mxu0 0.0
    %1011 = vmatprep.subr.mxu0 0.0
    %1012 = vmatpush1.msra.mxu0 0.0
    %1013 = vmatprep.subr.mxu0 0.0
    %1014 = vmatpush1.msra.mxu0 0.0
    %1015 = vmatprep.subr.mxu0 0.0
    %1016 = vmatpush1.msra.mxu0 0.0
    %1017 = vmatprep.subr.mxu0 0.0
    %1018 = vmatpush1.msra.mxu0 0.0
    %1019 = vmatprep.subr.mxu0 0.0
    %1020 = vmatpush1.msra.mxu0 0.0
    %1021 = vmatprep.subr.mxu0 0.0
    %1022 = vmatpush1.msra.mxu0 0.0
    %1023 = vmatprep.subr.mxu0 0.0
    %1024 = vmatpush1.msra.mxu0 0.0
    %1025 = vmatprep.subr.mxu0 0.0
    %1026 = vmatpush1.msra.mxu0 0.0
    %1027 = vmatprep.subr.mxu0 0.0
    %1028 = vmatpush1.msra.mxu0 0.0
    %1029 = vmatprep.subr.mxu0 0.0
    %1030 = vmatpush1.msra.mxu0 0.0
    %1031 = vmatprep.subr.mxu0 0.0
    %1032 = vmatpush1.msra.mxu0 0.0
    %1033 = vmatprep.subr.mxu0 0.0
    %1034 = vmatpush1.msra.mxu0 0.0
    %1035 = vmatprep.subr.mxu0 0.0
    %1036 = vmatpush1.msra.mxu0 0.0
    %1037 = vmatprep.subr.mxu0 0.0
    %1038 = vmatpush1.msra.mxu0 0.0
    %1039 = vmatprep.subr.mxu0 0.0
    %1040 = vmatpush1.msra.mxu0 0.0
    %1041 = vmatprep.subr.mxu0 0.0
    %1042 = vmatpush1.msra.mxu0 0.0
    %1043 = vmatprep.subr.mxu0 0.0
    %1044 = vmatpush1.msra.mxu0 0.0
    %1045 = vmatprep.subr.mxu0 0.0
    %1046 = vmatpush1.msra.mxu0 0.0
    %1047 = vmatprep.subr.mxu0 0.0
    %1048 = vmatpush1.msra.mxu0 0.0
    %1049 = vmatprep.subr.mxu0 0.0
    %1050 = vmatpush1.msra.mxu0 0.0
    %1051 = vmatprep.subr.mxu0 0.0
    %1052 = vmatpush1.msra.mxu0 0.0
    %1053 = vmatprep.subr.mxu0 0.0
    %1054 = vmatpush1.msra.mxu0 0.0
    %1055 = vmatprep.subr.mxu0 0.0
    %1056 = vmatpush1.msra.mxu0 0.0
    %1057 = vmatprep.subr.mxu0 0.0
    %1058 = vmatpush1.msra.mxu0 0.0
    %1059 = vmatprep.subr.mxu0 0.0
    %1060 = vmatpush1.msra.mxu0 0.0
    %1061 = vmatprep.mubr.f32.mxu0 0.0
    %1062 = vmatmul.mubr.f32.gmra.mrb[0].mxu0 %v995
    %v1063 = vpop.f32.mrb[0].mxu0
    %v1064 = vadd.f32 0.0, %v1063
    %v1065 = vpop.f32.mrb[0].mxu0
    %1066 = vdwg.mxu0
    %v1067 = vadd.f32 %v382, %v1064
    %v1068 = vxor.u32 %v1067, 2147483648
    %v1069 = vmul.f32 %v1068, 1.442695
    %v1070 = vpow.pop %v1069
    %v1071 = vadd.f32 %v1070, 1.0
    %v1072 = vrcp.pop %v1071
    %v1073 = vmul.f32 1.0, %v1072
    %v1074 = vadd.f32 %v1064, %v963
    %1076 = vrot.lane.b32.xlu0 %v1074, 64
    %v1077 = vpop.permute.xlu0 %1076
    %v1079 = vmul.f32 %v1073, %v1077
    %1081 = vrot.lane.b32.xlu0 %v1079, 64
    %v1082 = vpop.permute.xlu0 %1081
    %v1084 = vadd.f32 %v382, %v1082
    %v1085 = vtanh.pop %v1084
    %v1086 = vsub.f32 %v991, %v1085
    %1088 = vrot.lane.b32.xlu0 %v1086, 96
    %v1089 = vpop.permute.xlu0 %1088
    %v1091 = vmul.f32 %v1073, %v1089
    %1093 = vrot.lane.b32.xlu0 %v1091, 32
    %v1094 = vpop.permute.xlu0 %1093
    %v1096 = vadd.f32 %v1085, %v1094
    %1098 = vrot.lane.b32.xlu0 %v1096, 64
    %v1099 = vpop.permute.xlu0 %1098
    %v1100 = vsel %vm876, %v1099, 0
    %1102 = vmatprep.subr.mxu0 0.0
    %1103 = vmatpush1.msra.mxu0 %v871
    %1104 = vmatprep.subr.mxu0 0.0
    %1105 = vmatpush1.msra.mxu0 %v872
    %1106 = vmatprep.subr.mxu0 0.0
    %1107 = vmatpush1.msra.mxu0 %v873
    %1108 = vmatprep.subr.mxu0 0.0
    %1109 = vmatpush1.msra.mxu0 %v874
    %1110 = vmatprep.subr.mxu0 0.0
    %1111 = vmatpush1.msra.mxu0 0.0
    %1112 = vmatprep.subr.mxu0 0.0
    %1113 = vmatpush1.msra.mxu0 0.0
    %1114 = vmatprep.subr.mxu0 0.0
    %1115 = vmatpush1.msra.mxu0 0.0
    %1116 = vmatprep.subr.mxu0 0.0
    %1117 = vmatpush1.msra.mxu0 0.0
    %1118 = vmatprep.subr.mxu0 0.0
    %1119 = vmatpush1.msra.mxu0 0.0
    %1120 = vmatprep.subr.mxu0 0.0
    %1121 = vmatpush1.msra.mxu0 0.0
    %1122 = vmatprep.subr.mxu0 0.0
    %1123 = vmatpush1.msra.mxu0 0.0
    %1124 = vmatprep.subr.mxu0 0.0
    %1125 = vmatpush1.msra.mxu0 0.0
    %1126 = vmatprep.subr.mxu0 0.0
    %1127 = vmatpush1.msra.mxu0 0.0
    %1128 = vmatprep.subr.mxu0 0.0
    %1129 = vmatpush1.msra.mxu0 0.0
    %1130 = vmatprep.subr.mxu0 0.0
    %1131 = vmatpush1.msra.mxu0 0.0
    %1132 = vmatprep.subr.mxu0 0.0
    %1133 = vmatpush1.msra.mxu0 0.0
    %1134 = vmatprep.subr.mxu0 0.0
    %1135 = vmatpush1.msra.mxu0 0.0
    %1136 = vmatprep.subr.mxu0 0.0
    %1137 = vmatpush1.msra.mxu0 0.0
    %1138 = vmatprep.subr.mxu0 0.0
    %1139 = vmatpush1.msra.mxu0 0.0
    %1140 = vmatprep.subr.mxu0 0.0
    %1141 = vmatpush1.msra.mxu0 0.0
    %1142 = vmatprep.subr.mxu0 0.0
    %1143 = vmatpush1.msra.mxu0 0.0
    %1144 = vmatprep.subr.mxu0 0.0
    %1145 = vmatpush1.msra.mxu0 0.0
    %1146 = vmatprep.subr.mxu0 0.0
    %1147 = vmatpush1.msra.mxu0 0.0
    %1148 = vmatprep.subr.mxu0 0.0
    %1149 = vmatpush1.msra.mxu0 0.0
    %1150 = vmatprep.subr.mxu0 0.0
    %1151 = vmatpush1.msra.mxu0 0.0
    %1152 = vmatprep.subr.mxu0 0.0
    %1153 = vmatpush1.msra.mxu0 0.0
    %1154 = vmatprep.subr.mxu0 0.0
    %1155 = vmatpush1.msra.mxu0 0.0
    %1156 = vmatprep.subr.mxu0 0.0
    %1157 = vmatpush1.msra.mxu0 0.0
    %1158 = vmatprep.subr.mxu0 0.0
    %1159 = vmatpush1.msra.mxu0 0.0
    %1160 = vmatprep.subr.mxu0 0.0
    %1161 = vmatpush1.msra.mxu0 0.0
    %1162 = vmatprep.subr.mxu0 0.0
    %1163 = vmatpush1.msra.mxu0 0.0
    %1164 = vmatprep.subr.mxu0 0.0
    %1165 = vmatpush1.msra.mxu0 0.0
    %1166 = vmatprep.mubr.f32.mxu0 0.0
    %1167 = vmatmul.mubr.f32.gmra.mrb[0].mxu0 %v1100
    %v1168 = vpop.f32.mrb[0].mxu0
    %v1169 = vadd.f32 0.0, %v1168
    %v1170 = vpop.f32.mrb[0].mxu0
    %1171 = vdwg.mxu0
    %v1172 = vadd.f32 %v463, %v1169
    %v1173 = vxor.u32 %v1172, 2147483648
    %v1174 = vmul.f32 %v1173, 1.442695
    %v1175 = vpow.pop %v1174
    %v1176 = vadd.f32 %v1175, 1.0
    %v1177 = vrcp.pop %v1176
    %v1178 = vmul.f32 1.0, %v1177
    %v1179 = vadd.f32 %v1169, %v963
    %1181 = vrot.lane.b32.xlu0 %v1179, 64
    %v1182 = vpop.permute.xlu0 %1181
    %v1184 = vmul.f32 %v1178, %v1182
    %1186 = vrot.lane.b32.xlu0 %v1184, 64
    %v1187 = vpop.permute.xlu0 %1186
    %v1189 = vadd.f32 %v463, %v1187
    %v1190 = vtanh.pop %v1189
    %v1191 = vsub.f32 %v1096, %v1190
    %1193 = vrot.lane.b32.xlu0 %v1191, 96
    %v1194 = vpop.permute.xlu0 %1193
    %v1196 = vmul.f32 %v1178, %v1194
    %1198 = vrot.lane.b32.xlu0 %v1196, 32
    %v1199 = vpop.permute.xlu0 %1198
    %v1201 = vadd.f32 %v1190, %v1199
    %1203 = vrot.lane.b32.xlu0 %v1201, 64
    %v1204 = vpop.permute.xlu0 %1203
    %v1205 = vsel %vm876, %v1204, 0
    %1207 = vmatprep.subr.mxu0 0.0
    %1208 = vmatpush1.msra.mxu0 %v871
    %1209 = vmatprep.subr.mxu0 0.0
    %1210 = vmatpush1.msra.mxu0 %v872
    %1211 = vmatprep.subr.mxu0 0.0
    %1212 = vmatpush1.msra.mxu0 %v873
    %1213 = vmatprep.subr.mxu0 0.0
    %1214 = vmatpush1.msra.mxu0 %v874
    %1215 = vmatprep.subr.mxu0 0.0
    %1216 = vmatpush1.msra.mxu0 0.0
    %1217 = vmatprep.subr.mxu0 0.0
    %1218 = vmatpush1.msra.mxu0 0.0
    %1219 = vmatprep.subr.mxu0 0.0
    %1220 = vmatpush1.msra.mxu0 0.0
    %1221 = vmatprep.subr.mxu0 0.0
    %1222 = vmatpush1.msra.mxu0 0.0
    %1223 = vmatprep.subr.mxu0 0.0
    %1224 = vmatpush1.msra.mxu0 0.0
    %1225 = vmatprep.subr.mxu0 0.0
    %1226 = vmatpush1.msra.mxu0 0.0
    %1227 = vmatprep.subr.mxu0 0.0
    %1228 = vmatpush1.msra.mxu0 0.0
    %1229 = vmatprep.subr.mxu0 0.0
    %1230 = vmatpush1.msra.mxu0 0.0
    %1231 = vmatprep.subr.mxu0 0.0
    %1232 = vmatpush1.msra.mxu0 0.0
    %1233 = vmatprep.subr.mxu0 0.0
    %1234 = vmatpush1.msra.mxu0 0.0
    %1235 = vmatprep.subr.mxu0 0.0
    %1236 = vmatpush1.msra.mxu0 0.0
    %1237 = vmatprep.subr.mxu0 0.0
    %1238 = vmatpush1.msra.mxu0 0.0
    %1239 = vmatprep.subr.mxu0 0.0
    %1240 = vmatpush1.msra.mxu0 0.0
    %1241 = vmatprep.subr.mxu0 0.0
    %1242 = vmatpush1.msra.mxu0 0.0
    %1243 = vmatprep.subr.mxu0 0.0
    %1244 = vmatpush1.msra.mxu0 0.0
    %1245 = vmatprep.subr.mxu0 0.0
    %1246 = vmatpush1.msra.mxu0 0.0
    %1247 = vmatprep.subr.mxu0 0.0
    %1248 = vmatpush1.msra.mxu0 0.0
    %1249 = vmatprep.subr.mxu0 0.0
    %1250 = vmatpush1.msra.mxu0 0.0
    %1251 = vmatprep.subr.mxu0 0.0
    %1252 = vmatpush1.msra.mxu0 0.0
    %1253 = vmatprep.subr.mxu0 0.0
    %1254 = vmatpush1.msra.mxu0 0.0
    %1255 = vmatprep.subr.mxu0 0.0
    %1256 = vmatpush1.msra.mxu0 0.0
    %1257 = vmatprep.subr.mxu0 0.0
    %1258 = vmatpush1.msra.mxu0 0.0
    %1259 = vmatprep.subr.mxu0 0.0
    %1260 = vmatpush1.msra.mxu0 0.0
    %1261 = vmatprep.subr.mxu0 0.0
    %1262 = vmatpush1.msra.mxu0 0.0
    %1263 = vmatprep.subr.mxu0 0.0
    %1264 = vmatpush1.msra.mxu0 0.0
    %1265 = vmatprep.subr.mxu0 0.0
    %1266 = vmatpush1.msra.mxu0 0.0
    %1267 = vmatprep.subr.mxu0 0.0
    %1268 = vmatpush1.msra.mxu0 0.0
    %1269 = vmatprep.subr.mxu0 0.0
    %1270 = vmatpush1.msra.mxu0 0.0
    %1271 = vmatprep.mubr.f32.mxu0 0.0
    %1272 = vmatmul.mubr.f32.gmra.mrb[0].mxu0 %v1205
    %v1273 = vpop.f32.mrb[0].mxu0
    %v1274 = vadd.f32 0.0, %v1273
    %v1275 = vpop.f32.mrb[0].mxu0
    %1276 = vdwg.mxu0
    %v1277 = vadd.f32 %v544, %v1274
    %v1278 = vxor.u32 %v1277, 2147483648
    %v1279 = vmul.f32 %v1278, 1.442695
    %v1280 = vpow.pop %v1279
    %v1281 = vadd.f32 %v1280, 1.0
    %v1282 = vrcp.pop %v1281
    %v1283 = vmul.f32 1.0, %v1282
    %v1284 = vadd.f32 %v1274, %v963
    %1286 = vrot.lane.b32.xlu0 %v1284, 64
    %v1287 = vpop.permute.xlu0 %1286
    %v1289 = vmul.f32 %v1283, %v1287
    %1291 = vrot.lane.b32.xlu0 %v1289, 64
    %v1292 = vpop.permute.xlu0 %1291
    %v1294 = vadd.f32 %v544, %v1292
    %v1295 = vtanh.pop %v1294
    %v1296 = vsub.f32 %v1201, %v1295
    %1298 = vrot.lane.b32.xlu0 %v1296, 96
    %v1299 = vpop.permute.xlu0 %1298
    %v1301 = vmul.f32 %v1283, %v1299
    %1303 = vrot.lane.b32.xlu0 %v1301, 32
    %v1304 = vpop.permute.xlu0 %1303
    %v1306 = vadd.f32 %v1295, %v1304
    %1308 = vrot.lane.b32.xlu0 %v1306, 64
    %v1309 = vpop.permute.xlu0 %1308
    %v1310 = vsel %vm876, %v1309, 0
    %1312 = vmatprep.subr.mxu0 0.0
    %1313 = vmatpush1.msra.mxu0 %v871
    %1314 = vmatprep.subr.mxu0 0.0
    %1315 = vmatpush1.msra.mxu0 %v872
    %1316 = vmatprep.subr.mxu0 0.0
    %1317 = vmatpush1.msra.mxu0 %v873
    %1318 = vmatprep.subr.mxu0 0.0
    %1319 = vmatpush1.msra.mxu0 %v874
    %1320 = vmatprep.subr.mxu0 0.0
    %1321 = vmatpush1.msra.mxu0 0.0
    %1322 = vmatprep.subr.mxu0 0.0
    %1323 = vmatpush1.msra.mxu0 0.0
    %1324 = vmatprep.subr.mxu0 0.0
    %1325 = vmatpush1.msra.mxu0 0.0
    %1326 = vmatprep.subr.mxu0 0.0
    %1327 = vmatpush1.msra.mxu0 0.0
    %1328 = vmatprep.subr.mxu0 0.0
    %1329 = vmatpush1.msra.mxu0 0.0
    %1330 = vmatprep.subr.mxu0 0.0
    %1331 = vmatpush1.msra.mxu0 0.0
    %1332 = vmatprep.subr.mxu0 0.0
    %1333 = vmatpush1.msra.mxu0 0.0
    %1334 = vmatprep.subr.mxu0 0.0
    %1335 = vmatpush1.msra.mxu0 0.0
    %1336 = vmatprep.subr.mxu0 0.0
    %1337 = vmatpush1.msra.mxu0 0.0
    %1338 = vmatprep.subr.mxu0 0.0
    %1339 = vmatpush1.msra.mxu0 0.0
    %1340 = vmatprep.subr.mxu0 0.0
    %1341 = vmatpush1.msra.mxu0 0.0
    %1342 = vmatprep.subr.mxu0 0.0
    %1343 = vmatpush1.msra.mxu0 0.0
    %1344 = vmatprep.subr.mxu0 0.0
    %1345 = vmatpush1.msra.mxu0 0.0
    %1346 = vmatprep.subr.mxu0 0.0
    %1347 = vmatpush1.msra.mxu0 0.0
    %1348 = vmatprep.subr.mxu0 0.0
    %1349 = vmatpush1.msra.mxu0 0.0
    %1350 = vmatprep.subr.mxu0 0.0
    %1351 = vmatpush1.msra.mxu0 0.0
    %1352 = vmatprep.subr.mxu0 0.0
    %1353 = vmatpush1.msra.mxu0 0.0
    %1354 = vmatprep.subr.mxu0 0.0
    %1355 = vmatpush1.msra.mxu0 0.0
    %1356 = vmatprep.subr.mxu0 0.0
    %1357 = vmatpush1.msra.mxu0 0.0
    %1358 = vmatprep.subr.mxu0 0.0
    %1359 = vmatpush1.msra.mxu0 0.0
    %1360 = vmatprep.subr.mxu0 0.0
    %1361 = vmatpush1.msra.mxu0 0.0
    %1362 = vmatprep.subr.mxu0 0.0
    %1363 = vmatpush1.msra.mxu0 0.0
    %1364 = vmatprep.subr.mxu0 0.0
    %1365 = vmatpush1.msra.mxu0 0.0
    %1366 = vmatprep.subr.mxu0 0.0
    %1367 = vmatpush1.msra.mxu0 0.0
    %1368 = vmatprep.subr.mxu0 0.0
    %1369 = vmatpush1.msra.mxu0 0.0
    %1370 = vmatprep.subr.mxu0 0.0
    %1371 = vmatpush1.msra.mxu0 0.0
    %1372 = vmatprep.subr.mxu0 0.0
    %1373 = vmatpush1.msra.mxu0 0.0
    %1374 = vmatprep.subr.mxu0 0.0
    %1375 = vmatpush1.msra.mxu0 0.0
    %1376 = vmatprep.mubr.f32.mxu0 0.0
    %1377 = vmatmul.mubr.f32.gmra.mrb[0].mxu0 %v1310
    %v1378 = vpop.f32.mrb[0].mxu0
    %v1379 = vadd.f32 0.0, %v1378
    %v1380 = vpop.f32.mrb[0].mxu0
    %1381 = vdwg.mxu0
    %v1382 = vadd.f32 %v625, %v1379
    %v1383 = vxor.u32 %v1382, 2147483648
    %v1384 = vmul.f32 %v1383, 1.442695
    %v1385 = vpow.pop %v1384
    %v1386 = vadd.f32 %v1385, 1.0
    %v1387 = vrcp.pop %v1386
    %v1388 = vmul.f32 1.0, %v1387
    %v1389 = vadd.f32 %v1379, %v963
    %1391 = vrot.lane.b32.xlu0 %v1389, 64
    %v1392 = vpop.permute.xlu0 %1391
    %v1394 = vmul.f32 %v1388, %v1392
    %1396 = vrot.lane.b32.xlu0 %v1394, 64
    %v1397 = vpop.permute.xlu0 %1396
    %v1399 = vadd.f32 %v625, %v1397
    %v1400 = vtanh.pop %v1399
    %v1401 = vsub.f32 %v1306, %v1400
    %1403 = vrot.lane.b32.xlu0 %v1401, 96
    %v1404 = vpop.permute.xlu0 %1403
    %v1406 = vmul.f32 %v1388, %v1404
    %1408 = vrot.lane.b32.xlu0 %v1406, 32
    %v1409 = vpop.permute.xlu0 %1408
    %v1411 = vadd.f32 %v1400, %v1409
    %1413 = vrot.lane.b32.xlu0 %v1411, 64
    %v1414 = vpop.permute.xlu0 %1413
    %v1415 = vsel %vm876, %v1414, 0
    %1417 = vmatprep.subr.mxu0 0.0
    %1418 = vmatpush1.msra.mxu0 %v871
    %1419 = vmatprep.subr.mxu0 0.0
    %1420 = vmatpush1.msra.mxu0 %v872
    %1421 = vmatprep.subr.mxu0 0.0
    %1422 = vmatpush1.msra.mxu0 %v873
    %1423 = vmatprep.subr.mxu0 0.0
    %1424 = vmatpush1.msra.mxu0 %v874
    %1425 = vmatprep.subr.mxu0 0.0
    %1426 = vmatpush1.msra.mxu0 0.0
    %1427 = vmatprep.subr.mxu0 0.0
    %1428 = vmatpush1.msra.mxu0 0.0
    %1429 = vmatprep.subr.mxu0 0.0
    %1430 = vmatpush1.msra.mxu0 0.0
    %1431 = vmatprep.subr.mxu0 0.0
    %1432 = vmatpush1.msra.mxu0 0.0
    %1433 = vmatprep.subr.mxu0 0.0
    %1434 = vmatpush1.msra.mxu0 0.0
    %1435 = vmatprep.subr.mxu0 0.0
    %1436 = vmatpush1.msra.mxu0 0.0
    %1437 = vmatprep.subr.mxu0 0.0
    %1438 = vmatpush1.msra.mxu0 0.0
    %1439 = vmatprep.subr.mxu0 0.0
    %1440 = vmatpush1.msra.mxu0 0.0
    %1441 = vmatprep.subr.mxu0 0.0
    %1442 = vmatpush1.msra.mxu0 0.0
    %1443 = vmatprep.subr.mxu0 0.0
    %1444 = vmatpush1.msra.mxu0 0.0
    %1445 = vmatprep.subr.mxu0 0.0
    %1446 = vmatpush1.msra.mxu0 0.0
    %1447 = vmatprep.subr.mxu0 0.0
    %1448 = vmatpush1.msra.mxu0 0.0
    %1449 = vmatprep.subr.mxu0 0.0
    %1450 = vmatpush1.msra.mxu0 0.0
    %1451 = vmatprep.subr.mxu0 0.0
    %1452 = vmatpush1.msra.mxu0 0.0
    %1453 = vmatprep.subr.mxu0 0.0
    %1454 = vmatpush1.msra.mxu0 0.0
    %1455 = vmatprep.subr.mxu0 0.0
    %1456 = vmatpush1.msra.mxu0 0.0
    %1457 = vmatprep.subr.mxu0 0.0
    %1458 = vmatpush1.msra.mxu0 0.0
    %1459 = vmatprep.subr.mxu0 0.0
    %1460 = vmatpush1.msra.mxu0 0.0
    %1461 = vmatprep.subr.mxu0 0.0
    %1462 = vmatpush1.msra.mxu0 0.0
    %1463 = vmatprep.subr.mxu0 0.0
    %1464 = vmatpush1.msra.mxu0 0.0
    %1465 = vmatprep.subr.mxu0 0.0
    %1466 = vmatpush1.msra.mxu0 0.0
    %1467 = vmatprep.subr.mxu0 0.0
    %1468 = vmatpush1.msra.mxu0 0.0
    %1469 = vmatprep.subr.mxu0 0.0
    %1470 = vmatpush1.msra.mxu0 0.0
    %1471 = vmatprep.subr.mxu0 0.0
    %1472 = vmatpush1.msra.mxu0 0.0
    %1473 = vmatprep.subr.mxu0 0.0
    %1474 = vmatpush1.msra.mxu0 0.0
    %1475 = vmatprep.subr.mxu0 0.0
    %1476 = vmatpush1.msra.mxu0 0.0
    %1477 = vmatprep.subr.mxu0 0.0
    %1478 = vmatpush1.msra.mxu0 0.0
    %1479 = vmatprep.subr.mxu0 0.0
    %1480 = vmatpush1.msra.mxu0 0.0
    %1481 = vmatprep.mubr.f32.mxu0 0.0
    %1482 = vmatmul.mubr.f32.gmra.mrb[0].mxu0 %v1415
    %v1483 = vpop.f32.mrb[0].mxu0
    %v1484 = vadd.f32 0.0, %v1483
    %v1485 = vpop.f32.mrb[0].mxu0
    %1486 = vdwg.mxu0
    %v1487 = vadd.f32 %v706, %v1484
    %v1488 = vxor.u32 %v1487, 2147483648
    %v1489 = vmul.f32 %v1488, 1.442695
    %v1490 = vpow.pop %v1489
    %v1491 = vadd.f32 %v1490, 1.0
    %v1492 = vrcp.pop %v1491
    %v1493 = vmul.f32 1.0, %v1492
    %v1494 = vadd.f32 %v1484, %v963
    %1496 = vrot.lane.b32.xlu0 %v1494, 64
    %v1497 = vpop.permute.xlu0 %1496
    %v1499 = vmul.f32 %v1493, %v1497
    %1501 = vrot.lane.b32.xlu0 %v1499, 64
    %v1502 = vpop.permute.xlu0 %1501
    %v1504 = vadd.f32 %v706, %v1502
    %v1505 = vtanh.pop %v1504
    %v1506 = vsub.f32 %v1411, %v1505
    %1508 = vrot.lane.b32.xlu0 %v1506, 96
    %v1509 = vpop.permute.xlu0 %1508
    %v1511 = vmul.f32 %v1493, %v1509
    %1513 = vrot.lane.b32.xlu0 %v1511, 32
    %v1514 = vpop.permute.xlu0 %1513
    %v1516 = vadd.f32 %v1505, %v1514
    %1518 = vrot.lane.b32.xlu0 %v1516, 64
    %v1519 = vpop.permute.xlu0 %1518
    %v1520 = vsel %vm876, %v1519, 0
    %1522 = vmatprep.subr.mxu0 0.0
    %1523 = vmatpush1.msra.mxu0 %v871
    %1524 = vmatprep.subr.mxu0 0.0
    %1525 = vmatpush1.msra.mxu0 %v872
    %1526 = vmatprep.subr.mxu0 0.0
    %1527 = vmatpush1.msra.mxu0 %v873
    %1528 = vmatprep.subr.mxu0 0.0
    %1529 = vmatpush1.msra.mxu0 %v874
    %1530 = vmatprep.subr.mxu0 0.0
    %1531 = vmatpush1.msra.mxu0 0.0
    %1532 = vmatprep.subr.mxu0 0.0
    %1533 = vmatpush1.msra.mxu0 0.0
    %1534 = vmatprep.subr.mxu0 0.0
    %1535 = vmatpush1.msra.mxu0 0.0
    %1536 = vmatprep.subr.mxu0 0.0
    %1537 = vmatpush1.msra.mxu0 0.0
    %1538 = vmatprep.subr.mxu0 0.0
    %1539 = vmatpush1.msra.mxu0 0.0
    %1540 = vmatprep.subr.mxu0 0.0
    %1541 = vmatpush1.msra.mxu0 0.0
    %1542 = vmatprep.subr.mxu0 0.0
    %1543 = vmatpush1.msra.mxu0 0.0
    %1544 = vmatprep.subr.mxu0 0.0
    %1545 = vmatpush1.msra.mxu0 0.0
    %1546 = vmatprep.subr.mxu0 0.0
    %1547 = vmatpush1.msra.mxu0 0.0
    %1548 = vmatprep.subr.mxu0 0.0
    %1549 = vmatpush1.msra.mxu0 0.0
    %1550 = vmatprep.subr.mxu0 0.0
    %1551 = vmatpush1.msra.mxu0 0.0
    %1552 = vmatprep.subr.mxu0 0.0
    %1553 = vmatpush1.msra.mxu0 0.0
    %1554 = vmatprep.subr.mxu0 0.0
    %1555 = vmatpush1.msra.mxu0 0.0
    %1556 = vmatprep.subr.mxu0 0.0
    %1557 = vmatpush1.msra.mxu0 0.0
    %1558 = vmatprep.subr.mxu0 0.0
    %1559 = vmatpush1.msra.mxu0 0.0
    %1560 = vmatprep.subr.mxu0 0.0
    %1561 = vmatpush1.msra.mxu0 0.0
    %1562 = vmatprep.subr.mxu0 0.0
    %1563 = vmatpush1.msra.mxu0 0.0
    %1564 = vmatprep.subr.mxu0 0.0
    %1565 = vmatpush1.msra.mxu0 0.0
    %1566 = vmatprep.subr.mxu0 0.0
    %1567 = vmatpush1.msra.mxu0 0.0
    %1568 = vmatprep.subr.mxu0 0.0
    %1569 = vmatpush1.msra.mxu0 0.0
    %1570 = vmatprep.subr.mxu0 0.0
    %1571 = vmatpush1.msra.mxu0 0.0
    %1572 = vmatprep.subr.mxu0 0.0
    %1573 = vmatpush1.msra.mxu0 0.0
    %1574 = vmatprep.subr.mxu0 0.0
    %1575 = vmatpush1.msra.mxu0 0.0
    %1576 = vmatprep.subr.mxu0 0.0
    %1577 = vmatpush1.msra.mxu0 0.0
    %1578 = vmatprep.subr.mxu0 0.0
    %1579 = vmatpush1.msra.mxu0 0.0
    %1580 = vmatprep.subr.mxu0 0.0
    %1581 = vmatpush1.msra.mxu0 0.0
    %1582 = vmatprep.subr.mxu0 0.0
    %1583 = vmatpush1.msra.mxu0 0.0
    %1584 = vmatprep.subr.mxu0 0.0
    %1585 = vmatpush1.msra.mxu0 0.0
    %1586 = vmatprep.mubr.f32.mxu0 0.0
    %1587 = vmatmul.mubr.f32.gmra.mrb[0].mxu0 %v1520
    %v1588 = vpop.f32.mrb[0].mxu0
    %v1589 = vadd.f32 0.0, %v1588
    %v1590 = vpop.f32.mrb[0].mxu0
    %1591 = vdwg.mxu0
    %v1592 = vadd.f32 %v787, %v1589
    %v1593 = vxor.u32 %v1592, 2147483648
    %v1594 = vmul.f32 %v1593, 1.442695
    %v1595 = vpow.pop %v1594
    %v1596 = vadd.f32 %v1595, 1.0
    %v1597 = vrcp.pop %v1596
    %v1598 = vmul.f32 1.0, %v1597
    %v1599 = vadd.f32 %v1589, %v963
    %1601 = vrot.lane.b32.xlu0 %v1599, 64
    %v1602 = vpop.permute.xlu0 %1601
    %v1604 = vmul.f32 %v1598, %v1602
    %1606 = vrot.lane.b32.xlu0 %v1604, 64
    %v1607 = vpop.permute.xlu0 %1606
    %v1609 = vadd.f32 %v787, %v1607
    %v1610 = vtanh.pop %v1609
    %v1611 = vsub.f32 %v1516, %v1610
    %1613 = vrot.lane.b32.xlu0 %v1611, 96
    %v1614 = vpop.permute.xlu0 %1613
    %v1616 = vmul.f32 %v1598, %v1614
    %1618 = vrot.lane.b32.xlu0 %v1616, 32
    %v1619 = vpop.permute.xlu0 %1618
    %v1621 = vadd.f32 %v1610, %v1619
    %1623 = vrot.lane.b32.xlu0 %v1621, 64
    %v1624 = vpop.permute.xlu0 %1623
    %v1625 = vsel %vm876, %v1624, 0
    %1627 = vmatprep.subr.mxu0 0.0
    %1628 = vmatpush1.msra.mxu0 %v871
    %1629 = vmatprep.subr.mxu0 0.0
    %1630 = vmatpush1.msra.mxu0 %v872
    %1631 = vmatprep.subr.mxu0 0.0
    %1632 = vmatpush1.msra.mxu0 %v873
    %1633 = vmatprep.subr.mxu0 0.0
    %1634 = vmatpush1.msra.mxu0 %v874
    %1635 = vmatprep.subr.mxu0 0.0
    %1636 = vmatpush1.msra.mxu0 0.0
    %1637 = vmatprep.subr.mxu0 0.0
    %1638 = vmatpush1.msra.mxu0 0.0
    %1639 = vmatprep.subr.mxu0 0.0
    %1640 = vmatpush1.msra.mxu0 0.0
    %1641 = vmatprep.subr.mxu0 0.0
    %1642 = vmatpush1.msra.mxu0 0.0
    %1643 = vmatprep.subr.mxu0 0.0
    %1644 = vmatpush1.msra.mxu0 0.0
    %1645 = vmatprep.subr.mxu0 0.0
    %1646 = vmatpush1.msra.mxu0 0.0
    %1647 = vmatprep.subr.mxu0 0.0
    %1648 = vmatpush1.msra.mxu0 0.0
    %1649 = vmatprep.subr.mxu0 0.0
    %1650 = vmatpush1.msra.mxu0 0.0
    %1651 = vmatprep.subr.mxu0 0.0
    %1652 = vmatpush1.msra.mxu0 0.0
    %1653 = vmatprep.subr.mxu0 0.0
    %1654 = vmatpush1.msra.mxu0 0.0
    %1655 = vmatprep.subr.mxu0 0.0
    %1656 = vmatpush1.msra.mxu0 0.0
    %1657 = vmatprep.subr.mxu0 0.0
    %1658 = vmatpush1.msra.mxu0 0.0
    %1659 = vmatprep.subr.mxu0 0.0
    %1660 = vmatpush1.msra.mxu0 0.0
    %1661 = vmatprep.subr.mxu0 0.0
    %1662 = vmatpush1.msra.mxu0 0.0
    %1663 = vmatprep.subr.mxu0 0.0
    %1664 = vmatpush1.msra.mxu0 0.0
    %1665 = vmatprep.subr.mxu0 0.0
    %1666 = vmatpush1.msra.mxu0 0.0
    %1667 = vmatprep.subr.mxu0 0.0
    %1668 = vmatpush1.msra.mxu0 0.0
    %1669 = vmatprep.subr.mxu0 0.0
    %1670 = vmatpush1.msra.mxu0 0.0
    %1671 = vmatprep.subr.mxu0 0.0
    %1672 = vmatpush1.msra.mxu0 0.0
    %1673 = vmatprep.subr.mxu0 0.0
    %1674 = vmatpush1.msra.mxu0 0.0
    %1675 = vmatprep.subr.mxu0 0.0
    %1676 = vmatpush1.msra.mxu0 0.0
    %1677 = vmatprep.subr.mxu0 0.0
    %1678 = vmatpush1.msra.mxu0 0.0
    %1679 = vmatprep.subr.mxu0 0.0
    %1680 = vmatpush1.msra.mxu0 0.0
    %1681 = vmatprep.subr.mxu0 0.0
    %1682 = vmatpush1.msra.mxu0 0.0
    %1683 = vmatprep.subr.mxu0 0.0
    %1684 = vmatpush1.msra.mxu0 0.0
    %1685 = vmatprep.subr.mxu0 0.0
    %1686 = vmatpush1.msra.mxu0 0.0
    %1687 = vmatprep.subr.mxu0 0.0
    %1688 = vmatpush1.msra.mxu0 0.0
    %1689 = vmatprep.subr.mxu0 0.0
    %1690 = vmatpush1.msra.mxu0 0.0
    %1691 = vmatprep.mubr.f32.mxu0 0.0
    %1692 = vmatmul.mubr.f32.gmra.mrb[0].mxu0 %v1625
    %v1693 = vpop.f32.mrb[0].mxu0
    %v1694 = vadd.f32 0.0, %v1693
    %v1695 = vpop.f32.mrb[0].mxu0
    %1696 = vdwg.mxu0
    %v1697 = vadd.f32 %v868, %v1694
    %v1698 = vxor.u32 %v1697, 2147483648
    %v1699 = vmul.f32 %v1698, 1.442695
    %v1700 = vpow.pop %v1699
    %v1701 = vadd.f32 %v1700, 1.0
    %v1702 = vrcp.pop %v1701
    %v1703 = vmul.f32 1.0, %v1702
    %v1704 = vadd.f32 %v1694, %v963
    %1706 = vrot.lane.b32.xlu0 %v1704, 64
    %v1707 = vpop.permute.xlu0 %1706
    %v1709 = vmul.f32 %v1703, %v1707
    %1711 = vrot.lane.b32.xlu0 %v1709, 64
    %v1712 = vpop.permute.xlu0 %1711
    %v1714 = vadd.f32 %v868, %v1712
    %v1715 = vtanh.pop %v1714
    %v1716 = vsub.f32 %v1621, %v1715
    %1718 = vrot.lane.b32.xlu0 %v1716, 96
    %v1719 = vpop.permute.xlu0 %1718
    %v1721 = vmul.f32 %v1703, %v1719
    %1723 = vrot.lane.b32.xlu0 %v1721, 32
    %v1724 = vpop.permute.xlu0 %1723
    %v1726 = vadd.f32 %v1715, %v1724
    %v1727 = vld [vmem:[%s5 + $0x8] sm:$0xff]
    %v1728 = vld [vmem:[%s5 + $0x10] sm:$0xff]
    %v1729 = vld [vmem:[%s5 + $0x18] sm:$0xff]
    %v1730 = vld [vmem:[%s5 + $0x20] sm:$0xff]
    %v1731 = vld [vmem:[#allocation4 + $0x1] sm:$0x1]
    %v1732 = vlaneseq
    %v1733 = vshrl.u32 %v1732, 7
    %v1734 = vsub.s32 0, %v1733
    %v1735 = vrot.slane %v1731, %v1734
    %1736 = vmatprep.subr.mxu0 0.0
    %1737 = vmatpush1.msra.mxu0 %v1727
    %1738 = vmatprep.subr.mxu0 0.0
    %1739 = vmatpush1.msra.mxu0 %v1728
    %1740 = vmatprep.subr.mxu0 0.0
    %1741 = vmatpush1.msra.mxu0 %v1729
    %1742 = vmatprep.subr.mxu0 0.0
    %1743 = vmatpush1.msra.mxu0 %v1730
    %1744 = vmatprep.subr.mxu0 0.0
    %1745 = vmatpush1.msra.mxu0 0.0
    %1746 = vmatprep.subr.mxu0 0.0
    %1747 = vmatpush1.msra.mxu0 0.0
    %1748 = vmatprep.subr.mxu0 0.0
    %1749 = vmatpush1.msra.mxu0 0.0
    %1750 = vmatprep.subr.mxu0 0.0
    %1751 = vmatpush1.msra.mxu0 0.0
    %1752 = vmatprep.subr.mxu0 0.0
    %1753 = vmatpush1.msra.mxu0 0.0
    %1754 = vmatprep.subr.mxu0 0.0
    %1755 = vmatpush1.msra.mxu0 0.0
    %1756 = vmatprep.subr.mxu0 0.0
    %1757 = vmatpush1.msra.mxu0 0.0
    %1758 = vmatprep.subr.mxu0 0.0
    %1759 = vmatpush1.msra.mxu0 0.0
    %1760 = vmatprep.subr.mxu0 0.0
    %1761 = vmatpush1.msra.mxu0 0.0
    %1762 = vmatprep.subr.mxu0 0.0
    %1763 = vmatpush1.msra.mxu0 0.0
    %1764 = vmatprep.subr.mxu0 0.0
    %1765 = vmatpush1.msra.mxu0 0.0
    %1766 = vmatprep.subr.mxu0 0.0
    %1767 = vmatpush1.msra.mxu0 0.0
    %1768 = vmatprep.subr.mxu0 0.0
    %1769 = vmatpush1.msra.mxu0 0.0
    %1770 = vmatprep.subr.mxu0 0.0
    %1771 = vmatpush1.msra.mxu0 0.0
    %1772 = vmatprep.subr.mxu0 0.0
    %1773 = vmatpush1.msra.mxu0 0.0
    %1774 = vmatprep.subr.mxu0 0.0
    %1775 = vmatpush1.msra.mxu0 0.0
    %1776 = vmatprep.subr.mxu0 0.0
    %1777 = vmatpush1.msra.mxu0 0.0
    %1778 = vmatprep.subr.mxu0 0.0
    %1779 = vmatpush1.msra.mxu0 0.0
    %1780 = vmatprep.subr.mxu0 0.0
    %1781 = vmatpush1.msra.mxu0 0.0
    %1782 = vmatprep.subr.mxu0 0.0
    %1783 = vmatpush1.msra.mxu0 0.0
    %1784 = vmatprep.subr.mxu0 0.0
    %1785 = vmatpush1.msra.mxu0 0.0
    %1786 = vmatprep.subr.mxu0 0.0
    %1787 = vmatpush1.msra.mxu0 0.0
    %1788 = vmatprep.subr.mxu0 0.0
    %1789 = vmatpush1.msra.mxu0 0.0
    %1790 = vmatprep.subr.mxu0 0.0
    %1791 = vmatpush1.msra.mxu0 0.0
    %1792 = vmatprep.subr.mxu0 0.0
    %1793 = vmatpush1.msra.mxu0 0.0
    %1794 = vmatprep.subr.mxu0 0.0
    %1795 = vmatpush1.msra.mxu0 0.0
    %1796 = vmatprep.subr.mxu0 0.0
    %1797 = vmatpush1.msra.mxu0 0.0
    %1798 = vmatprep.subr.mxu0 0.0
    %1799 = vmatpush1.msra.mxu0 0.0
    %1800 = vmatprep.mubr.f32.mxu0 0.0
    %1801 = vmatmul.mubr.f32.gmra.mrb[0].mxu0 %v995
    %v1802 = vpop.f32.mrb[0].mxu0
    %v1803 = vadd.f32 %v1735, %v1802
    %v1804 = vpop.f32.mrb[0].mxu0
    %1805 = vdwg.mxu0
    %1806 = vmatprep.subr.mxu0 0.0
    %1807 = vmatpush1.msra.mxu0 %v1727
    %1808 = vmatprep.subr.mxu0 0.0
    %1809 = vmatpush1.msra.mxu0 %v1728
    %1810 = vmatprep.subr.mxu0 0.0
    %1811 = vmatpush1.msra.mxu0 %v1729
    %1812 = vmatprep.subr.mxu0 0.0
    %1813 = vmatpush1.msra.mxu0 %v1730
    %1814 = vmatprep.subr.mxu0 0.0
    %1815 = vmatpush1.msra.mxu0 0.0
    %1816 = vmatprep.subr.mxu0 0.0
    %1817 = vmatpush1.msra.mxu0 0.0
    %1818 = vmatprep.subr.mxu0 0.0
    %1819 = vmatpush1.msra.mxu0 0.0
    %1820 = vmatprep.subr.mxu0 0.0
    %1821 = vmatpush1.msra.mxu0 0.0
    %1822 = vmatprep.subr.mxu0 0.0
    %1823 = vmatpush1.msra.mxu0 0.0
    %1824 = vmatprep.subr.mxu0 0.0
    %1825 = vmatpush1.msra.mxu0 0.0
    %1826 = vmatprep.subr.mxu0 0.0
    %1827 = vmatpush1.msra.mxu0 0.0
    %1828 = vmatprep.subr.mxu0 0.0
    %1829 = vmatpush1.msra.mxu0 0.0
    %1830 = vmatprep.subr.mxu0 0.0
    %1831 = vmatpush1.msra.mxu0 0.0
    %1832 = vmatprep.subr.mxu0 0.0
    %1833 = vmatpush1.msra.mxu0 0.0
    %1834 = vmatprep.subr.mxu0 0.0
    %1835 = vmatpush1.msra.mxu0 0.0
    %1836 = vmatprep.subr.mxu0 0.0
    %1837 = vmatpush1.msra.mxu0 0.0
    %1838 = vmatprep.subr.mxu0 0.0
    %1839 = vmatpush1.msra.mxu0 0.0
    %1840 = vmatprep.subr.mxu0 0.0
    %1841 = vmatpush1.msra.mxu0 0.0
    %1842 = vmatprep.subr.mxu0 0.0
    %1843 = vmatpush1.msra.mxu0 0.0
    %1844 = vmatprep.subr.mxu0 0.0
    %1845 = vmatpush1.msra.mxu0 0.0
    %1846 = vmatprep.subr.mxu0 0.0
    %1847 = vmatpush1.msra.mxu0 0.0
    %1848 = vmatprep.subr.mxu0 0.0
    %1849 = vmatpush1.msra.mxu0 0.0
    %1850 = vmatprep.subr.mxu0 0.0
    %1851 = vmatpush1.msra.mxu0 0.0
    %1852 = vmatprep.subr.mxu0 0.0
    %1853 = vmatpush1.msra.mxu0 0.0
    %1854 = vmatprep.subr.mxu0 0.0
    %1855 = vmatpush1.msra.mxu0 0.0
    %1856 = vmatprep.subr.mxu0 0.0
    %1857 = vmatpush1.msra.mxu0 0.0
    %1858 = vmatprep.subr.mxu0 0.0
    %1859 = vmatpush1.msra.mxu0 0.0
    %1860 = vmatprep.subr.mxu0 0.0
    %1861 = vmatpush1.msra.mxu0 0.0
    %1862 = vmatprep.subr.mxu0 0.0
    %1863 = vmatpush1.msra.mxu0 0.0
    %1864 = vmatprep.subr.mxu0 0.0
    %1865 = vmatpush1.msra.mxu0 0.0
    %1866 = vmatprep.subr.mxu0 0.0
    %1867 = vmatpush1.msra.mxu0 0.0
    %1868 = vmatprep.subr.mxu0 0.0
    %1869 = vmatpush1.msra.mxu0 0.0
    %1870 = vmatprep.mubr.f32.mxu0 0.0
    %1871 = vmatmul.mubr.f32.gmra.mrb[0].mxu0 %v1100
    %v1872 = vpop.f32.mrb[0].mxu0
    %v1873 = vadd.f32 %v1735, %v1872
    %v1874 = vpop.f32.mrb[0].mxu0
    %1875 = vdwg.mxu0
    %1876 = vmatprep.subr.mxu0 0.0
    %1877 = vmatpush1.msra.mxu0 %v1727
    %1878 = vmatprep.subr.mxu0 0.0
    %1879 = vmatpush1.msra.mxu0 %v1728
    %1880 = vmatprep.subr.mxu0 0.0
    %1881 = vmatpush1.msra.mxu0 %v1729
    %1882 = vmatprep.subr.mxu0 0.0
    %1883 = vmatpush1.msra.mxu0 %v1730
    %1884 = vmatprep.subr.mxu0 0.0
    %1885 = vmatpush1.msra.mxu0 0.0
    %1886 = vmatprep.subr.mxu0 0.0
    %1887 = vmatpush1.msra.mxu0 0.0
    %1888 = vmatprep.subr.mxu0 0.0
    %1889 = vmatpush1.msra.mxu0 0.0
    %1890 = vmatprep.subr.mxu0 0.0
    %1891 = vmatpush1.msra.mxu0 0.0
    %1892 = vmatprep.subr.mxu0 0.0
    %1893 = vmatpush1.msra.mxu0 0.0
    %1894 = vmatprep.subr.mxu0 0.0
    %1895 = vmatpush1.msra.mxu0 0.0
    %1896 = vmatprep.subr.mxu0 0.0
    %1897 = vmatpush1.msra.mxu0 0.0
    %1898 = vmatprep.subr.mxu0 0.0
    %1899 = vmatpush1.msra.mxu0 0.0
    %1900 = vmatprep.subr.mxu0 0.0
    %1901 = vmatpush1.msra.mxu0 0.0
    %1902 = vmatprep.subr.mxu0 0.0
    %1903 = vmatpush1.msra.mxu0 0.0
    %1904 = vmatprep.subr.mxu0 0.0
    %1905 = vmatpush1.msra.mxu0 0.0
    %1906 = vmatprep.subr.mxu0 0.0
    %1907 = vmatpush1.msra.mxu0 0.0
    %1908 = vmatprep.subr.mxu0 0.0
    %1909 = vmatpush1.msra.mxu0 0.0
    %1910 = vmatprep.subr.mxu0 0.0
    %1911 = vmatpush1.msra.mxu0 0.0
    %1912 = vmatprep.subr.mxu0 0.0
    %1913 = vmatpush1.msra.mxu0 0.0
    %1914 = vmatprep.subr.mxu0 0.0
    %1915 = vmatpush1.msra.mxu0 0.0
    %1916 = vmatprep.subr.mxu0 0.0
    %1917 = vmatpush1.msra.mxu0 0.0
    %1918 = vmatprep.subr.mxu0 0.0
    %1919 = vmatpush1.msra.mxu0 0.0
    %1920 = vmatprep.subr.mxu0 0.0
    %1921 = vmatpush1.msra.mxu0 0.0
    %1922 = vmatprep.subr.mxu0 0.0
    %1923 = vmatpush1.msra.mxu0 0.0
    %1924 = vmatprep.subr.mxu0 0.0
    %1925 = vmatpush1.msra.mxu0 0.0
    %1926 = vmatprep.subr.mxu0 0.0
    %1927 = vmatpush1.msra.mxu0 0.0
    %1928 = vmatprep.subr.mxu0 0.0
    %1929 = vmatpush1.msra.mxu0 0.0
    %1930 = vmatprep.subr.mxu0 0.0
    %1931 = vmatpush1.msra.mxu0 0.0
    %1932 = vmatprep.subr.mxu0 0.0
    %1933 = vmatpush1.msra.mxu0 0.0
    %1934 = vmatprep.subr.mxu0 0.0
    %1935 = vmatpush1.msra.mxu0 0.0
    %1936 = vmatprep.subr.mxu0 0.0
    %1937 = vmatpush1.msra.mxu0 0.0
    %1938 = vmatprep.subr.mxu0 0.0
    %1939 = vmatpush1.msra.mxu0 0.0
    %1940 = vmatprep.mubr.f32.mxu0 0.0
    %1941 = vmatmul.mubr.f32.gmra.mrb[0].mxu0 %v1205
    %v1942 = vpop.f32.mrb[0].mxu0
    %v1943 = vadd.f32 %v1735, %v1942
    %v1944 = vpop.f32.mrb[0].mxu0
    %1945 = vdwg.mxu0
    %1946 = vmatprep.subr.mxu0 0.0
    %1947 = vmatpush1.msra.mxu0 %v1727
    %1948 = vmatprep.subr.mxu0 0.0
    %1949 = vmatpush1.msra.mxu0 %v1728
    %1950 = vmatprep.subr.mxu0 0.0
    %1951 = vmatpush1.msra.mxu0 %v1729
    %1952 = vmatprep.subr.mxu0 0.0
    %1953 = vmatpush1.msra.mxu0 %v1730
    %1954 = vmatprep.subr.mxu0 0.0
    %1955 = vmatpush1.msra.mxu0 0.0
    %1956 = vmatprep.subr.mxu0 0.0
    %1957 = vmatpush1.msra.mxu0 0.0
    %1958 = vmatprep.subr.mxu0 0.0
    %1959 = vmatpush1.msra.mxu0 0.0
    %1960 = vmatprep.subr.mxu0 0.0
    %1961 = vmatpush1.msra.mxu0 0.0
    %1962 = vmatprep.subr.mxu0 0.0
    %1963 = vmatpush1.msra.mxu0 0.0
    %1964 = vmatprep.subr.mxu0 0.0
    %1965 = vmatpush1.msra.mxu0 0.0
    %1966 = vmatprep.subr.mxu0 0.0
    %1967 = vmatpush1.msra.mxu0 0.0
    %1968 = vmatprep.subr.mxu0 0.0
    %1969 = vmatpush1.msra.mxu0 0.0
    %1970 = vmatprep.subr.mxu0 0.0
    %1971 = vmatpush1.msra.mxu0 0.0
    %1972 = vmatprep.subr.mxu0 0.0
    %1973 = vmatpush1.msra.mxu0 0.0
    %1974 = vmatprep.subr.mxu0 0.0
    %1975 = vmatpush1.msra.mxu0 0.0
    %1976 = vmatprep.subr.mxu0 0.0
    %1977 = vmatpush1.msra.mxu0 0.0
    %1978 = vmatprep.subr.mxu0 0.0
    %1979 = vmatpush1.msra.mxu0 0.0
    %1980 = vmatprep.subr.mxu0 0.0
    %1981 = vmatpush1.msra.mxu0 0.0
    %1982 = vmatprep.subr.mxu0 0.0
    %1983 = vmatpush1.msra.mxu0 0.0
    %1984 = vmatprep.subr.mxu0 0.0
    %1985 = vmatpush1.msra.mxu0 0.0
    %1986 = vmatprep.subr.mxu0 0.0
    %1987 = vmatpush1.msra.mxu0 0.0
    %1988 = vmatprep.subr.mxu0 0.0
    %1989 = vmatpush1.msra.mxu0 0.0
    %1990 = vmatprep.subr.mxu0 0.0
    %1991 = vmatpush1.msra.mxu0 0.0
    %1992 = vmatprep.subr.mxu0 0.0
    %1993 = vmatpush1.msra.mxu0 0.0
    %1994 = vmatprep.subr.mxu0 0.0
    %1995 = vmatpush1.msra.mxu0 0.0
    %1996 = vmatprep.subr.mxu0 0.0
    %1997 = vmatpush1.msra.mxu0 0.0
    %1998 = vmatprep.subr.mxu0 0.0
    %1999 = vmatpush1.msra.mxu0 0.0
    %2000 = vmatprep.subr.mxu0 0.0
    %2001 = vmatpush1.msra.mxu0 0.0
    %2002 = vmatprep.subr.mxu0 0.0
    %2003 = vmatpush1.msra.mxu0 0.0
    %2004 = vmatprep.subr.mxu0 0.0
    %2005 = vmatpush1.msra.mxu0 0.0
    %2006 = vmatprep.subr.mxu0 0.0
    %2007 = vmatpush1.msra.mxu0 0.0
    %2008 = vmatprep.subr.mxu0 0.0
    %2009 = vmatpush1.msra.mxu0 0.0
    %2010 = vmatprep.mubr.f32.mxu0 0.0
    %2011 = vmatmul.mubr.f32.gmra.mrb[0].mxu0 %v1310
    %v2012 = vpop.f32.mrb[0].mxu0
    %v2013 = vadd.f32 %v1735, %v2012
    %v2014 = vpop.f32.mrb[0].mxu0
    %2015 = vdwg.mxu0
    %2016 = vmatprep.subr.mxu0 0.0
    %2017 = vmatpush1.msra.mxu0 %v1727
    %2018 = vmatprep.subr.mxu0 0.0
    %2019 = vmatpush1.msra.mxu0 %v1728
    %2020 = vmatprep.subr.mxu0 0.0
    %2021 = vmatpush1.msra.mxu0 %v1729
    %2022 = vmatprep.subr.mxu0 0.0
    %2023 = vmatpush1.msra.mxu0 %v1730
    %2024 = vmatprep.subr.mxu0 0.0
    %2025 = vmatpush1.msra.mxu0 0.0
    %2026 = vmatprep.subr.mxu0 0.0
    %2027 = vmatpush1.msra.mxu0 0.0
    %2028 = vmatprep.subr.mxu0 0.0
    %2029 = vmatpush1.msra.mxu0 0.0
    %2030 = vmatprep.subr.mxu0 0.0
    %2031 = vmatpush1.msra.mxu0 0.0
    %2032 = vmatprep.subr.mxu0 0.0
    %2033 = vmatpush1.msra.mxu0 0.0
    %2034 = vmatprep.subr.mxu0 0.0
    %2035 = vmatpush1.msra.mxu0 0.0
    %2036 = vmatprep.subr.mxu0 0.0
    %2037 = vmatpush1.msra.mxu0 0.0
    %2038 = vmatprep.subr.mxu0 0.0
    %2039 = vmatpush1.msra.mxu0 0.0
    %2040 = vmatprep.subr.mxu0 0.0
    %2041 = vmatpush1.msra.mxu0 0.0
    %2042 = vmatprep.subr.mxu0 0.0
    %2043 = vmatpush1.msra.mxu0 0.0
    %2044 = vmatprep.subr.mxu0 0.0
    %2045 = vmatpush1.msra.mxu0 0.0
    %2046 = vmatprep.subr.mxu0 0.0
    %2047 = vmatpush1.msra.mxu0 0.0
    %2048 = vmatprep.subr.mxu0 0.0
    %2049 = vmatpush1.msra.mxu0 0.0
    %2050 = vmatprep.subr.mxu0 0.0
    %2051 = vmatpush1.msra.mxu0 0.0
    %2052 = vmatprep.subr.mxu0 0.0
    %2053 = vmatpush1.msra.mxu0 0.0
    %2054 = vmatprep.subr.mxu0 0.0
    %2055 = vmatpush1.msra.mxu0 0.0
    %2056 = vmatprep.subr.mxu0 0.0
    %2057 = vmatpush1.msra.mxu0 0.0
    %2058 = vmatprep.subr.mxu0 0.0
    %2059 = vmatpush1.msra.mxu0 0.0
    %2060 = vmatprep.subr.mxu0 0.0
    %2061 = vmatpush1.msra.mxu0 0.0
    %2062 = vmatprep.subr.mxu0 0.0
    %2063 = vmatpush1.msra.mxu0 0.0
    %2064 = vmatprep.subr.mxu0 0.0
    %2065 = vmatpush1.msra.mxu0 0.0
    %2066 = vmatprep.subr.mxu0 0.0
    %2067 = vmatpush1.msra.mxu0 0.0
    %2068 = vmatprep.subr.mxu0 0.0
    %2069 = vmatpush1.msra.mxu0 0.0
    %2070 = vmatprep.subr.mxu0 0.0
    %2071 = vmatpush1.msra.mxu0 0.0
    %2072 = vmatprep.subr.mxu0 0.0
    %2073 = vmatpush1.msra.mxu0 0.0
    %2074 = vmatprep.subr.mxu0 0.0
    %2075 = vmatpush1.msra.mxu0 0.0
    %2076 = vmatprep.subr.mxu0 0.0
    %2077 = vmatpush1.msra.mxu0 0.0
    %2078 = vmatprep.subr.mxu0 0.0
    %2079 = vmatpush1.msra.mxu0 0.0
    %2080 = vmatprep.mubr.f32.mxu0 0.0
    %2081 = vmatmul.mubr.f32.gmra.mrb[0].mxu0 %v1415
    %v2082 = vpop.f32.mrb[0].mxu0
    %v2083 = vadd.f32 %v1735, %v2082
    %v2084 = vpop.f32.mrb[0].mxu0
    %2085 = vdwg.mxu0
    %2086 = vmatprep.subr.mxu0 0.0
    %2087 = vmatpush1.msra.mxu0 %v1727
    %2088 = vmatprep.subr.mxu0 0.0
    %2089 = vmatpush1.msra.mxu0 %v1728
    %2090 = vmatprep.subr.mxu0 0.0
    %2091 = vmatpush1.msra.mxu0 %v1729
    %2092 = vmatprep.subr.mxu0 0.0
    %2093 = vmatpush1.msra.mxu0 %v1730
    %2094 = vmatprep.subr.mxu0 0.0
    %2095 = vmatpush1.msra.mxu0 0.0
    %2096 = vmatprep.subr.mxu0 0.0
    %2097 = vmatpush1.msra.mxu0 0.0
    %2098 = vmatprep.subr.mxu0 0.0
    %2099 = vmatpush1.msra.mxu0 0.0
    %2100 = vmatprep.subr.mxu0 0.0
    %2101 = vmatpush1.msra.mxu0 0.0
    %2102 = vmatprep.subr.mxu0 0.0
    %2103 = vmatpush1.msra.mxu0 0.0
    %2104 = vmatprep.subr.mxu0 0.0
    %2105 = vmatpush1.msra.mxu0 0.0
    %2106 = vmatprep.subr.mxu0 0.0
    %2107 = vmatpush1.msra.mxu0 0.0
    %2108 = vmatprep.subr.mxu0 0.0
    %2109 = vmatpush1.msra.mxu0 0.0
    %2110 = vmatprep.subr.mxu0 0.0
    %2111 = vmatpush1.msra.mxu0 0.0
    %2112 = vmatprep.subr.mxu0 0.0
    %2113 = vmatpush1.msra.mxu0 0.0
    %2114 = vmatprep.subr.mxu0 0.0
    %2115 = vmatpush1.msra.mxu0 0.0
    %2116 = vmatprep.subr.mxu0 0.0
    %2117 = vmatpush1.msra.mxu0 0.0
    %2118 = vmatprep.subr.mxu0 0.0
    %2119 = vmatpush1.msra.mxu0 0.0
    %2120 = vmatprep.subr.mxu0 0.0
    %2121 = vmatpush1.msra.mxu0 0.0
    %2122 = vmatprep.subr.mxu0 0.0
    %2123 = vmatpush1.msra.mxu0 0.0
    %2124 = vmatprep.subr.mxu0 0.0
    %2125 = vmatpush1.msra.mxu0 0.0
    %2126 = vmatprep.subr.mxu0 0.0
    %2127 = vmatpush1.msra.mxu0 0.0
    %2128 = vmatprep.subr.mxu0 0.0
    %2129 = vmatpush1.msra.mxu0 0.0
    %2130 = vmatprep.subr.mxu0 0.0
    %2131 = vmatpush1.msra.mxu0 0.0
    %2132 = vmatprep.subr.mxu0 0.0
    %2133 = vmatpush1.msra.mxu0 0.0
    %2134 = vmatprep.subr.mxu0 0.0
    %2135 = vmatpush1.msra.mxu0 0.0
    %2136 = vmatprep.subr.mxu0 0.0
    %2137 = vmatpush1.msra.mxu0 0.0
    %2138 = vmatprep.subr.mxu0 0.0
    %2139 = vmatpush1.msra.mxu0 0.0
    %2140 = vmatprep.subr.mxu0 0.0
    %2141 = vmatpush1.msra.mxu0 0.0
    %2142 = vmatprep.subr.mxu0 0.0
    %2143 = vmatpush1.msra.mxu0 0.0
    %2144 = vmatprep.subr.mxu0 0.0
    %2145 = vmatpush1.msra.mxu0 0.0
    %2146 = vmatprep.subr.mxu0 0.0
    %2147 = vmatpush1.msra.mxu0 0.0
    %2148 = vmatprep.subr.mxu0 0.0
    %2149 = vmatpush1.msra.mxu0 0.0
    %2150 = vmatprep.mubr.f32.mxu0 0.0
    %2151 = vmatmul.mubr.f32.gmra.mrb[0].mxu0 %v1520
    %v2152 = vpop.f32.mrb[0].mxu0
    %v2153 = vadd.f32 %v1735, %v2152
    %v2154 = vpop.f32.mrb[0].mxu0
    %2155 = vdwg.mxu0
    %2156 = vmatprep.subr.mxu0 0.0
    %2157 = vmatpush1.msra.mxu0 %v1727
    %2158 = vmatprep.subr.mxu0 0.0
    %2159 = vmatpush1.msra.mxu0 %v1728
    %2160 = vmatprep.subr.mxu0 0.0
    %2161 = vmatpush1.msra.mxu0 %v1729
    %2162 = vmatprep.subr.mxu0 0.0
    %2163 = vmatpush1.msra.mxu0 %v1730
    %2164 = vmatprep.subr.mxu0 0.0
    %2165 = vmatpush1.msra.mxu0 0.0
    %2166 = vmatprep.subr.mxu0 0.0
    %2167 = vmatpush1.msra.mxu0 0.0
    %2168 = vmatprep.subr.mxu0 0.0
    %2169 = vmatpush1.msra.mxu0 0.0
    %2170 = vmatprep.subr.mxu0 0.0
    %2171 = vmatpush1.msra.mxu0 0.0
    %2172 = vmatprep.subr.mxu0 0.0
    %2173 = vmatpush1.msra.mxu0 0.0
    %2174 = vmatprep.subr.mxu0 0.0
    %2175 = vmatpush1.msra.mxu0 0.0
    %2176 = vmatprep.subr.mxu0 0.0
    %2177 = vmatpush1.msra.mxu0 0.0
    %2178 = vmatprep.subr.mxu0 0.0
    %2179 = vmatpush1.msra.mxu0 0.0
    %2180 = vmatprep.subr.mxu0 0.0
    %2181 = vmatpush1.msra.mxu0 0.0
    %2182 = vmatprep.subr.mxu0 0.0
    %2183 = vmatpush1.msra.mxu0 0.0
    %2184 = vmatprep.subr.mxu0 0.0
    %2185 = vmatpush1.msra.mxu0 0.0
    %2186 = vmatprep.subr.mxu0 0.0
    %2187 = vmatpush1.msra.mxu0 0.0
    %2188 = vmatprep.subr.mxu0 0.0
    %2189 = vmatpush1.msra.mxu0 0.0
    %2190 = vmatprep.subr.mxu0 0.0
    %2191 = vmatpush1.msra.mxu0 0.0
    %2192 = vmatprep.subr.mxu0 0.0
    %2193 = vmatpush1.msra.mxu0 0.0
    %2194 = vmatprep.subr.mxu0 0.0
    %2195 = vmatpush1.msra.mxu0 0.0
    %2196 = vmatprep.subr.mxu0 0.0
    %2197 = vmatpush1.msra.mxu0 0.0
    %2198 = vmatprep.subr.mxu0 0.0
    %2199 = vmatpush1.msra.mxu0 0.0
    %2200 = vmatprep.subr.mxu0 0.0
    %2201 = vmatpush1.msra.mxu0 0.0
    %2202 = vmatprep.subr.mxu0 0.0
    %2203 = vmatpush1.msra.mxu0 0.0
    %2204 = vmatprep.subr.mxu0 0.0
    %2205 = vmatpush1.msra.mxu0 0.0
    %2206 = vmatprep.subr.mxu0 0.0
    %2207 = vmatpush1.msra.mxu0 0.0
    %2208 = vmatprep.subr.mxu0 0.0
    %2209 = vmatpush1.msra.mxu0 0.0
    %2210 = vmatprep.subr.mxu0 0.0
    %2211 = vmatpush1.msra.mxu0 0.0
    %2212 = vmatprep.subr.mxu0 0.0
    %2213 = vmatpush1.msra.mxu0 0.0
    %2214 = vmatprep.subr.mxu0 0.0
    %2215 = vmatpush1.msra.mxu0 0.0
    %2216 = vmatprep.subr.mxu0 0.0
    %2217 = vmatpush1.msra.mxu0 0.0
    %2218 = vmatprep.subr.mxu0 0.0
    %2219 = vmatpush1.msra.mxu0 0.0
    %2220 = vmatprep.mubr.f32.mxu0 0.0
    %2221 = vmatmul.mubr.f32.gmra.mrb[0].mxu0 %v1625
    %v2222 = vpop.f32.mrb[0].mxu0
    %v2223 = vadd.f32 %v1735, %v2222
    %v2224 = vpop.f32.mrb[0].mxu0
    %2225 = vdwg.mxu0
    %2227 = vrot.lane.b32.xlu0 %v1726, 64
    %v2228 = vpop.permute.xlu0 %2227
    %v2229 = vsel %vm876, %v2228, 0
    %2231 = vmatprep.subr.mxu0 0.0
    %2232 = vmatpush1.msra.mxu0 %v1727
    %2233 = vmatprep.subr.mxu0 0.0
    %2234 = vmatpush1.msra.mxu0 %v1728
    %2235 = vmatprep.subr.mxu0 0.0
    %2236 = vmatpush1.msra.mxu0 %v1729
    %2237 = vmatprep.subr.mxu0 0.0
    %2238 = vmatpush1.msra.mxu0 %v1730
    %2239 = vmatprep.subr.mxu0 0.0
    %2240 = vmatpush1.msra.mxu0 0.0
    %2241 = vmatprep.subr.mxu0 0.0
    %2242 = vmatpush1.msra.mxu0 0.0
    %2243 = vmatprep.subr.mxu0 0.0
    %2244 = vmatpush1.msra.mxu0 0.0
    %2245 = vmatprep.subr.mxu0 0.0
    %2246 = vmatpush1.msra.mxu0 0.0
    %2247 = vmatprep.subr.mxu0 0.0
    %2248 = vmatpush1.msra.mxu0 0.0
    %2249 = vmatprep.subr.mxu0 0.0
    %2250 = vmatpush1.msra.mxu0 0.0
    %2251 = vmatprep.subr.mxu0 0.0
    %2252 = vmatpush1.msra.mxu0 0.0
    %2253 = vmatprep.subr.mxu0 0.0
    %2254 = vmatpush1.msra.mxu0 0.0
    %2255 = vmatprep.subr.mxu0 0.0
    %2256 = vmatpush1.msra.mxu0 0.0
    %2257 = vmatprep.subr.mxu0 0.0
    %2258 = vmatpush1.msra.mxu0 0.0
    %2259 = vmatprep.subr.mxu0 0.0
    %2260 = vmatpush1.msra.mxu0 0.0
    %2261 = vmatprep.subr.mxu0 0.0
    %2262 = vmatpush1.msra.mxu0 0.0
    %2263 = vmatprep.subr.mxu0 0.0
    %2264 = vmatpush1.msra.mxu0 0.0
    %2265 = vmatprep.subr.mxu0 0.0
    %2266 = vmatpush1.msra.mxu0 0.0
    %2267 = vmatprep.subr.mxu0 0.0
    %2268 = vmatpush1.msra.mxu0 0.0
    %2269 = vmatprep.subr.mxu0 0.0
    %2270 = vmatpush1.msra.mxu0 0.0
    %2271 = vmatprep.subr.mxu0 0.0
    %2272 = vmatpush1.msra.mxu0 0.0
    %2273 = vmatprep.subr.mxu0 0.0
    %2274 = vmatpush1.msra.mxu0 0.0
    %2275 = vmatprep.subr.mxu0 0.0
    %2276 = vmatpush1.msra.mxu0 0.0
    %2277 = vmatprep.subr.mxu0 0.0
    %2278 = vmatpush1.msra.mxu0 0.0
    %2279 = vmatprep.subr.mxu0 0.0
    %2280 = vmatpush1.msra.mxu0 0.0
    %2281 = vmatprep.subr.mxu0 0.0
    %2282 = vmatpush1.msra.mxu0 0.0
    %2283 = vmatprep.subr.mxu0 0.0
    %2284 = vmatpush1.msra.mxu0 0.0
    %2285 = vmatprep.subr.mxu0 0.0
    %2286 = vmatpush1.msra.mxu0 0.0
    %2287 = vmatprep.subr.mxu0 0.0
    %2288 = vmatpush1.msra.mxu0 0.0
    %2289 = vmatprep.subr.mxu0 0.0
    %2290 = vmatpush1.msra.mxu0 0.0
    %2291 = vmatprep.subr.mxu0 0.0
    %2292 = vmatpush1.msra.mxu0 0.0
    %2293 = vmatprep.subr.mxu0 0.0
    %2294 = vmatpush1.msra.mxu0 0.0
    %2295 = vmatprep.mubr.f32.mxu0 0.0
    %2296 = vmatmul.mubr.f32.gmra.mrb[0].mxu0 %v2229
    %v2297 = vpop.f32.mrb[0].mxu0
    %v2298 = vadd.f32 %v1735, %v2297
    %v2299 = vpop.f32.mrb[0].mxu0
    %2300 = vdwg.mxu0
    %s2301 = scalar_lea.vmem %s6, 32
    %v2302 = vld [vmem:[%s2301] sm:$0xff]
    %v2303 = vld [vmem:[%s2301 + $0x8] sm:$0xff]
    %v2304 = vld [vmem:[%s2301 + $0x10] sm:$0xff]
    %v2305 = vld [vmem:[%s2301 + $0x18] sm:$0xff]
    %v2306 = vld [vmem:[#allocation4 + $0x3] sm:$0x1]
    %v2307 = vrot.slane %v138, 2
    %v2308 = vsel %vm876, %v2307, 0
    %2310 = vmatprep.subr.mxu0 0.0
    %2311 = vmatpush1.msra.mxu0 %v2302
    %2312 = vmatprep.subr.mxu0 0.0
    %2313 = vmatpush1.msra.mxu0 %v2303
    %2314 = vmatprep.subr.mxu0 0.0
    %2315 = vmatpush1.msra.mxu0 %v2304
    %2316 = vmatprep.subr.mxu0 0.0
    %2317 = vmatpush1.msra.mxu0 %v2305
    %2318 = vmatprep.subr.mxu0 0.0
    %2319 = vmatpush1.msra.mxu0 0.0
    %2320 = vmatprep.subr.mxu0 0.0
    %2321 = vmatpush1.msra.mxu0 0.0
    %2322 = vmatprep.subr.mxu0 0.0
    %2323 = vmatpush1.msra.mxu0 0.0
    %2324 = vmatprep.subr.mxu0 0.0
    %2325 = vmatpush1.msra.mxu0 0.0
    %2326 = vmatprep.subr.mxu0 0.0
    %2327 = vmatpush1.msra.mxu0 0.0
    %2328 = vmatprep.subr.mxu0 0.0
    %2329 = vmatpush1.msra.mxu0 0.0
    %2330 = vmatprep.subr.mxu0 0.0
    %2331 = vmatpush1.msra.mxu0 0.0
    %2332 = vmatprep.subr.mxu0 0.0
    %2333 = vmatpush1.msra.mxu0 0.0
    %2334 = vmatprep.subr.mxu0 0.0
    %2335 = vmatpush1.msra.mxu0 0.0
    %2336 = vmatprep.subr.mxu0 0.0
    %2337 = vmatpush1.msra.mxu0 0.0
    %2338 = vmatprep.subr.mxu0 0.0
    %2339 = vmatpush1.msra.mxu0 0.0
    %2340 = vmatprep.subr.mxu0 0.0
    %2341 = vmatpush1.msra.mxu0 0.0
    %2342 = vmatprep.subr.mxu0 0.0
    %2343 = vmatpush1.msra.mxu0 0.0
    %2344 = vmatprep.subr.mxu0 0.0
    %2345 = vmatpush1.msra.mxu0 0.0
    %2346 = vmatprep.subr.mxu0 0.0
    %2347 = vmatpush1.msra.mxu0 0.0
    %2348 = vmatprep.subr.mxu0 0.0
    %2349 = vmatpush1.msra.mxu0 0.0
    %2350 = vmatprep.subr.mxu0 0.0
    %2351 = vmatpush1.msra.mxu0 0.0
    %2352 = vmatprep.subr.mxu0 0.0
    %2353 = vmatpush1.msra.mxu0 0.0
    %2354 = vmatprep.subr.mxu0 0.0
    %2355 = vmatpush1.msra.mxu0 0.0
    %2356 = vmatprep.subr.mxu0 0.0
    %2357 = vmatpush1.msra.mxu0 0.0
    %2358 = vmatprep.subr.mxu0 0.0
    %2359 = vmatpush1.msra.mxu0 0.0
    %2360 = vmatprep.subr.mxu0 0.0
    %2361 = vmatpush1.msra.mxu0 0.0
    %2362 = vmatprep.subr.mxu0 0.0
    %2363 = vmatpush1.msra.mxu0 0.0
    %2364 = vmatprep.subr.mxu0 0.0
    %2365 = vmatpush1.msra.mxu0 0.0
    %2366 = vmatprep.subr.mxu0 0.0
    %2367 = vmatpush1.msra.mxu0 0.0
    %2368 = vmatprep.subr.mxu0 0.0
    %2369 = vmatpush1.msra.mxu0 0.0
    %2370 = vmatprep.subr.mxu0 0.0
    %2371 = vmatpush1.msra.mxu0 0.0
    %2372 = vmatprep.subr.mxu0 0.0
    %2373 = vmatpush1.msra.mxu0 0.0
    %2374 = vmatprep.mubr.f32.mxu0 0.0
    %2375 = vmatmul.mubr.f32.gmra.mrb[0].mxu0 %v2308
    %v2376 = vpop.f32.mrb[0].mxu0
    %v2377 = vadd.f32 0.0, %v2376
    %v2378 = vpop.f32.mrb[0].mxu0
    %2379 = vdwg.mxu0
    %v2380 = vadd.f32 %v1803, %v2377
    %v2381 = vxor.u32 %v2380, 2147483648
    %v2382 = vmul.f32 %v2381, 1.442695
    %v2383 = vpow.pop %v2382
    %v2384 = vadd.f32 %v2383, 1.0
    %v2385 = vrcp.pop %v2384
    %v2386 = vmul.f32 1.0, %v2385
    %v2387 = vlaneseq
    %v2388 = vshrl.u32 %v2387, 7
    %v2389 = vsub.s32 0, %v2388
    %v2390 = vrot.slane %v2306, %v2389
    %2392 = vrot.lane.b32.xlu0 %v2390, 64
    %v2393 = vpop.permute.xlu0 %2392
    %v2395 = vadd.f32 %v2377, %v2393
    %2397 = vrot.lane.b32.xlu0 %v2395, 64
    %v2398 = vpop.permute.xlu0 %2397
    %v2400 = vmul.f32 %v2386, %v2398
    %2402 = vrot.lane.b32.xlu0 %v2400, 64
    %v2403 = vpop.permute.xlu0 %2402
    %v2405 = vadd.f32 %v1803, %v2403
    %v2406 = vtanh.pop %v2405
    %v2408 = vrot.slane %v2406, 6
    %2409 = vrot.lane.b32.xlu0 %v2408, 64
    %v2410 = vpop.permute.xlu0 %2409
    %v2412 = vsub.f32 %v138, %v2410
    %v2414 = vrot.slane %v2412, 2
    %2415 = vrot.lane.b32.xlu0 %v2414, 32
    %v2416 = vpop.permute.xlu0 %2415
    %v2418 = vmul.f32 %v2386, %v2416
    %2420 = vrot.lane.b32.xlu0 %v2418, 32
    %v2421 = vpop.permute.xlu0 %2420
    %v2423 = vadd.f32 %v2406, %v2421
    %2425 = vrot.lane.b32.xlu0 %v2423, 64
    %v2426 = vpop.permute.xlu0 %2425
    %v2427 = vsel %vm876, %v2426, 0
    %2429 = vmatprep.subr.mxu0 0.0
    %2430 = vmatpush1.msra.mxu0 %v2302
    %2431 = vmatprep.subr.mxu0 0.0
    %2432 = vmatpush1.msra.mxu0 %v2303
    %2433 = vmatprep.subr.mxu0 0.0
    %2434 = vmatpush1.msra.mxu0 %v2304
    %2435 = vmatprep.subr.mxu0 0.0
    %2436 = vmatpush1.msra.mxu0 %v2305
    %2437 = vmatprep.subr.mxu0 0.0
    %2438 = vmatpush1.msra.mxu0 0.0
    %2439 = vmatprep.subr.mxu0 0.0
    %2440 = vmatpush1.msra.mxu0 0.0
    %2441 = vmatprep.subr.mxu0 0.0
    %2442 = vmatpush1.msra.mxu0 0.0
    %2443 = vmatprep.subr.mxu0 0.0
    %2444 = vmatpush1.msra.mxu0 0.0
    %2445 = vmatprep.subr.mxu0 0.0
    %2446 = vmatpush1.msra.mxu0 0.0
    %2447 = vmatprep.subr.mxu0 0.0
    %2448 = vmatpush1.msra.mxu0 0.0
    %2449 = vmatprep.subr.mxu0 0.0
    %2450 = vmatpush1.msra.mxu0 0.0
    %2451 = vmatprep.subr.mxu0 0.0
    %2452 = vmatpush1.msra.mxu0 0.0
    %2453 = vmatprep.subr.mxu0 0.0
    %2454 = vmatpush1.msra.mxu0 0.0
    %2455 = vmatprep.subr.mxu0 0.0
    %2456 = vmatpush1.msra.mxu0 0.0
    %2457 = vmatprep.subr.mxu0 0.0
    %2458 = vmatpush1.msra.mxu0 0.0
    %2459 = vmatprep.subr.mxu0 0.0
    %2460 = vmatpush1.msra.mxu0 0.0
    %2461 = vmatprep.subr.mxu0 0.0
    %2462 = vmatpush1.msra.mxu0 0.0
    %2463 = vmatprep.subr.mxu0 0.0
    %2464 = vmatpush1.msra.mxu0 0.0
    %2465 = vmatprep.subr.mxu0 0.0
    %2466 = vmatpush1.msra.mxu0 0.0
    %2467 = vmatprep.subr.mxu0 0.0
    %2468 = vmatpush1.msra.mxu0 0.0
    %2469 = vmatprep.subr.mxu0 0.0
    %2470 = vmatpush1.msra.mxu0 0.0
    %2471 = vmatprep.subr.mxu0 0.0
    %2472 = vmatpush1.msra.mxu0 0.0
    %2473 = vmatprep.subr.mxu0 0.0
    %2474 = vmatpush1.msra.mxu0 0.0
    %2475 = vmatprep.subr.mxu0 0.0
    %2476 = vmatpush1.msra.mxu0 0.0
    %2477 = vmatprep.subr.mxu0 0.0
    %2478 = vmatpush1.msra.mxu0 0.0
    %2479 = vmatprep.subr.mxu0 0.0
    %2480 = vmatpush1.msra.mxu0 0.0
    %2481 = vmatprep.subr.mxu0 0.0
    %2482 = vmatpush1.msra.mxu0 0.0
    %2483 = vmatprep.subr.mxu0 0.0
    %2484 = vmatpush1.msra.mxu0 0.0
    %2485 = vmatprep.subr.mxu0 0.0
    %2486 = vmatpush1.msra.mxu0 0.0
    %2487 = vmatprep.subr.mxu0 0.0
    %2488 = vmatpush1.msra.mxu0 0.0
    %2489 = vmatprep.subr.mxu0 0.0
    %2490 = vmatpush1.msra.mxu0 0.0
    %2491 = vmatprep.subr.mxu0 0.0
    %2492 = vmatpush1.msra.mxu0 0.0
    %2493 = vmatprep.mubr.f32.mxu0 0.0
    %2494 = vmatmul.mubr.f32.gmra.mrb[0].mxu0 %v2427
    %v2495 = vpop.f32.mrb[0].mxu0
    %v2496 = vadd.f32 0.0, %v2495
    %v2497 = vpop.f32.mrb[0].mxu0
    %2498 = vdwg.mxu0
    %v2499 = vadd.f32 %v1873, %v2496
    %v2500 = vxor.u32 %v2499, 2147483648
    %v2501 = vmul.f32 %v2500, 1.442695
    %v2502 = vpow.pop %v2501
    %v2503 = vadd.f32 %v2502, 1.0
    %v2504 = vrcp.pop %v2503
    %v2505 = vmul.f32 1.0, %v2504
    %v2506 = vadd.f32 %v2496, %v2393
    %2508 = vrot.lane.b32.xlu0 %v2506, 64
    %v2509 = vpop.permute.xlu0 %2508
    %v2511 = vmul.f32 %v2505, %v2509
    %2513 = vrot.lane.b32.xlu0 %v2511, 64
    %v2514 = vpop.permute.xlu0 %2513
    %v2516 = vadd.f32 %v1873, %v2514
    %v2517 = vtanh.pop %v2516
    %v2518 = vsub.f32 %v2423, %v2517
    %2520 = vrot.lane.b32.xlu0 %v2518, 96
    %v2521 = vpop.permute.xlu0 %2520
    %v2523 = vmul.f32 %v2505, %v2521
    %2525 = vrot.lane.b32.xlu0 %v2523, 32
    %v2526 = vpop.permute.xlu0 %2525
    %v2528 = vadd.f32 %v2517, %v2526
    %2530 = vrot.lane.b32.xlu0 %v2528, 64
    %v2531 = vpop.permute.xlu0 %2530
    %v2532 = vsel %vm876, %v2531, 0
    %2534 = vmatprep.subr.mxu0 0.0
    %2535 = vmatpush1.msra.mxu0 %v2302
    %2536 = vmatprep.subr.mxu0 0.0
    %2537 = vmatpush1.msra.mxu0 %v2303
    %2538 = vmatprep.subr.mxu0 0.0
    %2539 = vmatpush1.msra.mxu0 %v2304
    %2540 = vmatprep.subr.mxu0 0.0
    %2541 = vmatpush1.msra.mxu0 %v2305
    %2542 = vmatprep.subr.mxu0 0.0
    %2543 = vmatpush1.msra.mxu0 0.0
    %2544 = vmatprep.subr.mxu0 0.0
    %2545 = vmatpush1.msra.mxu0 0.0
    %2546 = vmatprep.subr.mxu0 0.0
    %2547 = vmatpush1.msra.mxu0 0.0
    %2548 = vmatprep.subr.mxu0 0.0
    %2549 = vmatpush1.msra.mxu0 0.0
    %2550 = vmatprep.subr.mxu0 0.0
    %2551 = vmatpush1.msra.mxu0 0.0
    %2552 = vmatprep.subr.mxu0 0.0
    %2553 = vmatpush1.msra.mxu0 0.0
    %2554 = vmatprep.subr.mxu0 0.0
    %2555 = vmatpush1.msra.mxu0 0.0
    %2556 = vmatprep.subr.mxu0 0.0
    %2557 = vmatpush1.msra.mxu0 0.0
    %2558 = vmatprep.subr.mxu0 0.0
    %2559 = vmatpush1.msra.mxu0 0.0
    %2560 = vmatprep.subr.mxu0 0.0
    %2561 = vmatpush1.msra.mxu0 0.0
    %2562 = vmatprep.subr.mxu0 0.0
    %2563 = vmatpush1.msra.mxu0 0.0
    %2564 = vmatprep.subr.mxu0 0.0
    %2565 = vmatpush1.msra.mxu0 0.0
    %2566 = vmatprep.subr.mxu0 0.0
    %2567 = vmatpush1.msra.mxu0 0.0
    %2568 = vmatprep.subr.mxu0 0.0
    %2569 = vmatpush1.msra.mxu0 0.0
    %2570 = vmatprep.subr.mxu0 0.0
    %2571 = vmatpush1.msra.mxu0 0.0
    %2572 = vmatprep.subr.mxu0 0.0
    %2573 = vmatpush1.msra.mxu0 0.0
    %2574 = vmatprep.subr.mxu0 0.0
    %2575 = vmatpush1.msra.mxu0 0.0
    %2576 = vmatprep.subr.mxu0 0.0
    %2577 = vmatpush1.msra.mxu0 0.0
    %2578 = vmatprep.subr.mxu0 0.0
    %2579 = vmatpush1.msra.mxu0 0.0
    %2580 = vmatprep.subr.mxu0 0.0
    %2581 = vmatpush1.msra.mxu0 0.0
    %2582 = vmatprep.subr.mxu0 0.0
    %2583 = vmatpush1.msra.mxu0 0.0
    %2584 = vmatprep.subr.mxu0 0.0
    %2585 = vmatpush1.msra.mxu0 0.0
    %2586 = vmatprep.subr.mxu0 0.0
    %2587 = vmatpush1.msra.mxu0 0.0
    %2588 = vmatprep.subr.mxu0 0.0
    %2589 = vmatpush1.msra.mxu0 0.0
    %2590 = vmatprep.subr.mxu0 0.0
    %2591 = vmatpush1.msra.mxu0 0.0
    %2592 = vmatprep.subr.mxu0 0.0
    %2593 = vmatpush1.msra.mxu0 0.0
    %2594 = vmatprep.subr.mxu0 0.0
    %2595 = vmatpush1.msra.mxu0 0.0
    %2596 = vmatprep.subr.mxu0 0.0
    %2597 = vmatpush1.msra.mxu0 0.0
    %2598 = vmatprep.mubr.f32.mxu0 0.0
    %2599 = vmatmul.mubr.f32.gmra.mrb[0].mxu0 %v2532
    %v2600 = vpop.f32.mrb[0].mxu0
    %v2601 = vadd.f32 0.0, %v2600
    %v2602 = vpop.f32.mrb[0].mxu0
    %2603 = vdwg.mxu0
    %v2604 = vadd.f32 %v1943, %v2601
    %v2605 = vxor.u32 %v2604, 2147483648
    %v2606 = vmul.f32 %v2605, 1.442695
    %v2607 = vpow.pop %v2606
    %v2608 = vadd.f32 %v2607, 1.0
    %v2609 = vrcp.pop %v2608
    %v2610 = vmul.f32 1.0, %v2609
    %v2611 = vadd.f32 %v2601, %v2393
    %2613 = vrot.lane.b32.xlu0 %v2611, 64
    %v2614 = vpop.permute.xlu0 %2613
    %v2616 = vmul.f32 %v2610, %v2614
    %2618 = vrot.lane.b32.xlu0 %v2616, 64
    %v2619 = vpop.permute.xlu0 %2618
    %v2621 = vadd.f32 %v1943, %v2619
    %v2622 = vtanh.pop %v2621
    %v2623 = vsub.f32 %v2528, %v2622
    %2625 = vrot.lane.b32.xlu0 %v2623, 96
    %v2626 = vpop.permute.xlu0 %2625
    %v2628 = vmul.f32 %v2610, %v2626
    %2630 = vrot.lane.b32.xlu0 %v2628, 32
    %v2631 = vpop.permute.xlu0 %2630
    %v2633 = vadd.f32 %v2622, %v2631
    %2635 = vrot.lane.b32.xlu0 %v2633, 64
    %v2636 = vpop.permute.xlu0 %2635
    %v2637 = vsel %vm876, %v2636, 0
    %2639 = vmatprep.subr.mxu0 0.0
    %2640 = vmatpush1.msra.mxu0 %v2302
    %2641 = vmatprep.subr.mxu0 0.0
    %2642 = vmatpush1.msra.mxu0 %v2303
    %2643 = vmatprep.subr.mxu0 0.0
    %2644 = vmatpush1.msra.mxu0 %v2304
    %2645 = vmatprep.subr.mxu0 0.0
    %2646 = vmatpush1.msra.mxu0 %v2305
    %2647 = vmatprep.subr.mxu0 0.0
    %2648 = vmatpush1.msra.mxu0 0.0
    %2649 = vmatprep.subr.mxu0 0.0
    %2650 = vmatpush1.msra.mxu0 0.0
    %2651 = vmatprep.subr.mxu0 0.0
    %2652 = vmatpush1.msra.mxu0 0.0
    %2653 = vmatprep.subr.mxu0 0.0
    %2654 = vmatpush1.msra.mxu0 0.0
    %2655 = vmatprep.subr.mxu0 0.0
    %2656 = vmatpush1.msra.mxu0 0.0
    %2657 = vmatprep.subr.mxu0 0.0
    %2658 = vmatpush1.msra.mxu0 0.0
    %2659 = vmatprep.subr.mxu0 0.0
    %2660 = vmatpush1.msra.mxu0 0.0
    %2661 = vmatprep.subr.mxu0 0.0
    %2662 = vmatpush1.msra.mxu0 0.0
    %2663 = vmatprep.subr.mxu0 0.0
    %2664 = vmatpush1.msra.mxu0 0.0
    %2665 = vmatprep.subr.mxu0 0.0
    %2666 = vmatpush1.msra.mxu0 0.0
    %2667 = vmatprep.subr.mxu0 0.0
    %2668 = vmatpush1.msra.mxu0 0.0
    %2669 = vmatprep.subr.mxu0 0.0
    %2670 = vmatpush1.msra.mxu0 0.0
    %2671 = vmatprep.subr.mxu0 0.0
    %2672 = vmatpush1.msra.mxu0 0.0
    %2673 = vmatprep.subr.mxu0 0.0
    %2674 = vmatpush1.msra.mxu0 0.0
    %2675 = vmatprep.subr.mxu0 0.0
    %2676 = vmatpush1.msra.mxu0 0.0
    %2677 = vmatprep.subr.mxu0 0.0
    %2678 = vmatpush1.msra.mxu0 0.0
    %2679 = vmatprep.subr.mxu0 0.0
    %2680 = vmatpush1.msra.mxu0 0.0
    %2681 = vmatprep.subr.mxu0 0.0
    %2682 = vmatpush1.msra.mxu0 0.0
    %2683 = vmatprep.subr.mxu0 0.0
    %2684 = vmatpush1.msra.mxu0 0.0
    %2685 = vmatprep.subr.mxu0 0.0
    %2686 = vmatpush1.msra.mxu0 0.0
    %2687 = vmatprep.subr.mxu0 0.0
    %2688 = vmatpush1.msra.mxu0 0.0
    %2689 = vmatprep.subr.mxu0 0.0
    %2690 = vmatpush1.msra.mxu0 0.0
    %2691 = vmatprep.subr.mxu0 0.0
    %2692 = vmatpush1.msra.mxu0 0.0
    %2693 = vmatprep.subr.mxu0 0.0
    %2694 = vmatpush1.msra.mxu0 0.0
    %2695 = vmatprep.subr.mxu0 0.0
    %2696 = vmatpush1.msra.mxu0 0.0
    %2697 = vmatprep.subr.mxu0 0.0
    %2698 = vmatpush1.msra.mxu0 0.0
    %2699 = vmatprep.subr.mxu0 0.0
    %2700 = vmatpush1.msra.mxu0 0.0
    %2701 = vmatprep.subr.mxu0 0.0
    %2702 = vmatpush1.msra.mxu0 0.0
    %2703 = vmatprep.mubr.f32.mxu0 0.0
    %2704 = vmatmul.mubr.f32.gmra.mrb[0].mxu0 %v2637
    %v2705 = vpop.f32.mrb[0].mxu0
    %v2706 = vadd.f32 0.0, %v2705
    %v2707 = vpop.f32.mrb[0].mxu0
    %2708 = vdwg.mxu0
    %v2709 = vadd.f32 %v2013, %v2706
    %v2710 = vxor.u32 %v2709, 2147483648
    %v2711 = vmul.f32 %v2710, 1.442695
    %v2712 = vpow.pop %v2711
    %v2713 = vadd.f32 %v2712, 1.0
    %v2714 = vrcp.pop %v2713
    %v2715 = vmul.f32 1.0, %v2714
    %v2716 = vadd.f32 %v2706, %v2393
    %2718 = vrot.lane.b32.xlu0 %v2716, 64
    %v2719 = vpop.permute.xlu0 %2718
    %v2721 = vmul.f32 %v2715, %v2719
    %2723 = vrot.lane.b32.xlu0 %v2721, 64
    %v2724 = vpop.permute.xlu0 %2723
    %v2726 = vadd.f32 %v2013, %v2724
    %v2727 = vtanh.pop %v2726
    %v2728 = vsub.f32 %v2633, %v2727
    %2730 = vrot.lane.b32.xlu0 %v2728, 96
    %v2731 = vpop.permute.xlu0 %2730
    %v2733 = vmul.f32 %v2715, %v2731
    %2735 = vrot.lane.b32.xlu0 %v2733, 32
    %v2736 = vpop.permute.xlu0 %2735
    %v2738 = vadd.f32 %v2727, %v2736
    %2740 = vrot.lane.b32.xlu0 %v2738, 64
    %v2741 = vpop.permute.xlu0 %2740
    %v2742 = vsel %vm876, %v2741, 0
    %2744 = vmatprep.subr.mxu0 0.0
    %2745 = vmatpush1.msra.mxu0 %v2302
    %2746 = vmatprep.subr.mxu0 0.0
    %2747 = vmatpush1.msra.mxu0 %v2303
    %2748 = vmatprep.subr.mxu0 0.0
    %2749 = vmatpush1.msra.mxu0 %v2304
    %2750 = vmatprep.subr.mxu0 0.0
    %2751 = vmatpush1.msra.mxu0 %v2305
    %2752 = vmatprep.subr.mxu0 0.0
    %2753 = vmatpush1.msra.mxu0 0.0
    %2754 = vmatprep.subr.mxu0 0.0
    %2755 = vmatpush1.msra.mxu0 0.0
    %2756 = vmatprep.subr.mxu0 0.0
    %2757 = vmatpush1.msra.mxu0 0.0
    %2758 = vmatprep.subr.mxu0 0.0
    %2759 = vmatpush1.msra.mxu0 0.0
    %2760 = vmatprep.subr.mxu0 0.0
    %2761 = vmatpush1.msra.mxu0 0.0
    %2762 = vmatprep.subr.mxu0 0.0
    %2763 = vmatpush1.msra.mxu0 0.0
    %2764 = vmatprep.subr.mxu0 0.0
    %2765 = vmatpush1.msra.mxu0 0.0
    %2766 = vmatprep.subr.mxu0 0.0
    %2767 = vmatpush1.msra.mxu0 0.0
    %2768 = vmatprep.subr.mxu0 0.0
    %2769 = vmatpush1.msra.mxu0 0.0
    %2770 = vmatprep.subr.mxu0 0.0
    %2771 = vmatpush1.msra.mxu0 0.0
    %2772 = vmatprep.subr.mxu0 0.0
    %2773 = vmatpush1.msra.mxu0 0.0
    %2774 = vmatprep.subr.mxu0 0.0
    %2775 = vmatpush1.msra.mxu0 0.0
    %2776 = vmatprep.subr.mxu0 0.0
    %2777 = vmatpush1.msra.mxu0 0.0
    %2778 = vmatprep.subr.mxu0 0.0
    %2779 = vmatpush1.msra.mxu0 0.0
    %2780 = vmatprep.subr.mxu0 0.0
    %2781 = vmatpush1.msra.mxu0 0.0
    %2782 = vmatprep.subr.mxu0 0.0
    %2783 = vmatpush1.msra.mxu0 0.0
    %2784 = vmatprep.subr.mxu0 0.0
    %2785 = vmatpush1.msra.mxu0 0.0
    %2786 = vmatprep.subr.mxu0 0.0
    %2787 = vmatpush1.msra.mxu0 0.0
    %2788 = vmatprep.subr.mxu0 0.0
    %2789 = vmatpush1.msra.mxu0 0.0
    %2790 = vmatprep.subr.mxu0 0.0
    %2791 = vmatpush1.msra.mxu0 0.0
    %2792 = vmatprep.subr.mxu0 0.0
    %2793 = vmatpush1.msra.mxu0 0.0
    %2794 = vmatprep.subr.mxu0 0.0
    %2795 = vmatpush1.msra.mxu0 0.0
    %2796 = vmatprep.subr.mxu0 0.0
    %2797 = vmatpush1.msra.mxu0 0.0
    %2798 = vmatprep.subr.mxu0 0.0
    %2799 = vmatpush1.msra.mxu0 0.0
    %2800 = vmatprep.subr.mxu0 0.0
    %2801 = vmatpush1.msra.mxu0 0.0
    %2802 = vmatprep.subr.mxu0 0.0
    %2803 = vmatpush1.msra.mxu0 0.0
    %2804 = vmatprep.subr.mxu0 0.0
    %2805 = vmatpush1.msra.mxu0 0.0
    %2806 = vmatprep.subr.mxu0 0.0
    %2807 = vmatpush1.msra.mxu0 0.0
    %2808 = vmatprep.mubr.f32.mxu0 0.0
    %2809 = vmatmul.mubr.f32.gmra.mrb[0].mxu0 %v2742
    %v2810 = vpop.f32.mrb[0].mxu0
    %v2811 = vadd.f32 0.0, %v2810
    %v2812 = vpop.f32.mrb[0].mxu0
    %2813 = vdwg.mxu0
    %v2814 = vadd.f32 %v2083, %v2811
    %v2815 = vxor.u32 %v2814, 2147483648
    %v2816 = vmul.f32 %v2815, 1.442695
    %v2817 = vpow.pop %v2816
    %v2818 = vadd.f32 %v2817, 1.0
    %v2819 = vrcp.pop %v2818
    %v2820 = vmul.f32 1.0, %v2819
    %v2821 = vadd.f32 %v2811, %v2393
    %2823 = vrot.lane.b32.xlu0 %v2821, 64
    %v2824 = vpop.permute.xlu0 %2823
    %v2826 = vmul.f32 %v2820, %v2824
    %2828 = vrot.lane.b32.xlu0 %v2826, 64
    %v2829 = vpop.permute.xlu0 %2828
    %v2831 = vadd.f32 %v2083, %v2829
    %v2832 = vtanh.pop %v2831
    %v2833 = vsub.f32 %v2738, %v2832
    %2835 = vrot.lane.b32.xlu0 %v2833, 96
    %v2836 = vpop.permute.xlu0 %2835
    %v2838 = vmul.f32 %v2820, %v2836
    %2840 = vrot.lane.b32.xlu0 %v2838, 32
    %v2841 = vpop.permute.xlu0 %2840
    %v2843 = vadd.f32 %v2832, %v2841
    %2845 = vrot.lane.b32.xlu0 %v2843, 64
    %v2846 = vpop.permute.xlu0 %2845
    %v2847 = vsel %vm876, %v2846, 0
    %2849 = vmatprep.subr.mxu0 0.0
    %2850 = vmatpush1.msra.mxu0 %v2302
    %2851 = vmatprep.subr.mxu0 0.0
    %2852 = vmatpush1.msra.mxu0 %v2303
    %2853 = vmatprep.subr.mxu0 0.0
    %2854 = vmatpush1.msra.mxu0 %v2304
    %2855 = vmatprep.subr.mxu0 0.0
    %2856 = vmatpush1.msra.mxu0 %v2305
    %2857 = vmatprep.subr.mxu0 0.0
    %2858 = vmatpush1.msra.mxu0 0.0
    %2859 = vmatprep.subr.mxu0 0.0
    %2860 = vmatpush1.msra.mxu0 0.0
    %2861 = vmatprep.subr.mxu0 0.0
    %2862 = vmatpush1.msra.mxu0 0.0
    %2863 = vmatprep.subr.mxu0 0.0
    %2864 = vmatpush1.msra.mxu0 0.0
    %2865 = vmatprep.subr.mxu0 0.0
    %2866 = vmatpush1.msra.mxu0 0.0
    %2867 = vmatprep.subr.mxu0 0.0
    %2868 = vmatpush1.msra.mxu0 0.0
    %2869 = vmatprep.subr.mxu0 0.0
    %2870 = vmatpush1.msra.mxu0 0.0
    %2871 = vmatprep.subr.mxu0 0.0
    %2872 = vmatpush1.msra.mxu0 0.0
    %2873 = vmatprep.subr.mxu0 0.0
    %2874 = vmatpush1.msra.mxu0 0.0
    %2875 = vmatprep.subr.mxu0 0.0
    %2876 = vmatpush1.msra.mxu0 0.0
    %2877 = vmatprep.subr.mxu0 0.0
    %2878 = vmatpush1.msra.mxu0 0.0
    %2879 = vmatprep.subr.mxu0 0.0
    %2880 = vmatpush1.msra.mxu0 0.0
    %2881 = vmatprep.subr.mxu0 0.0
    %2882 = vmatpush1.msra.mxu0 0.0
    %2883 = vmatprep.subr.mxu0 0.0
    %2884 = vmatpush1.msra.mxu0 0.0
    %2885 = vmatprep.subr.mxu0 0.0
    %2886 = vmatpush1.msra.mxu0 0.0
    %2887 = vmatprep.subr.mxu0 0.0
    %2888 = vmatpush1.msra.mxu0 0.0
    %2889 = vmatprep.subr.mxu0 0.0
    %2890 = vmatpush1.msra.mxu0 0.0
    %2891 = vmatprep.subr.mxu0 0.0
    %2892 = vmatpush1.msra.mxu0 0.0
    %2893 = vmatprep.subr.mxu0 0.0
    %2894 = vmatpush1.msra.mxu0 0.0
    %2895 = vmatprep.subr.mxu0 0.0
    %2896 = vmatpush1.msra.mxu0 0.0
    %2897 = vmatprep.subr.mxu0 0.0
    %2898 = vmatpush1.msra.mxu0 0.0
    %2899 = vmatprep.subr.mxu0 0.0
    %2900 = vmatpush1.msra.mxu0 0.0
    %2901 = vmatprep.subr.mxu0 0.0
    %2902 = vmatpush1.msra.mxu0 0.0
    %2903 = vmatprep.subr.mxu0 0.0
    %2904 = vmatpush1.msra.mxu0 0.0
    %2905 = vmatprep.subr.mxu0 0.0
    %2906 = vmatpush1.msra.mxu0 0.0
    %2907 = vmatprep.subr.mxu0 0.0
    %2908 = vmatpush1.msra.mxu0 0.0
    %2909 = vmatprep.subr.mxu0 0.0
    %2910 = vmatpush1.msra.mxu0 0.0
    %2911 = vmatprep.subr.mxu0 0.0
    %2912 = vmatpush1.msra.mxu0 0.0
    %2913 = vmatprep.mubr.f32.mxu0 0.0
    %2914 = vmatmul.mubr.f32.gmra.mrb[0].mxu0 %v2847
    %v2915 = vpop.f32.mrb[0].mxu0
    %v2916 = vadd.f32 0.0, %v2915
    %v2917 = vpop.f32.mrb[0].mxu0
    %2918 = vdwg.mxu0
    %v2919 = vadd.f32 %v2153, %v2916
    %v2920 = vxor.u32 %v2919, 2147483648
    %v2921 = vmul.f32 %v2920, 1.442695
    %v2922 = vpow.pop %v2921
    %v2923 = vadd.f32 %v2922, 1.0
    %v2924 = vrcp.pop %v2923
    %v2925 = vmul.f32 1.0, %v2924
    %v2926 = vadd.f32 %v2916, %v2393
    %2928 = vrot.lane.b32.xlu0 %v2926, 64
    %v2929 = vpop.permute.xlu0 %2928
    %v2931 = vmul.f32 %v2925, %v2929
    %2933 = vrot.lane.b32.xlu0 %v2931, 64
    %v2934 = vpop.permute.xlu0 %2933
    %v2936 = vadd.f32 %v2153, %v2934
    %v2937 = vtanh.pop %v2936
    %v2938 = vsub.f32 %v2843, %v2937
    %2940 = vrot.lane.b32.xlu0 %v2938, 96
    %v2941 = vpop.permute.xlu0 %2940
    %v2943 = vmul.f32 %v2925, %v2941
    %2945 = vrot.lane.b32.xlu0 %v2943, 32
    %v2946 = vpop.permute.xlu0 %2945
    %v2948 = vadd.f32 %v2937, %v2946
    %2950 = vrot.lane.b32.xlu0 %v2948, 64
    %v2951 = vpop.permute.xlu0 %2950
    %v2952 = vsel %vm876, %v2951, 0
    %2954 = vmatprep.subr.mxu0 0.0
    %2955 = vmatpush1.msra.mxu0 %v2302
    %2956 = vmatprep.subr.mxu0 0.0
    %2957 = vmatpush1.msra.mxu0 %v2303
    %2958 = vmatprep.subr.mxu0 0.0
    %2959 = vmatpush1.msra.mxu0 %v2304
    %2960 = vmatprep.subr.mxu0 0.0
    %2961 = vmatpush1.msra.mxu0 %v2305
    %2962 = vmatprep.subr.mxu0 0.0
    %2963 = vmatpush1.msra.mxu0 0.0
    %2964 = vmatprep.subr.mxu0 0.0
    %2965 = vmatpush1.msra.mxu0 0.0
    %2966 = vmatprep.subr.mxu0 0.0
    %2967 = vmatpush1.msra.mxu0 0.0
    %2968 = vmatprep.subr.mxu0 0.0
    %2969 = vmatpush1.msra.mxu0 0.0
    %2970 = vmatprep.subr.mxu0 0.0
    %2971 = vmatpush1.msra.mxu0 0.0
    %2972 = vmatprep.subr.mxu0 0.0
    %2973 = vmatpush1.msra.mxu0 0.0
    %2974 = vmatprep.subr.mxu0 0.0
    %2975 = vmatpush1.msra.mxu0 0.0
    %2976 = vmatprep.subr.mxu0 0.0
    %2977 = vmatpush1.msra.mxu0 0.0
    %2978 = vmatprep.subr.mxu0 0.0
    %2979 = vmatpush1.msra.mxu0 0.0
    %2980 = vmatprep.subr.mxu0 0.0
    %2981 = vmatpush1.msra.mxu0 0.0
    %2982 = vmatprep.subr.mxu0 0.0
    %2983 = vmatpush1.msra.mxu0 0.0
    %2984 = vmatprep.subr.mxu0 0.0
    %2985 = vmatpush1.msra.mxu0 0.0
    %2986 = vmatprep.subr.mxu0 0.0
    %2987 = vmatpush1.msra.mxu0 0.0
    %2988 = vmatprep.subr.mxu0 0.0
    %2989 = vmatpush1.msra.mxu0 0.0
    %2990 = vmatprep.subr.mxu0 0.0
    %2991 = vmatpush1.msra.mxu0 0.0
    %2992 = vmatprep.subr.mxu0 0.0
    %2993 = vmatpush1.msra.mxu0 0.0
    %2994 = vmatprep.subr.mxu0 0.0
    %2995 = vmatpush1.msra.mxu0 0.0
    %2996 = vmatprep.subr.mxu0 0.0
    %2997 = vmatpush1.msra.mxu0 0.0
    %2998 = vmatprep.subr.mxu0 0.0
    %2999 = vmatpush1.msra.mxu0 0.0
    %3000 = vmatprep.subr.mxu0 0.0
    %3001 = vmatpush1.msra.mxu0 0.0
    %3002 = vmatprep.subr.mxu0 0.0
    %3003 = vmatpush1.msra.mxu0 0.0
    %3004 = vmatprep.subr.mxu0 0.0
    %3005 = vmatpush1.msra.mxu0 0.0
    %3006 = vmatprep.subr.mxu0 0.0
    %3007 = vmatpush1.msra.mxu0 0.0
    %3008 = vmatprep.subr.mxu0 0.0
    %3009 = vmatpush1.msra.mxu0 0.0
    %3010 = vmatprep.subr.mxu0 0.0
    %3011 = vmatpush1.msra.mxu0 0.0
    %3012 = vmatprep.subr.mxu0 0.0
    %3013 = vmatpush1.msra.mxu0 0.0
    %3014 = vmatprep.subr.mxu0 0.0
    %3015 = vmatpush1.msra.mxu0 0.0
    %3016 = vmatprep.subr.mxu0 0.0
    %3017 = vmatpush1.msra.mxu0 0.0
    %3018 = vmatprep.mubr.f32.mxu0 0.0
    %3019 = vmatmul.mubr.f32.gmra.mrb[0].mxu0 %v2952
    %v3020 = vpop.f32.mrb[0].mxu0
    %v3021 = vadd.f32 0.0, %v3020
    %v3022 = vpop.f32.mrb[0].mxu0
    %3023 = vdwg.mxu0
    %v3024 = vadd.f32 %v2223, %v3021
    %v3025 = vxor.u32 %v3024, 2147483648
    %v3026 = vmul.f32 %v3025, 1.442695
    %v3027 = vpow.pop %v3026
    %v3028 = vadd.f32 %v3027, 1.0
    %v3029 = vrcp.pop %v3028
    %v3030 = vmul.f32 1.0, %v3029
    %v3031 = vadd.f32 %v3021, %v2393
    %3033 = vrot.lane.b32.xlu0 %v3031, 64
    %v3034 = vpop.permute.xlu0 %3033
    %v3036 = vmul.f32 %v3030, %v3034
    %3038 = vrot.lane.b32.xlu0 %v3036, 64
    %v3039 = vpop.permute.xlu0 %3038
    %v3041 = vadd.f32 %v2223, %v3039
    %v3042 = vtanh.pop %v3041
    %v3043 = vsub.f32 %v2948, %v3042
    %3045 = vrot.lane.b32.xlu0 %v3043, 96
    %v3046 = vpop.permute.xlu0 %3045
    %v3048 = vmul.f32 %v3030, %v3046
    %3050 = vrot.lane.b32.xlu0 %v3048, 32
    %v3051 = vpop.permute.xlu0 %3050
    %v3053 = vadd.f32 %v3042, %v3051
    %3055 = vrot.lane.b32.xlu0 %v3053, 64
    %v3056 = vpop.permute.xlu0 %3055
    %v3057 = vsel %vm876, %v3056, 0
    %3059 = vmatprep.subr.mxu0 0.0
    %3060 = vmatpush1.msra.mxu0 %v2302
    %3061 = vmatprep.subr.mxu0 0.0
    %3062 = vmatpush1.msra.mxu0 %v2303
    %3063 = vmatprep.subr.mxu0 0.0
    %3064 = vmatpush1.msra.mxu0 %v2304
    %3065 = vmatprep.subr.mxu0 0.0
    %3066 = vmatpush1.msra.mxu0 %v2305
    %3067 = vmatprep.subr.mxu0 0.0
    %3068 = vmatpush1.msra.mxu0 0.0
    %3069 = vmatprep.subr.mxu0 0.0
    %3070 = vmatpush1.msra.mxu0 0.0
    %3071 = vmatprep.subr.mxu0 0.0
    %3072 = vmatpush1.msra.mxu0 0.0
    %3073 = vmatprep.subr.mxu0 0.0
    %3074 = vmatpush1.msra.mxu0 0.0
    %3075 = vmatprep.subr.mxu0 0.0
    %3076 = vmatpush1.msra.mxu0 0.0
    %3077 = vmatprep.subr.mxu0 0.0
    %3078 = vmatpush1.msra.mxu0 0.0
    %3079 = vmatprep.subr.mxu0 0.0
    %3080 = vmatpush1.msra.mxu0 0.0
    %3081 = vmatprep.subr.mxu0 0.0
    %3082 = vmatpush1.msra.mxu0 0.0
    %3083 = vmatprep.subr.mxu0 0.0
    %3084 = vmatpush1.msra.mxu0 0.0
    %3085 = vmatprep.subr.mxu0 0.0
    %3086 = vmatpush1.msra.mxu0 0.0
    %3087 = vmatprep.subr.mxu0 0.0
    %3088 = vmatpush1.msra.mxu0 0.0
    %3089 = vmatprep.subr.mxu0 0.0
    %3090 = vmatpush1.msra.mxu0 0.0
    %3091 = vmatprep.subr.mxu0 0.0
    %3092 = vmatpush1.msra.mxu0 0.0
    %3093 = vmatprep.subr.mxu0 0.0
    %3094 = vmatpush1.msra.mxu0 0.0
    %3095 = vmatprep.subr.mxu0 0.0
    %3096 = vmatpush1.msra.mxu0 0.0
    %3097 = vmatprep.subr.mxu0 0.0
    %3098 = vmatpush1.msra.mxu0 0.0
    %3099 = vmatprep.subr.mxu0 0.0
    %3100 = vmatpush1.msra.mxu0 0.0
    %3101 = vmatprep.subr.mxu0 0.0
    %3102 = vmatpush1.msra.mxu0 0.0
    %3103 = vmatprep.subr.mxu0 0.0
    %3104 = vmatpush1.msra.mxu0 0.0
    %3105 = vmatprep.subr.mxu0 0.0
    %3106 = vmatpush1.msra.mxu0 0.0
    %3107 = vmatprep.subr.mxu0 0.0
    %3108 = vmatpush1.msra.mxu0 0.0
    %3109 = vmatprep.subr.mxu0 0.0
    %3110 = vmatpush1.msra.mxu0 0.0
    %3111 = vmatprep.subr.mxu0 0.0
    %3112 = vmatpush1.msra.mxu0 0.0
    %3113 = vmatprep.subr.mxu0 0.0
    %3114 = vmatpush1.msra.mxu0 0.0
    %3115 = vmatprep.subr.mxu0 0.0
    %3116 = vmatpush1.msra.mxu0 0.0
    %3117 = vmatprep.subr.mxu0 0.0
    %3118 = vmatpush1.msra.mxu0 0.0
    %3119 = vmatprep.subr.mxu0 0.0
    %3120 = vmatpush1.msra.mxu0 0.0
    %3121 = vmatprep.subr.mxu0 0.0
    %3122 = vmatpush1.msra.mxu0 0.0
    %3123 = vmatprep.mubr.f32.mxu0 0.0
    %3124 = vmatmul.mubr.f32.gmra.mrb[0].mxu0 %v3057
    %v3125 = vpop.f32.mrb[0].mxu0
    %v3126 = vadd.f32 0.0, %v3125
    %v3127 = vpop.f32.mrb[0].mxu0
    %3128 = vdwg.mxu0
    %v3129 = vadd.f32 %v2298, %v3126
    %v3130 = vxor.u32 %v3129, 2147483648
    %v3131 = vmul.f32 %v3130, 1.442695
    %v3132 = vpow.pop %v3131
    %v3133 = vadd.f32 %v3132, 1.0
    %v3134 = vrcp.pop %v3133
    %v3135 = vmul.f32 1.0, %v3134
    %v3136 = vadd.f32 %v3126, %v2393
    %3138 = vrot.lane.b32.xlu0 %v3136, 64
    %v3139 = vpop.permute.xlu0 %3138
    %v3141 = vmul.f32 %v3135, %v3139
    %3143 = vrot.lane.b32.xlu0 %v3141, 64
    %v3144 = vpop.permute.xlu0 %3143
    %v3146 = vadd.f32 %v2298, %v3144
    %v3147 = vtanh.pop %v3146
    %v3148 = vsub.f32 %v3053, %v3147
    %3150 = vrot.lane.b32.xlu0 %v3148, 96
    %v3151 = vpop.permute.xlu0 %3150
    %v3153 = vmul.f32 %v3135, %v3151
    %3155 = vrot.lane.b32.xlu0 %v3153, 32
    %v3156 = vpop.permute.xlu0 %3155
    %v3158 = vadd.f32 %v3147, %v3156
    %v3159 = vld [vmem:[%s8] sm:$0xff]
    %v3160 = vld [vmem:[%s8 + $0x8] sm:$0xff]
    %v3161 = vld [vmem:[%s8 + $0x10] sm:$0xff]
    %v3162 = vld [vmem:[%s8 + $0x18] sm:$0xff]
    %v3163 = vld [vmem:[#allocation4 + $0x8] sm:$0x1]
    %v3164 = vlaneseq
    %v3165 = vshrl.u32 %v3164, 7
    %v3166 = vsub.s32 0, %v3165
    %v3167 = vrot.slane %v3163, %v3166
    %3168 = vmatprep.subr.mxu0 0.0
    %3169 = vmatpush1.msra.mxu0 %v3159
    %3170 = vmatprep.subr.mxu0 0.0
    %3171 = vmatpush1.msra.mxu0 %v3160
    %3172 = vmatprep.subr.mxu0 0.0
    %3173 = vmatpush1.msra.mxu0 %v3161
    %3174 = vmatprep.subr.mxu0 0.0
    %3175 = vmatpush1.msra.mxu0 %v3162
    %3176 = vmatprep.subr.mxu0 0.0
    %3177 = vmatpush1.msra.mxu0 0.0
    %3178 = vmatprep.subr.mxu0 0.0
    %3179 = vmatpush1.msra.mxu0 0.0
    %3180 = vmatprep.subr.mxu0 0.0
    %3181 = vmatpush1.msra.mxu0 0.0
    %3182 = vmatprep.subr.mxu0 0.0
    %3183 = vmatpush1.msra.mxu0 0.0
    %3184 = vmatprep.subr.mxu0 0.0
    %3185 = vmatpush1.msra.mxu0 0.0
    %3186 = vmatprep.subr.mxu0 0.0
    %3187 = vmatpush1.msra.mxu0 0.0
    %3188 = vmatprep.subr.mxu0 0.0
    %3189 = vmatpush1.msra.mxu0 0.0
    %3190 = vmatprep.subr.mxu0 0.0
    %3191 = vmatpush1.msra.mxu0 0.0
    %3192 = vmatprep.subr.mxu0 0.0
    %3193 = vmatpush1.msra.mxu0 0.0
    %3194 = vmatprep.subr.mxu0 0.0
    %3195 = vmatpush1.msra.mxu0 0.0
    %3196 = vmatprep.subr.mxu0 0.0
    %3197 = vmatpush1.msra.mxu0 0.0
    %3198 = vmatprep.subr.mxu0 0.0
    %3199 = vmatpush1.msra.mxu0 0.0
    %3200 = vmatprep.subr.mxu0 0.0
    %3201 = vmatpush1.msra.mxu0 0.0
    %3202 = vmatprep.subr.mxu0 0.0
    %3203 = vmatpush1.msra.mxu0 0.0
    %3204 = vmatprep.subr.mxu0 0.0
    %3205 = vmatpush1.msra.mxu0 0.0
    %3206 = vmatprep.subr.mxu0 0.0
    %3207 = vmatpush1.msra.mxu0 0.0
    %3208 = vmatprep.subr.mxu0 0.0
    %3209 = vmatpush1.msra.mxu0 0.0
    %3210 = vmatprep.subr.mxu0 0.0
    %3211 = vmatpush1.msra.mxu0 0.0
    %3212 = vmatprep.subr.mxu0 0.0
    %3213 = vmatpush1.msra.mxu0 0.0
    %3214 = vmatprep.subr.mxu0 0.0
    %3215 = vmatpush1.msra.mxu0 0.0
    %3216 = vmatprep.subr.mxu0 0.0
    %3217 = vmatpush1.msra.mxu0 0.0
    %3218 = vmatprep.subr.mxu0 0.0
    %3219 = vmatpush1.msra.mxu0 0.0
    %3220 = vmatprep.subr.mxu0 0.0
    %3221 = vmatpush1.msra.mxu0 0.0
    %3222 = vmatprep.subr.mxu0 0.0
    %3223 = vmatpush1.msra.mxu0 0.0
    %3224 = vmatprep.subr.mxu0 0.0
    %3225 = vmatpush1.msra.mxu0 0.0
    %3226 = vmatprep.subr.mxu0 0.0
    %3227 = vmatpush1.msra.mxu0 0.0
    %3228 = vmatprep.subr.mxu0 0.0
    %3229 = vmatpush1.msra.mxu0 0.0
    %3230 = vmatprep.subr.mxu0 0.0
    %3231 = vmatpush1.msra.mxu0 0.0
    %3232 = vmatprep.mubr.f32.mxu0 0.0
    %3233 = vmatmul.mubr.f32.gmra.mrb[0].mxu0 %v2427
    %v3234 = vpop.f32.mrb[0].mxu0
    %v3235 = vadd.f32 %v3167, %v3234
    %v3236 = vpop.f32.mrb[0].mxu0
    %3237 = vdwg.mxu0
    %vm3238 = vcmask 123904
    %3239 = vst.msk [vmem:[%s9] sm:$0x3] %vm3238, %v3235
    %3240 = vmatprep.subr.mxu0 0.0
    %3241 = vmatpush1.msra.mxu0 %v3159
    %3242 = vmatprep.subr.mxu0 0.0
    %3243 = vmatpush1.msra.mxu0 %v3160
    %3244 = vmatprep.subr.mxu0 0.0
    %3245 = vmatpush1.msra.mxu0 %v3161
    %3246 = vmatprep.subr.mxu0 0.0
    %3247 = vmatpush1.msra.mxu0 %v3162
    %3248 = vmatprep.subr.mxu0 0.0
    %3249 = vmatpush1.msra.mxu0 0.0
    %3250 = vmatprep.subr.mxu0 0.0
    %3251 = vmatpush1.msra.mxu0 0.0
    %3252 = vmatprep.subr.mxu0 0.0
    %3253 = vmatpush1.msra.mxu0 0.0
    %3254 = vmatprep.subr.mxu0 0.0
    %3255 = vmatpush1.msra.mxu0 0.0
    %3256 = vmatprep.subr.mxu0 0.0
    %3257 = vmatpush1.msra.mxu0 0.0
    %3258 = vmatprep.subr.mxu0 0.0
    %3259 = vmatpush1.msra.mxu0 0.0
    %3260 = vmatprep.subr.mxu0 0.0
    %3261 = vmatpush1.msra.mxu0 0.0
    %3262 = vmatprep.subr.mxu0 0.0
    %3263 = vmatpush1.msra.mxu0 0.0
    %3264 = vmatprep.subr.mxu0 0.0
    %3265 = vmatpush1.msra.mxu0 0.0
    %3266 = vmatprep.subr.mxu0 0.0
    %3267 = vmatpush1.msra.mxu0 0.0
    %3268 = vmatprep.subr.mxu0 0.0
    %3269 = vmatpush1.msra.mxu0 0.0
    %3270 = vmatprep.subr.mxu0 0.0
    %3271 = vmatpush1.msra.mxu0 0.0
    %3272 = vmatprep.subr.mxu0 0.0
    %3273 = vmatpush1.msra.mxu0 0.0
    %3274 = vmatprep.subr.mxu0 0.0
    %3275 = vmatpush1.msra.mxu0 0.0
    %3276 = vmatprep.subr.mxu0 0.0
    %3277 = vmatpush1.msra.mxu0 0.0
    %3278 = vmatprep.subr.mxu0 0.0
    %3279 = vmatpush1.msra.mxu0 0.0
    %3280 = vmatprep.subr.mxu0 0.0
    %3281 = vmatpush1.msra.mxu0 0.0
    %3282 = vmatprep.subr.mxu0 0.0
    %3283 = vmatpush1.msra.mxu0 0.0
    %3284 = vmatprep.subr.mxu0 0.0
    %3285 = vmatpush1.msra.mxu0 0.0
    %3286 = vmatprep.subr.mxu0 0.0
    %3287 = vmatpush1.msra.mxu0 0.0
    %3288 = vmatprep.subr.mxu0 0.0
    %3289 = vmatpush1.msra.mxu0 0.0
    %3290 = vmatprep.subr.mxu0 0.0
    %3291 = vmatpush1.msra.mxu0 0.0
    %3292 = vmatprep.subr.mxu0 0.0
    %3293 = vmatpush1.msra.mxu0 0.0
    %3294 = vmatprep.subr.mxu0 0.0
    %3295 = vmatpush1.msra.mxu0 0.0
    %3296 = vmatprep.subr.mxu0 0.0
    %3297 = vmatpush1.msra.mxu0 0.0
    %3298 = vmatprep.subr.mxu0 0.0
    %3299 = vmatpush1.msra.mxu0 0.0
    %3300 = vmatprep.subr.mxu0 0.0
    %3301 = vmatpush1.msra.mxu0 0.0
    %3302 = vmatprep.subr.mxu0 0.0
    %3303 = vmatpush1.msra.mxu0 0.0
    %3304 = vmatprep.mubr.f32.mxu0 0.0
    %3305 = vmatmul.mubr.f32.gmra.mrb[0].mxu0 %v2532
    %v3306 = vpop.f32.mrb[0].mxu0
    %v3307 = vadd.f32 %v3167, %v3306
    %v3308 = vpop.f32.mrb[0].mxu0
    %3309 = vdwg.mxu0
    %s3310 = scalar_lea.vmem %s9, 2
    %3311 = vst.msk [vmem:[%s3310] sm:$0x3] %vm3238, %v3307
    %3312 = vmatprep.subr.mxu0 0.0
    %3313 = vmatpush1.msra.mxu0 %v3159
    %3314 = vmatprep.subr.mxu0 0.0
    %3315 = vmatpush1.msra.mxu0 %v3160
    %3316 = vmatprep.subr.mxu0 0.0
    %3317 = vmatpush1.msra.mxu0 %v3161
    %3318 = vmatprep.subr.mxu0 0.0
    %3319 = vmatpush1.msra.mxu0 %v3162
    %3320 = vmatprep.subr.mxu0 0.0
    %3321 = vmatpush1.msra.mxu0 0.0
    %3322 = vmatprep.subr.mxu0 0.0
    %3323 = vmatpush1.msra.mxu0 0.0
    %3324 = vmatprep.subr.mxu0 0.0
    %3325 = vmatpush1.msra.mxu0 0.0
    %3326 = vmatprep.subr.mxu0 0.0
    %3327 = vmatpush1.msra.mxu0 0.0
    %3328 = vmatprep.subr.mxu0 0.0
    %3329 = vmatpush1.msra.mxu0 0.0
    %3330 = vmatprep.subr.mxu0 0.0
    %3331 = vmatpush1.msra.mxu0 0.0
    %3332 = vmatprep.subr.mxu0 0.0
    %3333 = vmatpush1.msra.mxu0 0.0
    %3334 = vmatprep.subr.mxu0 0.0
    %3335 = vmatpush1.msra.mxu0 0.0
    %3336 = vmatprep.subr.mxu0 0.0
    %3337 = vmatpush1.msra.mxu0 0.0
    %3338 = vmatprep.subr.mxu0 0.0
    %3339 = vmatpush1.msra.mxu0 0.0
    %3340 = vmatprep.subr.mxu0 0.0
    %3341 = vmatpush1.msra.mxu0 0.0
    %3342 = vmatprep.subr.mxu0 0.0
    %3343 = vmatpush1.msra.mxu0 0.0
    %3344 = vmatprep.subr.mxu0 0.0
    %3345 = vmatpush1.msra.mxu0 0.0
    %3346 = vmatprep.subr.mxu0 0.0
    %3347 = vmatpush1.msra.mxu0 0.0
    %3348 = vmatprep.subr.mxu0 0.0
    %3349 = vmatpush1.msra.mxu0 0.0
    %3350 = vmatprep.subr.mxu0 0.0
    %3351 = vmatpush1.msra.mxu0 0.0
    %3352 = vmatprep.subr.mxu0 0.0
    %3353 = vmatpush1.msra.mxu0 0.0
    %3354 = vmatprep.subr.mxu0 0.0
    %3355 = vmatpush1.msra.mxu0 0.0
    %3356 = vmatprep.subr.mxu0 0.0
    %3357 = vmatpush1.msra.mxu0 0.0
    %3358 = vmatprep.subr.mxu0 0.0
    %3359 = vmatpush1.msra.mxu0 0.0
    %3360 = vmatprep.subr.mxu0 0.0
    %3361 = vmatpush1.msra.mxu0 0.0
    %3362 = vmatprep.subr.mxu0 0.0
    %3363 = vmatpush1.msra.mxu0 0.0
    %3364 = vmatprep.subr.mxu0 0.0
    %3365 = vmatpush1.msra.mxu0 0.0
    %3366 = vmatprep.subr.mxu0 0.0
    %3367 = vmatpush1.msra.mxu0 0.0
    %3368 = vmatprep.subr.mxu0 0.0
    %3369 = vmatpush1.msra.mxu0 0.0
    %3370 = vmatprep.subr.mxu0 0.0
    %3371 = vmatpush1.msra.mxu0 0.0
    %3372 = vmatprep.subr.mxu0 0.0
    %3373 = vmatpush1.msra.mxu0 0.0
    %3374 = vmatprep.subr.mxu0 0.0
    %3375 = vmatpush1.msra.mxu0 0.0
    %3376 = vmatprep.mubr.f32.mxu0 0.0
    %3377 = vmatmul.mubr.f32.gmra.mrb[0].mxu0 %v2637
    %v3378 = vpop.f32.mrb[0].mxu0
    %v3379 = vadd.f32 %v3167, %v3378
    %v3380 = vpop.f32.mrb[0].mxu0
    %3381 = vdwg.mxu0
    %s3382 = scalar_lea.vmem %s9, 4
    %3383 = vst.msk [vmem:[%s3382] sm:$0x3] %vm3238, %v3379
    %3384 = vmatprep.subr.mxu0 0.0
    %3385 = vmatpush1.msra.mxu0 %v3159
    %3386 = vmatprep.subr.mxu0 0.0
    %3387 = vmatpush1.msra.mxu0 %v3160
    %3388 = vmatprep.subr.mxu0 0.0
    %3389 = vmatpush1.msra.mxu0 %v3161
    %3390 = vmatprep.subr.mxu0 0.0
    %3391 = vmatpush1.msra.mxu0 %v3162
    %3392 = vmatprep.subr.mxu0 0.0
    %3393 = vmatpush1.msra.mxu0 0.0
    %3394 = vmatprep.subr.mxu0 0.0
    %3395 = vmatpush1.msra.mxu0 0.0
    %3396 = vmatprep.subr.mxu0 0.0
    %3397 = vmatpush1.msra.mxu0 0.0
    %3398 = vmatprep.subr.mxu0 0.0
    %3399 = vmatpush1.msra.mxu0 0.0
    %3400 = vmatprep.subr.mxu0 0.0
    %3401 = vmatpush1.msra.mxu0 0.0
    %3402 = vmatprep.subr.mxu0 0.0
    %3403 = vmatpush1.msra.mxu0 0.0
    %3404 = vmatprep.subr.mxu0 0.0
    %3405 = vmatpush1.msra.mxu0 0.0
    %3406 = vmatprep.subr.mxu0 0.0
    %3407 = vmatpush1.msra.mxu0 0.0
    %3408 = vmatprep.subr.mxu0 0.0
    %3409 = vmatpush1.msra.mxu0 0.0
    %3410 = vmatprep.subr.mxu0 0.0
    %3411 = vmatpush1.msra.mxu0 0.0
    %3412 = vmatprep.subr.mxu0 0.0
    %3413 = vmatpush1.msra.mxu0 0.0
    %3414 = vmatprep.subr.mxu0 0.0
    %3415 = vmatpush1.msra.mxu0 0.0
    %3416 = vmatprep.subr.mxu0 0.0
    %3417 = vmatpush1.msra.mxu0 0.0
    %3418 = vmatprep.subr.mxu0 0.0
    %3419 = vmatpush1.msra.mxu0 0.0
    %3420 = vmatprep.subr.mxu0 0.0
    %3421 = vmatpush1.msra.mxu0 0.0
    %3422 = vmatprep.subr.mxu0 0.0
    %3423 = vmatpush1.msra.mxu0 0.0
    %3424 = vmatprep.subr.mxu0 0.0
    %3425 = vmatpush1.msra.mxu0 0.0
    %3426 = vmatprep.subr.mxu0 0.0
    %3427 = vmatpush1.msra.mxu0 0.0
    %3428 = vmatprep.subr.mxu0 0.0
    %3429 = vmatpush1.msra.mxu0 0.0
    %3430 = vmatprep.subr.mxu0 0.0
    %3431 = vmatpush1.msra.mxu0 0.0
    %3432 = vmatprep.subr.mxu0 0.0
    %3433 = vmatpush1.msra.mxu0 0.0
    %3434 = vmatprep.subr.mxu0 0.0
    %3435 = vmatpush1.msra.mxu0 0.0
    %3436 = vmatprep.subr.mxu0 0.0
    %3437 = vmatpush1.msra.mxu0 0.0
    %3438 = vmatprep.subr.mxu0 0.0
    %3439 = vmatpush1.msra.mxu0 0.0
    %3440 = vmatprep.subr.mxu0 0.0
    %3441 = vmatpush1.msra.mxu0 0.0
    %3442 = vmatprep.subr.mxu0 0.0
    %3443 = vmatpush1.msra.mxu0 0.0
    %3444 = vmatprep.subr.mxu0 0.0
    %3445 = vmatpush1.msra.mxu0 0.0
    %3446 = vmatprep.subr.mxu0 0.0
    %3447 = vmatpush1.msra.mxu0 0.0
    %3448 = vmatprep.mubr.f32.mxu0 0.0
    %3449 = vmatmul.mubr.f32.gmra.mrb[0].mxu0 %v2742
    %v3450 = vpop.f32.mrb[0].mxu0
    %v3451 = vadd.f32 %v3167, %v3450
    %v3452 = vpop.f32.mrb[0].mxu0
    %3453 = vdwg.mxu0
    %s3454 = scalar_lea.vmem %s9, 6
    %3455 = vst.msk [vmem:[%s3454] sm:$0x3] %vm3238, %v3451
    %3456 = vmatprep.subr.mxu0 0.0
    %3457 = vmatpush1.msra.mxu0 %v3159
    %3458 = vmatprep.subr.mxu0 0.0
    %3459 = vmatpush1.msra.mxu0 %v3160
    %3460 = vmatprep.subr.mxu0 0.0
    %3461 = vmatpush1.msra.mxu0 %v3161
    %3462 = vmatprep.subr.mxu0 0.0
    %3463 = vmatpush1.msra.mxu0 %v3162
    %3464 = vmatprep.subr.mxu0 0.0
    %3465 = vmatpush1.msra.mxu0 0.0
    %3466 = vmatprep.subr.mxu0 0.0
    %3467 = vmatpush1.msra.mxu0 0.0
    %3468 = vmatprep.subr.mxu0 0.0
    %3469 = vmatpush1.msra.mxu0 0.0
    %3470 = vmatprep.subr.mxu0 0.0
    %3471 = vmatpush1.msra.mxu0 0.0
    %3472 = vmatprep.subr.mxu0 0.0
    %3473 = vmatpush1.msra.mxu0 0.0
    %3474 = vmatprep.subr.mxu0 0.0
    %3475 = vmatpush1.msra.mxu0 0.0
    %3476 = vmatprep.subr.mxu0 0.0
    %3477 = vmatpush1.msra.mxu0 0.0
    %3478 = vmatprep.subr.mxu0 0.0
    %3479 = vmatpush1.msra.mxu0 0.0
    %3480 = vmatprep.subr.mxu0 0.0
    %3481 = vmatpush1.msra.mxu0 0.0
    %3482 = vmatprep.subr.mxu0 0.0
    %3483 = vmatpush1.msra.mxu0 0.0
    %3484 = vmatprep.subr.mxu0 0.0
    %3485 = vmatpush1.msra.mxu0 0.0
    %3486 = vmatprep.subr.mxu0 0.0
    %3487 = vmatpush1.msra.mxu0 0.0
    %3488 = vmatprep.subr.mxu0 0.0
    %3489 = vmatpush1.msra.mxu0 0.0
    %3490 = vmatprep.subr.mxu0 0.0
    %3491 = vmatpush1.msra.mxu0 0.0
    %3492 = vmatprep.subr.mxu0 0.0
    %3493 = vmatpush1.msra.mxu0 0.0
    %3494 = vmatprep.subr.mxu0 0.0
    %3495 = vmatpush1.msra.mxu0 0.0
    %3496 = vmatprep.subr.mxu0 0.0
    %3497 = vmatpush1.msra.mxu0 0.0
    %3498 = vmatprep.subr.mxu0 0.0
    %3499 = vmatpush1.msra.mxu0 0.0
    %3500 = vmatprep.subr.mxu0 0.0
    %3501 = vmatpush1.msra.mxu0 0.0
    %3502 = vmatprep.subr.mxu0 0.0
    %3503 = vmatpush1.msra.mxu0 0.0
    %3504 = vmatprep.subr.mxu0 0.0
    %3505 = vmatpush1.msra.mxu0 0.0
    %3506 = vmatprep.subr.mxu0 0.0
    %3507 = vmatpush1.msra.mxu0 0.0
    %3508 = vmatprep.subr.mxu0 0.0
    %3509 = vmatpush1.msra.mxu0 0.0
    %3510 = vmatprep.subr.mxu0 0.0
    %3511 = vmatpush1.msra.mxu0 0.0
    %3512 = vmatprep.subr.mxu0 0.0
    %3513 = vmatpush1.msra.mxu0 0.0
    %3514 = vmatprep.subr.mxu0 0.0
    %3515 = vmatpush1.msra.mxu0 0.0
    %3516 = vmatprep.subr.mxu0 0.0
    %3517 = vmatpush1.msra.mxu0 0.0
    %3518 = vmatprep.subr.mxu0 0.0
    %3519 = vmatpush1.msra.mxu0 0.0
    %3520 = vmatprep.mubr.f32.mxu0 0.0
    %3521 = vmatmul.mubr.f32.gmra.mrb[0].mxu0 %v2847
    %v3522 = vpop.f32.mrb[0].mxu0
    %v3523 = vadd.f32 %v3167, %v3522
    %v3524 = vpop.f32.mrb[0].mxu0
    %3525 = vdwg.mxu0
    %s3526 = scalar_lea.vmem %s9, 8
    %3527 = vst.msk [vmem:[%s3526] sm:$0x3] %vm3238, %v3523
    %3528 = vmatprep.subr.mxu0 0.0
    %3529 = vmatpush1.msra.mxu0 %v3159
    %3530 = vmatprep.subr.mxu0 0.0
    %3531 = vmatpush1.msra.mxu0 %v3160
    %3532 = vmatprep.subr.mxu0 0.0
    %3533 = vmatpush1.msra.mxu0 %v3161
    %3534 = vmatprep.subr.mxu0 0.0
    %3535 = vmatpush1.msra.mxu0 %v3162
    %3536 = vmatprep.subr.mxu0 0.0
    %3537 = vmatpush1.msra.mxu0 0.0
    %3538 = vmatprep.subr.mxu0 0.0
    %3539 = vmatpush1.msra.mxu0 0.0
    %3540 = vmatprep.subr.mxu0 0.0
    %3541 = vmatpush1.msra.mxu0 0.0
    %3542 = vmatprep.subr.mxu0 0.0
    %3543 = vmatpush1.msra.mxu0 0.0
    %3544 = vmatprep.subr.mxu0 0.0
    %3545 = vmatpush1.msra.mxu0 0.0
    %3546 = vmatprep.subr.mxu0 0.0
    %3547 = vmatpush1.msra.mxu0 0.0
    %3548 = vmatprep.subr.mxu0 0.0
    %3549 = vmatpush1.msra.mxu0 0.0
    %3550 = vmatprep.subr.mxu0 0.0
    %3551 = vmatpush1.msra.mxu0 0.0
    %3552 = vmatprep.subr.mxu0 0.0
    %3553 = vmatpush1.msra.mxu0 0.0
    %3554 = vmatprep.subr.mxu0 0.0
    %3555 = vmatpush1.msra.mxu0 0.0
    %3556 = vmatprep.subr.mxu0 0.0
    %3557 = vmatpush1.msra.mxu0 0.0
    %3558 = vmatprep.subr.mxu0 0.0
    %3559 = vmatpush1.msra.mxu0 0.0
    %3560 = vmatprep.subr.mxu0 0.0
    %3561 = vmatpush1.msra.mxu0 0.0
    %3562 = vmatprep.subr.mxu0 0.0
    %3563 = vmatpush1.msra.mxu0 0.0
    %3564 = vmatprep.subr.mxu0 0.0
    %3565 = vmatpush1.msra.mxu0 0.0
    %3566 = vmatprep.subr.mxu0 0.0
    %3567 = vmatpush1.msra.mxu0 0.0
    %3568 = vmatprep.subr.mxu0 0.0
    %3569 = vmatpush1.msra.mxu0 0.0
    %3570 = vmatprep.subr.mxu0 0.0
    %3571 = vmatpush1.msra.mxu0 0.0
    %3572 = vmatprep.subr.mxu0 0.0
    %3573 = vmatpush1.msra.mxu0 0.0
    %3574 = vmatprep.subr.mxu0 0.0
    %3575 = vmatpush1.msra.mxu0 0.0
    %3576 = vmatprep.subr.mxu0 0.0
    %3577 = vmatpush1.msra.mxu0 0.0
    %3578 = vmatprep.subr.mxu0 0.0
    %3579 = vmatpush1.msra.mxu0 0.0
    %3580 = vmatprep.subr.mxu0 0.0
    %3581 = vmatpush1.msra.mxu0 0.0
    %3582 = vmatprep.subr.mxu0 0.0
    %3583 = vmatpush1.msra.mxu0 0.0
    %3584 = vmatprep.subr.mxu0 0.0
    %3585 = vmatpush1.msra.mxu0 0.0
    %3586 = vmatprep.subr.mxu0 0.0
    %3587 = vmatpush1.msra.mxu0 0.0
    %3588 = vmatprep.subr.mxu0 0.0
    %3589 = vmatpush1.msra.mxu0 0.0
    %3590 = vmatprep.subr.mxu0 0.0
    %3591 = vmatpush1.msra.mxu0 0.0
    %3592 = vmatprep.mubr.f32.mxu0 0.0
    %3593 = vmatmul.mubr.f32.gmra.mrb[0].mxu0 %v2952
    %v3594 = vpop.f32.mrb[0].mxu0
    %v3595 = vadd.f32 %v3167, %v3594
    %v3596 = vpop.f32.mrb[0].mxu0
    %3597 = vdwg.mxu0
    %s3598 = scalar_lea.vmem %s9, 10
    %3599 = vst.msk [vmem:[%s3598] sm:$0x3] %vm3238, %v3595
    %3600 = vmatprep.subr.mxu0 0.0
    %3601 = vmatpush1.msra.mxu0 %v3159
    %3602 = vmatprep.subr.mxu0 0.0
    %3603 = vmatpush1.msra.mxu0 %v3160
    %3604 = vmatprep.subr.mxu0 0.0
    %3605 = vmatpush1.msra.mxu0 %v3161
    %3606 = vmatprep.subr.mxu0 0.0
    %3607 = vmatpush1.msra.mxu0 %v3162
    %3608 = vmatprep.subr.mxu0 0.0
    %3609 = vmatpush1.msra.mxu0 0.0
    %3610 = vmatprep.subr.mxu0 0.0
    %3611 = vmatpush1.msra.mxu0 0.0
    %3612 = vmatprep.subr.mxu0 0.0
    %3613 = vmatpush1.msra.mxu0 0.0
    %3614 = vmatprep.subr.mxu0 0.0
    %3615 = vmatpush1.msra.mxu0 0.0
    %3616 = vmatprep.subr.mxu0 0.0
    %3617 = vmatpush1.msra.mxu0 0.0
    %3618 = vmatprep.subr.mxu0 0.0
    %3619 = vmatpush1.msra.mxu0 0.0
    %3620 = vmatprep.subr.mxu0 0.0
    %3621 = vmatpush1.msra.mxu0 0.0
    %3622 = vmatprep.subr.mxu0 0.0
    %3623 = vmatpush1.msra.mxu0 0.0
    %3624 = vmatprep.subr.mxu0 0.0
    %3625 = vmatpush1.msra.mxu0 0.0
    %3626 = vmatprep.subr.mxu0 0.0
    %3627 = vmatpush1.msra.mxu0 0.0
    %3628 = vmatprep.subr.mxu0 0.0
    %3629 = vmatpush1.msra.mxu0 0.0
    %3630 = vmatprep.subr.mxu0 0.0
    %3631 = vmatpush1.msra.mxu0 0.0
    %3632 = vmatprep.subr.mxu0 0.0
    %3633 = vmatpush1.msra.mxu0 0.0
    %3634 = vmatprep.subr.mxu0 0.0
    %3635 = vmatpush1.msra.mxu0 0.0
    %3636 = vmatprep.subr.mxu0 0.0
    %3637 = vmatpush1.msra.mxu0 0.0
    %3638 = vmatprep.subr.mxu0 0.0
    %3639 = vmatpush1.msra.mxu0 0.0
    %3640 = vmatprep.subr.mxu0 0.0
    %3641 = vmatpush1.msra.mxu0 0.0
    %3642 = vmatprep.subr.mxu0 0.0
    %3643 = vmatpush1.msra.mxu0 0.0
    %3644 = vmatprep.subr.mxu0 0.0
    %3645 = vmatpush1.msra.mxu0 0.0
    %3646 = vmatprep.subr.mxu0 0.0
    %3647 = vmatpush1.msra.mxu0 0.0
    %3648 = vmatprep.subr.mxu0 0.0
    %3649 = vmatpush1.msra.mxu0 0.0
    %3650 = vmatprep.subr.mxu0 0.0
    %3651 = vmatpush1.msra.mxu0 0.0
    %3652 = vmatprep.subr.mxu0 0.0
    %3653 = vmatpush1.msra.mxu0 0.0
    %3654 = vmatprep.subr.mxu0 0.0
    %3655 = vmatpush1.msra.mxu0 0.0
    %3656 = vmatprep.subr.mxu0 0.0
    %3657 = vmatpush1.msra.mxu0 0.0
    %3658 = vmatprep.subr.mxu0 0.0
    %3659 = vmatpush1.msra.mxu0 0.0
    %3660 = vmatprep.subr.mxu0 0.0
    %3661 = vmatpush1.msra.mxu0 0.0
    %3662 = vmatprep.subr.mxu0 0.0
    %3663 = vmatpush1.msra.mxu0 0.0
    %3664 = vmatprep.mubr.f32.mxu0 0.0
    %3665 = vmatmul.mubr.f32.gmra.mrb[0].mxu0 %v3057
    %v3666 = vpop.f32.mrb[0].mxu0
    %v3667 = vadd.f32 %v3167, %v3666
    %v3668 = vpop.f32.mrb[0].mxu0
    %3669 = vdwg.mxu0
    %s3670 = scalar_lea.vmem %s9, 12
    %3671 = vst.msk [vmem:[%s3670] sm:$0x3] %vm3238, %v3667
    %3673 = vrot.lane.b32.xlu0 %v3158, 64
    %v3674 = vpop.permute.xlu0 %3673
    %v3675 = vsel %vm876, %v3674, 0
    %3677 = vmatprep.subr.mxu0 0.0
    %3678 = vmatpush1.msra.mxu0 %v3159
    %3679 = vmatprep.subr.mxu0 0.0
    %3680 = vmatpush1.msra.mxu0 %v3160
    %3681 = vmatprep.subr.mxu0 0.0
    %3682 = vmatpush1.msra.mxu0 %v3161
    %3683 = vmatprep.subr.mxu0 0.0
    %3684 = vmatpush1.msra.mxu0 %v3162
    %3685 = vmatprep.subr.mxu0 0.0
    %3686 = vmatpush1.msra.mxu0 0.0
    %3687 = vmatprep.subr.mxu0 0.0
    %3688 = vmatpush1.msra.mxu0 0.0
    %3689 = vmatprep.subr.mxu0 0.0
    %3690 = vmatpush1.msra.mxu0 0.0
    %3691 = vmatprep.subr.mxu0 0.0
    %3692 = vmatpush1.msra.mxu0 0.0
    %3693 = vmatprep.subr.mxu0 0.0
    %3694 = vmatpush1.msra.mxu0 0.0
    %3695 = vmatprep.subr.mxu0 0.0
    %3696 = vmatpush1.msra.mxu0 0.0
    %3697 = vmatprep.subr.mxu0 0.0
    %3698 = vmatpush1.msra.mxu0 0.0
    %3699 = vmatprep.subr.mxu0 0.0
    %3700 = vmatpush1.msra.mxu0 0.0
    %3701 = vmatprep.subr.mxu0 0.0
    %3702 = vmatpush1.msra.mxu0 0.0
    %3703 = vmatprep.subr.mxu0 0.0
    %3704 = vmatpush1.msra.mxu0 0.0
    %3705 = vmatprep.subr.mxu0 0.0
    %3706 = vmatpush1.msra.mxu0 0.0
    %3707 = vmatprep.subr.mxu0 0.0
    %3708 = vmatpush1.msra.mxu0 0.0
    %3709 = vmatprep.subr.mxu0 0.0
    %3710 = vmatpush1.msra.mxu0 0.0
    %3711 = vmatprep.subr.mxu0 0.0
    %3712 = vmatpush1.msra.mxu0 0.0
    %3713 = vmatprep.subr.mxu0 0.0
    %3714 = vmatpush1.msra.mxu0 0.0
    %3715 = vmatprep.subr.mxu0 0.0
    %3716 = vmatpush1.msra.mxu0 0.0
    %3717 = vmatprep.subr.mxu0 0.0
    %3718 = vmatpush1.msra.mxu0 0.0
    %3719 = vmatprep.subr.mxu0 0.0
    %3720 = vmatpush1.msra.mxu0 0.0
    %3721 = vmatprep.subr.mxu0 0.0
    %3722 = vmatpush1.msra.mxu0 0.0
    %3723 = vmatprep.subr.mxu0 0.0
    %3724 = vmatpush1.msra.mxu0 0.0
    %3725 = vmatprep.subr.mxu0 0.0
    %3726 = vmatpush1.msra.mxu0 0.0
    %3727 = vmatprep.subr.mxu0 0.0
    %3728 = vmatpush1.msra.mxu0 0.0
    %3729 = vmatprep.subr.mxu0 0.0
    %3730 = vmatpush1.msra.mxu0 0.0
    %3731 = vmatprep.subr.mxu0 0.0
    %3732 = vmatpush1.msra.mxu0 0.0
    %3733 = vmatprep.subr.mxu0 0.0
    %3734 = vmatpush1.msra.mxu0 0.0
    %3735 = vmatprep.subr.mxu0 0.0
    %3736 = vmatpush1.msra.mxu0 0.0
    %3737 = vmatprep.subr.mxu0 0.0
    %3738 = vmatpush1.msra.mxu0 0.0
    %3739 = vmatprep.subr.mxu0 0.0
    %3740 = vmatpush1.msra.mxu0 0.0
    %3741 = vmatprep.mubr.f32.mxu0 0.0
    %3742 = vmatmul.mubr.f32.gmra.mrb[0].mxu0 %v3675
    %v3743 = vpop.f32.mrb[0].mxu0
    %v3744 = vadd.f32 %v3167, %v3743
    %v3745 = vpop.f32.mrb[0].mxu0
    %3746 = vdwg.mxu0
    %s3747 = scalar_lea.vmem %s9, 14
    %3748 = vst.msk [vmem:[%s3747] sm:$0x3] %vm3238, %v3744
    // Predicated region
    $region46: #{decoder_forward_teacher_forcing.1} parent=1 // pred_check
      _
    $region47: #{decoder_forward_teacher_forcing.1} parent=1 // pred_check_branch
      %3750 = sbr.rel (0) target = $region49
    $region48: #{decoder_forward_teacher_forcing.1} parent=1 // pred_region
      _
    $region49: #{decoder_forward_teacher_forcing.1} parent=1 // pred_fallthru
      _
    // Predicated region
    $region50: #{decoder_forward_teacher_forcing.1} parent=1 // pred_check
      _
    $region51: #{decoder_forward_teacher_forcing.1} parent=1 // pred_check_branch
      %3752 = sbr.rel (0) target = $region53
    $region52: #{decoder_forward_teacher_forcing.1} parent=1 // pred_region
      _
    $region53: #{decoder_forward_teacher_forcing.1} parent=1 // pred_fallthru
      _
    %3753 = vsyncpa [#allocation3], 1
    %3754 = vsyncpa [#allocation5], 1

</llo_original>
